<compile_context>
chip_gen: v6e
topology: v6e:2x2x1
jax: 0.10.0
libtpu: 0.0.40
codegen_flags: <defaults>
</compile_context>

<pallas_src>
import jax
import jax.numpy as jnp
from jax.experimental import pallas as pl
from jax.experimental.pallas import tpu as pltpu


C1_PAD = 16      # conv1 out-channels padded 10 -> 16
K1_PAD = 32      # conv1 contraction dim padded Cin*25 -> 32
K2_PAD = 256     # conv2 contraction dim padded 10*25=250 -> 256
LANE = 128       # class dim padded 10 -> 128 for lane-dense head outputs
NEG = -1e30      # bias pad value so padded logits vanish under softmax
VMEM_LIMIT = 32 * 1024 * 1024


# ----------------------------------------------------------------------------
# Pallas kernels
# ----------------------------------------------------------------------------

def _conv1_pool_kernel(p_ref, w_ref, b_ref, o_ref):
    """conv1 + fused 2x2 maxpool + ReLU for one branch.

    p: (4, K1, R1)  im2col patches (transposed), one per pool-window offset
    w: (C1, K1), b: (C1, 1)  ->  o: (C1, R1) = relu(maxpool(conv1(x)))   (lane-dense)
    """
    w = w_ref[...]
    m = None
    for d in range(4):
        y = jnp.dot(w, p_ref[d], preferred_element_type=jnp.float32)
        m = y if m is None else jnp.maximum(m, y)
    o_ref[...] = jnp.maximum(m + b_ref[...], 0.0)


def _tail_kernel(p2_ref, w2_ref, b2_ref, wfc1_ref, bfc1_ref,
                 wh_ref, bh_ref, whm_ref, bhm_ref, out_ref, pool2_scr):
    """conv2 + pool + ReLU + fc1 + ReLU + three log-softmax heads (both branches)."""
    n_batch = out_ref.shape[1]
    n_spatial = wfc1_ref.shape[1]          # 16 = 4*4 spatial positions after pool2

    def log_softmax(z):
        z = z - jnp.max(z, axis=-1, keepdims=True)
        return z - jnp.log(jnp.sum(jnp.exp(z), axis=-1, keepdims=True))

    hs = []
    for b in range(2):
        # conv2, fused 2x2 maxpool (max over the 4 window offsets), bias, relu
        m = None
        w2 = w2_ref[b]                                            # (K2, 20)
        for d in range(4):
            y = jnp.dot(p2_ref[b, d], w2, preferred_element_type=jnp.float32)
            m = y if m is None else jnp.maximum(m, y)
        pool2_scr[b, :, :] = jnp.maximum(m + b2_ref[b], 0.0)      # (16*N, 20), rows (s, n)

        # fc1 (+relu): sum of per-spatial-position matmuls (weights permuted at prep)
        h = None
        for s in range(n_spatial):
            xr = pool2_scr[b, n_batch * s:n_batch * (s + 1), :]   # (N, 20)
            t = jnp.dot(xr, wfc1_ref[b, s], preferred_element_type=jnp.float32)
            h = t if h is None else h + t
        h = jnp.maximum(h + bfc1_ref[b], 0.0)                     # (N, 128)
        hs.append(h)

        # per-branch head, class dim padded to 128 lanes (pad bias = -1e30)
        logits = jnp.dot(h, wh_ref[b], preferred_element_type=jnp.float32) + bh_ref[b]
        out_ref[b, :, :] = log_softmax(logits)

    # merged head on mean(h1, h2)  (F.dropout is identity in eval mode)
    hm = 0.5 * (hs[0] + hs[1])
    lm = jnp.dot(hm, whm_ref[...], preferred_element_type=jnp.float32) + bhm_ref[...]
    out_ref[2, :, :] = log_softmax(lm)


# ----------------------------------------------------------------------------
# pallas_call wrappers
# ----------------------------------------------------------------------------

def _conv1_pool_call(p1, w1, b1):
    nb, nd, k1, r1 = p1.shape
    c1 = w1.shape[1]
    return pl.pallas_call(
        _conv1_pool_kernel,
        out_shape=jax.ShapeDtypeStruct((nb, c1, r1), jnp.float32),
        grid=(nb,),
        in_specs=[
            pl.BlockSpec((None, nd, k1, r1), lambda b: (b, 0, 0, 0)),
            pl.BlockSpec((None, c1, k1), lambda b: (b, 0, 0)),
            pl.BlockSpec((None, c1, 1), lambda b: (b, 0, 0)),
        ],
        out_specs=pl.BlockSpec((None, c1, r1), lambda b: (b, 0, 0)),
        compiler_params=pltpu.CompilerParams(
            dimension_semantics=("parallel",),          # 2 branches -> 2 TCs on v7x
            vmem_limit_bytes=VMEM_LIMIT),
    )(p1, w1, b1)


def _tail_call(p2, w2, b2, wfc1, bfc1, wh, bh, whm, bhm, n_batch):
    lane = wh.shape[-1]

    def full(shape):
        nd = len(shape)
        return pl.BlockSpec(shape, lambda i, nd=nd: (0,) * nd)

    return pl.pallas_call(
        _tail_kernel,
        out_shape=jax.ShapeDtypeStruct((3, n_batch, lane), jnp.float32),
        grid=(1,),
        in_specs=[full(p2.shape), full(w2.shape), full(b2.shape),
                  full(wfc1.shape), full(bfc1.shape),
                  full(wh.shape), full(bh.shape), full(whm.shape), full(bhm.shape)],
        out_specs=full((3, n_batch, lane)),
        scratch_shapes=[pltpu.VMEM((2, p2.shape[2], w2.shape[-1]), jnp.float32)],
        compiler_params=pltpu.CompilerParams(
            dimension_semantics=("arbitrary",),
            vmem_limit_bytes=VMEM_LIMIT),
    )(p2, w2, b2, wfc1, bfc1, wh, bh, whm, bhm)


# ----------------------------------------------------------------------------
# XLA glue: patch extraction with pool-window offsets folded in
# (operates only on the raw input and on the 36 KB pooled conv1 activation)
# ----------------------------------------------------------------------------

def _conv1_patches(xs, ksize):
    # xs: (2, N, Cin, H, W) -> (2, 4, Cin*k*k, N*PH*PW) with cols (n, ph, pw)
    b, n, cin, h, w = xs.shape
    ph, pw = (h - ksize + 1) // 2, (w - ksize + 1) // 2
    offs = []
    for dh in range(2):
        for dw in range(2):
            taps = []
            for kh in range(ksize):
                for kw in range(ksize):
                    sl = xs[:, :, :, dh + kh:dh + kh + 2 * ph:2,
                                     dw + kw:dw + kw + 2 * pw:2]    # (b,n,cin,ph,pw)
                    taps.append(sl)
            t = jnp.stack(taps, axis=1)                  # (b, k*k, n, cin, ph, pw)
            t = jnp.transpose(t, (0, 1, 3, 2, 4, 5))     # (b, k*k, cin, n, ph, pw)
            offs.append(t.reshape(b, ksize * ksize * cin, n * ph * pw))
    return jnp.stack(offs, axis=1)


def _conv2_patches(o1, n, c1, ph, pw, ksize):
    # o1: (2, C1_PAD, N*PH*PW) -> (2, 4, QH*QW*N, k*k*c1), rows (qh, qw, n)
    b = o1.shape[0]
    img = o1[:, :c1, :].reshape(b, c1, n, ph, pw)
    qh, qw = (ph - ksize + 1) // 2, (pw - ksize + 1) // 2
    offs = []
    for dh in range(2):
        for dw in range(2):
            taps = []
            for kh in range(ksize):
                for kw in range(ksize):
                    sl = img[:, :, :, dh + kh:dh + kh + 2 * qh:2,
                                      dw + kw:dw + kw + 2 * qw:2]   # (b,c1,n,qh,qw)
                    taps.append(sl)
            t = jnp.stack(taps, axis=1)                  # (b, k*k, c1, n, qh, qw)
            t = jnp.transpose(t, (0, 4, 5, 3, 1, 2))     # (b, qh, qw, n, k*k, c1)
            offs.append(t.reshape(b, qh * qw * n, ksize * ksize * c1))
    return jnp.stack(offs, axis=1)


# ----------------------------------------------------------------------------
# Parameters (torch layout) and kernel-ready preparation (pad / permute once)
# ----------------------------------------------------------------------------

def init_params(in_channel, key):
    ks = jax.random.split(key, 18)
    s = 0.05

    def rnd(k, shape):
        return jax.random.normal(k, shape, dtype=jnp.float32) * s

    return dict(
        w_c1_m1=rnd(ks[0], (10, in_channel, 5, 5)), b_c1_m1=rnd(ks[1], (10,)),
        w_c2_m1=rnd(ks[2], (20, 10, 5, 5)),         b_c2_m1=rnd(ks[3], (20,)),
        w_c1_m2=rnd(ks[4], (10, in_channel, 5, 5)), b_c1_m2=rnd(ks[5], (10,)),
        w_c2_m2=rnd(ks[6], (20, 10, 5, 5)),         b_c2_m2=rnd(ks[7], (20,)),
        w_fc1_m1=rnd(ks[8], (128, 320)),  b_fc1_m1=rnd(ks[9], (128,)),
        w_fc1_m2=rnd(ks[10], (128, 320)), b_fc1_m2=rnd(ks[11], (128,)),
        w_fc2_m1=rnd(ks[12], (10, 128)),  b_fc2_m1=rnd(ks[13], (10,)),
        w_fc2_m2=rnd(ks[14], (10, 128)),  b_fc2_m2=rnd(ks[15], (10,)),
        w_fc2=rnd(ks[16], (10, 128)),     b_fc2=rnd(ks[17], (10,)),
    )


def prepare_params(raw):
    f32 = jnp.float32
    # conv1: columns ordered (kh, kw, ci) to match the glue; pad to (16, 32)
    w1 = jnp.stack([raw["w_c1_m1"], raw["w_c1_m2"]]).astype(f32)     # (2,10,Cin,5,5)
    cin = w1.shape[2]
    w1 = jnp.transpose(w1, (0, 1, 3, 4, 2)).reshape(2, 10, 25 * cin)
    w1p = jnp.zeros((2, C1_PAD, K1_PAD), f32).at[:, :10, :25 * cin].set(w1)
    b1p = jnp.zeros((2, C1_PAD, 1), f32).at[:, :10, 0].set(
        jnp.stack([raw["b_c1_m1"], raw["b_c1_m2"]]).astype(f32))
    # conv2: rows ordered (kh, kw, ci); pad K 250 -> 256
    w2 = jnp.stack([raw["w_c2_m1"], raw["w_c2_m2"]]).astype(f32)     # (2,20,10,5,5)
    w2 = jnp.transpose(w2, (0, 3, 4, 2, 1)).reshape(2, 250, 20)
    w2p = jnp.zeros((2, K2_PAD, 20), f32).at[:, :250, :].set(w2)
    b2p = jnp.stack([raw["b_c2_m1"], raw["b_c2_m2"]]).astype(f32).reshape(2, 1, 20)
    # fc1: permute torch (c*16 + qh*4 + qw) flatten into per-spatial (s, c, j) blocks
    wf1 = jnp.stack([raw["w_fc1_m1"], raw["w_fc1_m2"]]).astype(f32)  # (2,128,320)
    wf1 = jnp.transpose(wf1, (0, 2, 1)).reshape(2, 20, 16, 128)      # (b, c, s, j)
    wf1 = jnp.transpose(wf1, (0, 2, 1, 3))                           # (b, s, c, j)
    bf1 = jnp.stack([raw["b_fc1_m1"], raw["b_fc1_m2"]]).astype(f32).reshape(2, 1, 128)
    # heads: classes padded to 128 lanes (zero weights, -1e30 bias on the padding)
    wh = jnp.zeros((2, 128, LANE), f32).at[:, :, :10].set(
        jnp.stack([raw["w_fc2_m1"].T, raw["w_fc2_m2"].T]).astype(f32))
    bh = jnp.full((2, 1, LANE), NEG, f32).at[:, 0, :10].set(
        jnp.stack([raw["b_fc2_m1"], raw["b_fc2_m2"]]).astype(f32))
    whm = jnp.zeros((128, LANE), f32).at[:, :10].set(raw["w_fc2"].T.astype(f32))
    bhm = jnp.full((1, LANE), NEG, f32).at[0, :10].set(raw["b_fc2"].astype(f32))
    return dict(w1=w1p, b1=b1p, w2=w2p, b2=b2p, wfc1=wf1, bfc1=bf1,
                wh=wh, bh=bh, whm=whm, bhm=bhm)


# ----------------------------------------------------------------------------
# Forward (eval mode)
# ----------------------------------------------------------------------------

@jax.jit
def mmnet_forward(kp, x1, x2):
    xs = jnp.stack([x1, x2]).astype(jnp.float32)          # (2, N, Cin, 28, 28)
    _, n, _cin, hh, ww = xs.shape

    # conv1 patches (4 pool offsets), K padded to 32 -> fused conv1+pool+relu kernel
    p1 = _conv1_patches(xs, 5)
    p1 = jnp.pad(p1, ((0, 0), (0, 0), (0, K1_PAD - p1.shape[2]), (0, 0)))
    o1 = _conv1_pool_call(p1, kp["w1"], kp["b1"])          # (2, 16, N*144) lane-dense

    # conv2 patches from the tiny pooled activation -> fused tail kernel
    ph, pw = (hh - 5 + 1) // 2, (ww - 5 + 1) // 2
    p2 = _conv2_patches(o1, n, 10, ph, pw, 5)
    p2 = jnp.pad(p2, ((0, 0), (0, 0), (0, 0), (0, K2_PAD - p2.shape[3])))
    preds = _tail_call(p2, kp["w2"], kp["b2"], kp["wfc1"], kp["bfc1"],
                       kp["wh"], kp["bh"], kp["whm"], kp["bhm"], n)

    return preds[0, :, :10], preds[1, :, :10], preds[2, :, :10]


# ----------------------------------------------------------------------------
# Pure-JAX reference of the PyTorch forward (eval mode) for validation
# ----------------------------------------------------------------------------

def _reference_forward(raw, x1, x2):
    def conv(x, w, b):
        y = jax.lax.conv_general_dilated(
            x, w, window_strides=(1, 1), padding="VALID",
            dimension_numbers=("NCHW", "OIHW", "NCHW"))
        return y + b.reshape(1, -1, 1, 1)

    def pool2(x):
        return jax.lax.reduce_window(x, -jnp.inf, jax.lax.max,
                                     (1, 1, 2, 2), (1, 1, 2, 2), "VALID")

    def branch(x, w1, b1, w2, b2, wf, bf):
        x = jnp.maximum(pool2(conv(x, w1, b1)), 0.0)
        x = jnp.maximum(pool2(conv(x, w2, b2)), 0.0)
        x = x.reshape(x.shape[0], -1)
        return jnp.maximum(x @ wf.T + bf, 0.0)

    h1 = branch(x1, raw["w_c1_m1"], raw["b_c1_m1"], raw["w_c2_m1"], raw["b_c2_m1"],
                raw["w_fc1_m1"], raw["b_fc1_m1"])
    h2 = branch(x2, raw["w_c1_m2"], raw["b_c1_m2"], raw["w_c2_m2"], raw["b_c2_m2"],
                raw["w_fc1_m2"], raw["b_fc1_m2"])
    p1 = h1 @ raw["w_fc2_m1"].T + raw["b_fc2_m1"]
    p2 = h2 @ raw["w_fc2_m2"].T + raw["b_fc2_m2"]
    pm = (0.5 * (h1 + h2)) @ raw["w_fc2"].T + raw["b_fc2"]

    def ls(z):
        z = z - jnp.max(z, axis=-1, keepdims=True)
        return z - jnp.log(jnp.sum(jnp.exp(z), axis=-1, keepdims=True))

    return ls(p1), ls(p2), ls(pm)


if __name__ == "__main__":
    in_channel = 1
    N, H, W = 2, 28, 28   # the module's .view(-1, 320) implies 28x28 inputs

    key = jax.random.PRNGKey(0)
    kx1, kx2 = jax.random.split(key)
    x1 = jax.random.normal(kx1, (N, in_channel, H, W), dtype=jnp.float32)
    x2 = jax.random.normal(kx2, (N, in_channel, H, W), dtype=jnp.float32)

    raw = init_params(in_channel, jax.random.PRNGKey(42))
    kp = prepare_params(raw)

    out1, out2, outm = mmnet_forward(kp, x1, x2)
    jax.block_until_ready((out1, out2, outm))

    assert out1.shape == (N, 10) and out2.shape == (N, 10) and outm.shape == (N, 10)
    # log_softmax rows must sum (in prob space) to ~1
    assert jnp.allclose(jnp.sum(jnp.exp(out1), axis=-1), 1.0, atol=1e-4)
    assert jnp.allclose(jnp.sum(jnp.exp(outm), axis=-1), 1.0, atol=1e-4)
    # match a pure-JAX reference of the PyTorch forward (tolerance covers MXU precision)
    r1, r2, rm = jax.jit(_reference_forward)(raw, x1, x2)
    err = max(float(jnp.max(jnp.abs(a - b)))
              for a, b in ((out1, r1), (out2, r2), (outm, rm)))
    assert err < 1e-2, f"mismatch vs reference: {err}"

    print("KERNEL_OK")
</pallas_src>

<mosaic_0001>
module attributes {stable_mosaic.version = 11 : i64} {
  func.func @_conv1_pool_kernel(%arg0: i32, %arg1: memref<1x4x32x288xf32, #tpu.memory_space<vmem>>, %arg2: memref<1x16x32xf32, #tpu.memory_space<vmem>>, %arg3: memref<1x16x1xf32, #tpu.memory_space<vmem>>, %arg4: memref<1x16x288xf32, #tpu.memory_space<vmem>>) attributes {dimension_semantics = [#tpu.dimension_semantics<parallel>], iteration_bounds = array<i64: 2>, scalar_prefetch = 0 : i64, scratch_operands = 0 : i64, tpu.core_type = #tpu.core_type<tc>, window_params = [{transform_indices = @transform_0, window_bounds = array<i64: 1, 4, 32, 288>}, {transform_indices = @transform_1, window_bounds = array<i64: 1, 16, 32>}, {transform_indices = @transform_2, window_bounds = array<i64: 1, 16, 1>}, {transform_indices = @transform_3, window_bounds = array<i64: 1, 16, 288>}]} {
    %c0 = arith.constant 0 : index
    %c0_0 = arith.constant 0 : index
    %c0_1 = arith.constant 0 : index
    %0 = vector.load %arg2[%c0, %c0_0, %c0_1] : memref<1x16x32xf32, #tpu.memory_space<vmem>>, vector<1x16x32xf32>
    %1 = vector.shape_cast %0 : vector<1x16x32xf32> to vector<16x32xf32>
    %c0_2 = arith.constant 0 : index
    %c0_3 = arith.constant 0 : index
    %c0_4 = arith.constant 0 : index
    %c0_5 = arith.constant 0 : index
    %2 = vector.load %arg1[%c0_2, %c0_3, %c0_4, %c0_5] : memref<1x4x32x288xf32, #tpu.memory_space<vmem>>, vector<1x1x32x288xf32>
    %3 = vector.shape_cast %2 : vector<1x1x32x288xf32> to vector<32x288xf32>
    %cst = arith.constant dense<0.000000e+00> : vector<16x288xf32>
    %4 = tpu.matmul %1, %3, %cst {dimension_numbers = #tpu.dot_dimension_numbers<[1], [0], [0], [1], [0, 0, 1, 1], [], []>} : vector<16x32xf32>, vector<32x288xf32>, vector<16x288xf32> -> vector<16x288xf32>
    %c0_6 = arith.constant 0 : index
    %c1 = arith.constant 1 : index
    %c0_7 = arith.constant 0 : index
    %c0_8 = arith.constant 0 : index
    %5 = vector.load %arg1[%c0_6, %c1, %c0_7, %c0_8] : memref<1x4x32x288xf32, #tpu.memory_space<vmem>>, vector<1x1x32x288xf32>
    %6 = vector.shape_cast %5 : vector<1x1x32x288xf32> to vector<32x288xf32>
    %cst_9 = arith.constant dense<0.000000e+00> : vector<16x288xf32>
    %7 = tpu.matmul %1, %6, %cst_9 {dimension_numbers = #tpu.dot_dimension_numbers<[1], [0], [0], [1], [0, 0, 1, 1], [], []>} : vector<16x32xf32>, vector<32x288xf32>, vector<16x288xf32> -> vector<16x288xf32>
    %8 = arith.maximumf %4, %7 : vector<16x288xf32>
    %c0_10 = arith.constant 0 : index
    %c2 = arith.constant 2 : index
    %c0_11 = arith.constant 0 : index
    %c0_12 = arith.constant 0 : index
    %9 = vector.load %arg1[%c0_10, %c2, %c0_11, %c0_12] : memref<1x4x32x288xf32, #tpu.memory_space<vmem>>, vector<1x1x32x288xf32>
    %10 = vector.shape_cast %9 : vector<1x1x32x288xf32> to vector<32x288xf32>
    %cst_13 = arith.constant dense<0.000000e+00> : vector<16x288xf32>
    %11 = tpu.matmul %1, %10, %cst_13 {dimension_numbers = #tpu.dot_dimension_numbers<[1], [0], [0], [1], [0, 0, 1, 1], [], []>} : vector<16x32xf32>, vector<32x288xf32>, vector<16x288xf32> -> vector<16x288xf32>
    %12 = arith.maximumf %8, %11 : vector<16x288xf32>
    %c0_14 = arith.constant 0 : index
    %c3 = arith.constant 3 : index
    %c0_15 = arith.constant 0 : index
    %c0_16 = arith.constant 0 : index
    %13 = vector.load %arg1[%c0_14, %c3, %c0_15, %c0_16] : memref<1x4x32x288xf32, #tpu.memory_space<vmem>>, vector<1x1x32x288xf32>
    %14 = vector.shape_cast %13 : vector<1x1x32x288xf32> to vector<32x288xf32>
    %cst_17 = arith.constant dense<0.000000e+00> : vector<16x288xf32>
    %15 = tpu.matmul %1, %14, %cst_17 {dimension_numbers = #tpu.dot_dimension_numbers<[1], [0], [0], [1], [0, 0, 1, 1], [], []>} : vector<16x32xf32>, vector<32x288xf32>, vector<16x288xf32> -> vector<16x288xf32>
    %16 = arith.maximumf %12, %15 : vector<16x288xf32>
    %c0_18 = arith.constant 0 : index
    %c0_19 = arith.constant 0 : index
    %c0_20 = arith.constant 0 : index
    %17 = vector.load %arg3[%c0_18, %c0_19, %c0_20] : memref<1x16x1xf32, #tpu.memory_space<vmem>>, vector<1x16x1xf32>
    %18 = vector.shape_cast %17 : vector<1x16x1xf32> to vector<16x1xf32>
    %19 = vector.broadcast %18 : vector<16x1xf32> to vector<16x288xf32>
    %20 = arith.addf %16, %19 : vector<16x288xf32>
    %cst_21 = arith.constant 0.000000e+00 : f32
    %21 = vector.broadcast %cst_21 : f32 to vector<16x288xf32>
    %22 = arith.maximumf %20, %21 : vector<16x288xf32>
    %c0_22 = arith.constant 0 : index
    %c0_23 = arith.constant 0 : index
    %c0_24 = arith.constant 0 : index
    %23 = vector.load %arg4[%c0_22, %c0_23, %c0_24] : memref<1x16x288xf32, #tpu.memory_space<vmem>>, vector<1x16x288xf32>
    %24 = vector.shape_cast %23 : vector<1x16x288xf32> to vector<16x288xf32>
    %25 = vector.shape_cast %22 : vector<16x288xf32> to vector<1x16x288xf32>
    tpu.vector_store %arg4[%c0_22, %c0_23, %c0_24], %25 {strides = array<i32>} : memref<1x16x288xf32, #tpu.memory_space<vmem>>, vector<1x16x288xf32>,
    return
  }
  func.func @transform_0(%arg0: i32) -> (i32, i32, i32, i32) {
    %c0_i32 = arith.constant 0 : i32
    %c0_i32_0 = arith.constant 0 : i32
    %c0_i32_1 = arith.constant 0 : i32
    %c0_i32_2 = arith.constant 0 : i32
    return %arg0, %c0_i32, %c0_i32_0, %c0_i32_1 : i32, i32, i32, i32
  }
  func.func @transform_1(%arg0: i32) -> (i32, i32, i32) {
    %c0_i32 = arith.constant 0 : i32
    %c0_i32_0 = arith.constant 0 : i32
    %c0_i32_1 = arith.constant 0 : i32
    return %arg0, %c0_i32, %c0_i32_0 : i32, i32, i32
  }
  func.func @transform_2(%arg0: i32) -> (i32, i32, i32) {
    %c0_i32 = arith.constant 0 : i32
    %c0_i32_0 = arith.constant 0 : i32
    %c0_i32_1 = arith.constant 0 : i32
    return %arg0, %c0_i32, %c0_i32_0 : i32, i32, i32
  }
  func.func @transform_3(%arg0: i32) -> (i32, i32, i32) {
    %c0_i32 = arith.constant 0 : i32
    %c0_i32_0 = arith.constant 0 : i32
    %c0_i32_1 = arith.constant 0 : i32
    return %arg0, %c0_i32, %c0_i32_0 : i32, i32, i32
  }
}

module attributes {stable_mosaic.version = 11 : i64} {
  func.func @_tail_kernel(%arg0: i32, %arg1: memref<2x4x32x256xf32, #tpu.memory_space<vmem>>, %arg2: memref<2x256x20xf32, #tpu.memory_space<vmem>>, %arg3: memref<2x1x20xf32, #tpu.memory_space<vmem>>, %arg4: memref<2x16x20x128xf32, #tpu.memory_space<vmem>>, %arg5: memref<2x1x128xf32, #tpu.memory_space<vmem>>, %arg6: memref<2x128x128xf32, #tpu.memory_space<vmem>>, %arg7: memref<2x1x128xf32, #tpu.memory_space<vmem>>, %arg8: memref<128x128xf32, #tpu.memory_space<vmem>>, %arg9: memref<1x128xf32, #tpu.memory_space<vmem>>, %arg10: memref<3x2x128xf32, #tpu.memory_space<vmem>>, %arg11: memref<2x32x20xf32, #tpu.memory_space<vmem>>) attributes {dimension_semantics = [#tpu.dimension_semantics<arbitrary>], iteration_bounds = array<i64: 1>, scalar_prefetch = 0 : i64, scratch_operands = 1 : i64, tpu.core_type = #tpu.core_type<tc>, window_params = [{pipeline_mode = #tpu.pipeline_mode<synchronous>, transform_indices = @transform_0, window_bounds = array<i64: 2, 4, 32, 256>}, {pipeline_mode = #tpu.pipeline_mode<synchronous>, transform_indices = @transform_1, window_bounds = array<i64: 2, 256, 20>}, {pipeline_mode = #tpu.pipeline_mode<synchronous>, transform_indices = @transform_2, window_bounds = array<i64: 2, 1, 20>}, {pipeline_mode = #tpu.pipeline_mode<synchronous>, transform_indices = @transform_3, window_bounds = array<i64: 2, 16, 20, 128>}, {pipeline_mode = #tpu.pipeline_mode<synchronous>, transform_indices = @transform_4, window_bounds = array<i64: 2, 1, 128>}, {pipeline_mode = #tpu.pipeline_mode<synchronous>, transform_indices = @transform_5, window_bounds = array<i64: 2, 128, 128>}, {pipeline_mode = #tpu.pipeline_mode<synchronous>, transform_indices = @transform_6, window_bounds = array<i64: 2, 1, 128>}, {pipeline_mode = #tpu.pipeline_mode<synchronous>, transform_indices = @transform_7, window_bounds = array<i64: 128, 128>}, {pipeline_mode = #tpu.pipeline_mode<synchronous>, transform_indices = @transform_8, window_bounds = array<i64: 1, 128>}, {pipeline_mode = #tpu.pipeline_mode<synchronous>, transform_indices = @transform_9, window_bounds = array<i64: 3, 2, 128>}]} {
    %c0 = arith.constant 0 : index
    %c0_0 = arith.constant 0 : index
    %c0_1 = arith.constant 0 : index
    %0 = vector.load %arg2[%c0, %c0_0, %c0_1] : memref<2x256x20xf32, #tpu.memory_space<vmem>>, vector<1x256x20xf32>
    %1 = vector.shape_cast %0 : vector<1x256x20xf32> to vector<256x20xf32>
    %c0_2 = arith.constant 0 : index
    %c0_3 = arith.constant 0 : index
    %c0_4 = arith.constant 0 : index
    %c0_5 = arith.constant 0 : index
    %2 = vector.load %arg1[%c0_2, %c0_3, %c0_4, %c0_5] : memref<2x4x32x256xf32, #tpu.memory_space<vmem>>, vector<1x1x32x256xf32>
    %3 = vector.shape_cast %2 : vector<1x1x32x256xf32> to vector<32x256xf32>
    %cst = arith.constant dense<0.000000e+00> : vector<32x20xf32>
    %4 = tpu.matmul %3, %1, %cst {dimension_numbers = #tpu.dot_dimension_numbers<[1], [0], [0], [1], [0, 0, 1, 1], [], []>} : vector<32x256xf32>, vector<256x20xf32>, vector<32x20xf32> -> vector<32x20xf32>
    %c0_6 = arith.constant 0 : index
    %c1 = arith.constant 1 : index
    %c0_7 = arith.constant 0 : index
    %c0_8 = arith.constant 0 : index
    %5 = vector.load %arg1[%c0_6, %c1, %c0_7, %c0_8] : memref<2x4x32x256xf32, #tpu.memory_space<vmem>>, vector<1x1x32x256xf32>
    %6 = vector.shape_cast %5 : vector<1x1x32x256xf32> to vector<32x256xf32>
    %cst_9 = arith.constant dense<0.000000e+00> : vector<32x20xf32>
    %7 = tpu.matmul %6, %1, %cst_9 {dimension_numbers = #tpu.dot_dimension_numbers<[1], [0], [0], [1], [0, 0, 1, 1], [], []>} : vector<32x256xf32>, vector<256x20xf32>, vector<32x20xf32> -> vector<32x20xf32>
    %8 = arith.maximumf %4, %7 : vector<32x20xf32>
    %c0_10 = arith.constant 0 : index
    %c2 = arith.constant 2 : index
    %c0_11 = arith.constant 0 : index
    %c0_12 = arith.constant 0 : index
    %9 = vector.load %arg1[%c0_10, %c2, %c0_11, %c0_12] : memref<2x4x32x256xf32, #tpu.memory_space<vmem>>, vector<1x1x32x256xf32>
    %10 = vector.shape_cast %9 : vector<1x1x32x256xf32> to vector<32x256xf32>
    %cst_13 = arith.constant dense<0.000000e+00> : vector<32x20xf32>
    %11 = tpu.matmul %10, %1, %cst_13 {dimension_numbers = #tpu.dot_dimension_numbers<[1], [0], [0], [1], [0, 0, 1, 1], [], []>} : vector<32x256xf32>, vector<256x20xf32>, vector<32x20xf32> -> vector<32x20xf32>
    %12 = arith.maximumf %8, %11 : vector<32x20xf32>
    %c0_14 = arith.constant 0 : index
    %c3 = arith.constant 3 : index
    %c0_15 = arith.constant 0 : index
    %c0_16 = arith.constant 0 : index
    %13 = vector.load %arg1[%c0_14, %c3, %c0_15, %c0_16] : memref<2x4x32x256xf32, #tpu.memory_space<vmem>>, vector<1x1x32x256xf32>
    %14 = vector.shape_cast %13 : vector<1x1x32x256xf32> to vector<32x256xf32>
    %cst_17 = arith.constant dense<0.000000e+00> : vector<32x20xf32>
    %15 = tpu.matmul %14, %1, %cst_17 {dimension_numbers = #tpu.dot_dimension_numbers<[1], [0], [0], [1], [0, 0, 1, 1], [], []>} : vector<32x256xf32>, vector<256x20xf32>, vector<32x20xf32> -> vector<32x20xf32>
    %16 = arith.maximumf %12, %15 : vector<32x20xf32>
    %c0_18 = arith.constant 0 : index
    %c0_19 = arith.constant 0 : index
    %c0_20 = arith.constant 0 : index
    %17 = vector.load %arg3[%c0_18, %c0_19, %c0_20] : memref<2x1x20xf32, #tpu.memory_space<vmem>>, vector<1x1x20xf32>
    %18 = vector.shape_cast %17 : vector<1x1x20xf32> to vector<1x20xf32>
    %19 = vector.broadcast %18 : vector<1x20xf32> to vector<32x20xf32>
    %20 = arith.addf %16, %19 : vector<32x20xf32>
    %cst_21 = arith.constant 0.000000e+00 : f32
    %21 = vector.broadcast %cst_21 : f32 to vector<32x20xf32>
    %22 = arith.maximumf %20, %21 : vector<32x20xf32>
    %c0_22 = arith.constant 0 : index
    %c0_23 = arith.constant 0 : index
    %c0_24 = arith.constant 0 : index
    %23 = vector.load %arg11[%c0_22, %c0_23, %c0_24] : memref<2x32x20xf32, #tpu.memory_space<vmem>>, vector<1x32x20xf32>
    %24 = vector.shape_cast %23 : vector<1x32x20xf32> to vector<32x20xf32>
    %25 = vector.shape_cast %22 : vector<32x20xf32> to vector<1x32x20xf32>
    tpu.vector_store %arg11[%c0_22, %c0_23, %c0_24], %25 {strides = array<i32>} : memref<2x32x20xf32, #tpu.memory_space<vmem>>, vector<1x32x20xf32>,
    %c0_25 = arith.constant 0 : index
    %c0_26 = arith.constant 0 : index
    %c0_27 = arith.constant 0 : index
    %26 = vector.load %arg11[%c0_25, %c0_26, %c0_27] : memref<2x32x20xf32, #tpu.memory_space<vmem>>, vector<1x2x20xf32>
    %27 = vector.shape_cast %26 : vector<1x2x20xf32> to vector<2x20xf32>
    %c0_28 = arith.constant 0 : index
    %c0_29 = arith.constant 0 : index
    %c0_30 = arith.constant 0 : index
    %c0_31 = arith.constant 0 : index
    %28 = vector.load %arg4[%c0_28, %c0_29, %c0_30, %c0_31] : memref<2x16x20x128xf32, #tpu.memory_space<vmem>>, vector<1x1x20x128xf32>
    %29 = vector.shape_cast %28 : vector<1x1x20x128xf32> to vector<20x128xf32>
    %cst_32 = arith.constant dense<0.000000e+00> : vector<2x128xf32>
    %30 = tpu.matmul %27, %29, %cst_32 {dimension_numbers = #tpu.dot_dimension_numbers<[1], [0], [0], [1], [0, 0, 1, 1], [], []>} : vector<2x20xf32>, vector<20x128xf32>, vector<2x128xf32> -> vector<2x128xf32>
    %c0_33 = arith.constant 0 : index
    %c2_34 = arith.constant 2 : index
    %c0_35 = arith.constant 0 : index
    %31 = vector.load %arg11[%c0_33, %c2_34, %c0_35] : memref<2x32x20xf32, #tpu.memory_space<vmem>>, vector<1x2x20xf32>
    %32 = vector.shape_cast %31 : vector<1x2x20xf32> to vector<2x20xf32>
    %c0_36 = arith.constant 0 : index
    %c1_37 = arith.constant 1 : index
    %c0_38 = arith.constant 0 : index
    %c0_39 = arith.constant 0 : index
    %33 = vector.load %arg4[%c0_36, %c1_37, %c0_38, %c0_39] : memref<2x16x20x128xf32, #tpu.memory_space<vmem>>, vector<1x1x20x128xf32>
    %34 = vector.shape_cast %33 : vector<1x1x20x128xf32> to vector<20x128xf32>
    %cst_40 = arith.constant dense<0.000000e+00> : vector<2x128xf32>
    %35 = tpu.matmul %32, %34, %cst_40 {dimension_numbers = #tpu.dot_dimension_numbers<[1], [0], [0], [1], [0, 0, 1, 1], [], []>} : vector<2x20xf32>, vector<20x128xf32>, vector<2x128xf32> -> vector<2x128xf32>
    %36 = arith.addf %30, %35 : vector<2x128xf32>
    %c0_41 = arith.constant 0 : index
    %c4 = arith.constant 4 : index
    %c0_42 = arith.constant 0 : index
    %37 = vector.load %arg11[%c0_41, %c4, %c0_42] : memref<2x32x20xf32, #tpu.memory_space<vmem>>, vector<1x2x20xf32>
    %38 = vector.shape_cast %37 : vector<1x2x20xf32> to vector<2x20xf32>
    %c0_43 = arith.constant 0 : index
    %c2_44 = arith.constant 2 : index
    %c0_45 = arith.constant 0 : index
    %c0_46 = arith.constant 0 : index
    %39 = vector.load %arg4[%c0_43, %c2_44, %c0_45, %c0_46] : memref<2x16x20x128xf32, #tpu.memory_space<vmem>>, vector<1x1x20x128xf32>
    %40 = vector.shape_cast %39 : vector<1x1x20x128xf32> to vector<20x128xf32>
    %cst_47 = arith.constant dense<0.000000e+00> : vector<2x128xf32>
    %41 = tpu.matmul %38, %40, %cst_47 {dimension_numbers = #tpu.dot_dimension_numbers<[1], [0], [0], [1], [0, 0, 1, 1], [], []>} : vector<2x20xf32>, vector<20x128xf32>, vector<2x128xf32> -> vector<2x128xf32>
    %42 = arith.addf %36, %41 : vector<2x128xf32>
    %c0_48 = arith.constant 0 : index
    %c6 = arith.constant 6 : index
    %c0_49 = arith.constant 0 : index
    %43 = vector.load %arg11[%c0_48, %c6, %c0_49] : memref<2x32x20xf32, #tpu.memory_space<vmem>>, vector<1x2x20xf32>
    %44 = vector.shape_cast %43 : vector<1x2x20xf32> to vector<2x20xf32>
    %c0_50 = arith.constant 0 : index
    %c3_51 = arith.constant 3 : index
    %c0_52 = arith.constant 0 : index
    %c0_53 = arith.constant 0 : index
    %45 = vector.load %arg4[%c0_50, %c3_51, %c0_52, %c0_53] : memref<2x16x20x128xf32, #tpu.memory_space<vmem>>, vector<1x1x20x128xf32>
    %46 = vector.shape_cast %45 : vector<1x1x20x128xf32> to vector<20x128xf32>
    %cst_54 = arith.constant dense<0.000000e+00> : vector<2x128xf32>
    %47 = tpu.matmul %44, %46, %cst_54 {dimension_numbers = #tpu.dot_dimension_numbers<[1], [0], [0], [1], [0, 0, 1, 1], [], []>} : vector<2x20xf32>, vector<20x128xf32>, vector<2x128xf32> -> vector<2x128xf32>
    %48 = arith.addf %42, %47 : vector<2x128xf32>
    %c0_55 = arith.constant 0 : index
    %c8 = arith.constant 8 : index
    %c0_56 = arith.constant 0 : index
    %49 = vector.load %arg11[%c0_55, %c8, %c0_56] : memref<2x32x20xf32, #tpu.memory_space<vmem>>, vector<1x2x20xf32>
    %50 = vector.shape_cast %49 : vector<1x2x20xf32> to vector<2x20xf32>
    %c0_57 = arith.constant 0 : index
    %c4_58 = arith.constant 4 : index
    %c0_59 = arith.constant 0 : index
    %c0_60 = arith.constant 0 : index
    %51 = vector.load %arg4[%c0_57, %c4_58, %c0_59, %c0_60] : memref<2x16x20x128xf32, #tpu.memory_space<vmem>>, vector<1x1x20x128xf32>
    %52 = vector.shape_cast %51 : vector<1x1x20x128xf32> to vector<20x128xf32>
    %cst_61 = arith.constant dense<0.000000e+00> : vector<2x128xf32>
    %53 = tpu.matmul %50, %52, %cst_61 {dimension_numbers = #tpu.dot_dimension_numbers<[1], [0], [0], [1], [0, 0, 1, 1], [], []>} : vector<2x20xf32>, vector<20x128xf32>, vector<2x128xf32> -> vector<2x128xf32>
    %54 = arith.addf %48, %53 : vector<2x128xf32>
    %c0_62 = arith.constant 0 : index
    %c10 = arith.constant 10 : index
    %c0_63 = arith.constant 0 : index
    %55 = vector.load %arg11[%c0_62, %c10, %c0_63] : memref<2x32x20xf32, #tpu.memory_space<vmem>>, vector<1x2x20xf32>
    %56 = vector.shape_cast %55 : vector<1x2x20xf32> to vector<2x20xf32>
    %c0_64 = arith.constant 0 : index
    %c5 = arith.constant 5 : index
    %c0_65 = arith.constant 0 : index
    %c0_66 = arith.constant 0 : index
    %57 = vector.load %arg4[%c0_64, %c5, %c0_65, %c0_66] : memref<2x16x20x128xf32, #tpu.memory_space<vmem>>, vector<1x1x20x128xf32>
    %58 = vector.shape_cast %57 : vector<1x1x20x128xf32> to vector<20x128xf32>
    %cst_67 = arith.constant dense<0.000000e+00> : vector<2x128xf32>
    %59 = tpu.matmul %56, %58, %cst_67 {dimension_numbers = #tpu.dot_dimension_numbers<[1], [0], [0], [1], [0, 0, 1, 1], [], []>} : vector<2x20xf32>, vector<20x128xf32>, vector<2x128xf32> -> vector<2x128xf32>
    %60 = arith.addf %54, %59 : vector<2x128xf32>
    %c0_68 = arith.constant 0 : index
    %c12 = arith.constant 12 : index
    %c0_69 = arith.constant 0 : index
    %61 = vector.load %arg11[%c0_68, %c12, %c0_69] : memref<2x32x20xf32, #tpu.memory_space<vmem>>, vector<1x2x20xf32>
    %62 = vector.shape_cast %61 : vector<1x2x20xf32> to vector<2x20xf32>
    %c0_70 = arith.constant 0 : index
    %c6_71 = arith.constant 6 : index
    %c0_72 = arith.constant 0 : index
    %c0_73 = arith.constant 0 : index
    %63 = vector.load %arg4[%c0_70, %c6_71, %c0_72, %c0_73] : memref<2x16x20x128xf32, #tpu.memory_space<vmem>>, vector<1x1x20x128xf32>
    %64 = vector.shape_cast %63 : vector<1x1x20x128xf32> to vector<20x128xf32>
    %cst_74 = arith.constant dense<0.000000e+00> : vector<2x128xf32>
    %65 = tpu.matmul %62, %64, %cst_74 {dimension_numbers = #tpu.dot_dimension_numbers<[1], [0], [0], [1], [0, 0, 1, 1], [], []>} : vector<2x20xf32>, vector<20x128xf32>, vector<2x128xf32> -> vector<2x128xf32>
    %66 = arith.addf %60, %65 : vector<2x128xf32>
    %c0_75 = arith.constant 0 : index
    %c14 = arith.constant 14 : index
    %c0_76 = arith.constant 0 : index
    %67 = vector.load %arg11[%c0_75, %c14, %c0_76] : memref<2x32x20xf32, #tpu.memory_space<vmem>>, vector<1x2x20xf32>
    %68 = vector.shape_cast %67 : vector<1x2x20xf32> to vector<2x20xf32>
    %c0_77 = arith.constant 0 : index
    %c7 = arith.constant 7 : index
    %c0_78 = arith.constant 0 : index
    %c0_79 = arith.constant 0 : index
    %69 = vector.load %arg4[%c0_77, %c7, %c0_78, %c0_79] : memref<2x16x20x128xf32, #tpu.memory_space<vmem>>, vector<1x1x20x128xf32>
    %70 = vector.shape_cast %69 : vector<1x1x20x128xf32> to vector<20x128xf32>
    %cst_80 = arith.constant dense<0.000000e+00> : vector<2x128xf32>
    %71 = tpu.matmul %68, %70, %cst_80 {dimension_numbers = #tpu.dot_dimension_numbers<[1], [0], [0], [1], [0, 0, 1, 1], [], []>} : vector<2x20xf32>, vector<20x128xf32>, vector<2x128xf32> -> vector<2x128xf32>
    %72 = arith.addf %66, %71 : vector<2x128xf32>
    %c0_81 = arith.constant 0 : index
    %c16 = arith.constant 16 : index
    %c0_82 = arith.constant 0 : index
    %73 = vector.load %arg11[%c0_81, %c16, %c0_82] : memref<2x32x20xf32, #tpu.memory_space<vmem>>, vector<1x2x20xf32>
    %74 = vector.shape_cast %73 : vector<1x2x20xf32> to vector<2x20xf32>
    %c0_83 = arith.constant 0 : index
    %c8_84 = arith.constant 8 : index
    %c0_85 = arith.constant 0 : index
    %c0_86 = arith.constant 0 : index
    %75 = vector.load %arg4[%c0_83, %c8_84, %c0_85, %c0_86] : memref<2x16x20x128xf32, #tpu.memory_space<vmem>>, vector<1x1x20x128xf32>
    %76 = vector.shape_cast %75 : vector<1x1x20x128xf32> to vector<20x128xf32>
    %cst_87 = arith.constant dense<0.000000e+00> : vector<2x128xf32>
    %77 = tpu.matmul %74, %76, %cst_87 {dimension_numbers = #tpu.dot_dimension_numbers<[1], [0], [0], [1], [0, 0, 1, 1], [], []>} : vector<2x20xf32>, vector<20x128xf32>, vector<2x128xf32> -> vector<2x128xf32>
    %78 = arith.addf %72, %77 : vector<2x128xf32>
    %c0_88 = arith.constant 0 : index
    %c18 = arith.constant 18 : index
    %c0_89 = arith.constant 0 : index
    %79 = vector.load %arg11[%c0_88, %c18, %c0_89] : memref<2x32x20xf32, #tpu.memory_space<vmem>>, vector<1x2x20xf32>
    %80 = vector.shape_cast %79 : vector<1x2x20xf32> to vector<2x20xf32>
    %c0_90 = arith.constant 0 : index
    %c9 = arith.constant 9 : index
    %c0_91 = arith.constant 0 : index
    %c0_92 = arith.constant 0 : index
    %81 = vector.load %arg4[%c0_90, %c9, %c0_91, %c0_92] : memref<2x16x20x128xf32, #tpu.memory_space<vmem>>, vector<1x1x20x128xf32>
    %82 = vector.shape_cast %81 : vector<1x1x20x128xf32> to vector<20x128xf32>
    %cst_93 = arith.constant dense<0.000000e+00> : vector<2x128xf32>
    %83 = tpu.matmul %80, %82, %cst_93 {dimension_numbers = #tpu.dot_dimension_numbers<[1], [0], [0], [1], [0, 0, 1, 1], [], []>} : vector<2x20xf32>, vector<20x128xf32>, vector<2x128xf32> -> vector<2x128xf32>
    %84 = arith.addf %78, %83 : vector<2x128xf32>
    %c0_94 = arith.constant 0 : index
    %c20 = arith.constant 20 : index
    %c0_95 = arith.constant 0 : index
    %85 = vector.load %arg11[%c0_94, %c20, %c0_95] : memref<2x32x20xf32, #tpu.memory_space<vmem>>, vector<1x2x20xf32>
    %86 = vector.shape_cast %85 : vector<1x2x20xf32> to vector<2x20xf32>
    %c0_96 = arith.constant 0 : index
    %c10_97 = arith.constant 10 : index
    %c0_98 = arith.constant 0 : index
    %c0_99 = arith.constant 0 : index
    %87 = vector.load %arg4[%c0_96, %c10_97, %c0_98, %c0_99] : memref<2x16x20x128xf32, #tpu.memory_space<vmem>>, vector<1x1x20x128xf32>
    %88 = vector.shape_cast %87 : vector<1x1x20x128xf32> to vector<20x128xf32>
    %cst_100 = arith.constant dense<0.000000e+00> : vector<2x128xf32>
    %89 = tpu.matmul %86, %88, %cst_100 {dimension_numbers = #tpu.dot_dimension_numbers<[1], [0], [0], [1], [0, 0, 1, 1], [], []>} : vector<2x20xf32>, vector<20x128xf32>, vector<2x128xf32> -> vector<2x128xf32>
    %90 = arith.addf %84, %89 : vector<2x128xf32>
    %c0_101 = arith.constant 0 : index
    %c22 = arith.constant 22 : index
    %c0_102 = arith.constant 0 : index
    %91 = vector.load %arg11[%c0_101, %c22, %c0_102] : memref<2x32x20xf32, #tpu.memory_space<vmem>>, vector<1x2x20xf32>
    %92 = vector.shape_cast %91 : vector<1x2x20xf32> to vector<2x20xf32>
    %c0_103 = arith.constant 0 : index
    %c11 = arith.constant 11 : index
    %c0_104 = arith.constant 0 : index
    %c0_105 = arith.constant 0 : index
    %93 = vector.load %arg4[%c0_103, %c11, %c0_104, %c0_105] : memref<2x16x20x128xf32, #tpu.memory_space<vmem>>, vector<1x1x20x128xf32>
    %94 = vector.shape_cast %93 : vector<1x1x20x128xf32> to vector<20x128xf32>
    %cst_106 = arith.constant dense<0.000000e+00> : vector<2x128xf32>
    %95 = tpu.matmul %92, %94, %cst_106 {dimension_numbers = #tpu.dot_dimension_numbers<[1], [0], [0], [1], [0, 0, 1, 1], [], []>} : vector<2x20xf32>, vector<20x128xf32>, vector<2x128xf32> -> vector<2x128xf32>
    %96 = arith.addf %90, %95 : vector<2x128xf32>
    %c0_107 = arith.constant 0 : index
    %c24 = arith.constant 24 : index
    %c0_108 = arith.constant 0 : index
    %97 = vector.load %arg11[%c0_107, %c24, %c0_108] : memref<2x32x20xf32, #tpu.memory_space<vmem>>, vector<1x2x20xf32>
    %98 = vector.shape_cast %97 : vector<1x2x20xf32> to vector<2x20xf32>
    %c0_109 = arith.constant 0 : index
    %c12_110 = arith.constant 12 : index
    %c0_111 = arith.constant 0 : index
    %c0_112 = arith.constant 0 : index
    %99 = vector.load %arg4[%c0_109, %c12_110, %c0_111, %c0_112] : memref<2x16x20x128xf32, #tpu.memory_space<vmem>>, vector<1x1x20x128xf32>
    %100 = vector.shape_cast %99 : vector<1x1x20x128xf32> to vector<20x128xf32>
    %cst_113 = arith.constant dense<0.000000e+00> : vector<2x128xf32>
    %101 = tpu.matmul %98, %100, %cst_113 {dimension_numbers = #tpu.dot_dimension_numbers<[1], [0], [0], [1], [0, 0, 1, 1], [], []>} : vector<2x20xf32>, vector<20x128xf32>, vector<2x128xf32> -> vector<2x128xf32>
    %102 = arith.addf %96, %101 : vector<2x128xf32>
    %c0_114 = arith.constant 0 : index
    %c26 = arith.constant 26 : index
    %c0_115 = arith.constant 0 : index
    %103 = vector.load %arg11[%c0_114, %c26, %c0_115] : memref<2x32x20xf32, #tpu.memory_space<vmem>>, vector<1x2x20xf32>
    %104 = vector.shape_cast %103 : vector<1x2x20xf32> to vector<2x20xf32>
    %c0_116 = arith.constant 0 : index
    %c13 = arith.constant 13 : index
    %c0_117 = arith.constant 0 : index
    %c0_118 = arith.constant 0 : index
    %105 = vector.load %arg4[%c0_116, %c13, %c0_117, %c0_118] : memref<2x16x20x128xf32, #tpu.memory_space<vmem>>, vector<1x1x20x128xf32>
    %106 = vector.shape_cast %105 : vector<1x1x20x128xf32> to vector<20x128xf32>
    %cst_119 = arith.constant dense<0.000000e+00> : vector<2x128xf32>
    %107 = tpu.matmul %104, %106, %cst_119 {dimension_numbers = #tpu.dot_dimension_numbers<[1], [0], [0], [1], [0, 0, 1, 1], [], []>} : vector<2x20xf32>, vector<20x128xf32>, vector<2x128xf32> -> vector<2x128xf32>
    %108 = arith.addf %102, %107 : vector<2x128xf32>
    %c0_120 = arith.constant 0 : index
    %c28 = arith.constant 28 : index
    %c0_121 = arith.constant 0 : index
    %109 = vector.load %arg11[%c0_120, %c28, %c0_121] : memref<2x32x20xf32, #tpu.memory_space<vmem>>, vector<1x2x20xf32>
    %110 = vector.shape_cast %109 : vector<1x2x20xf32> to vector<2x20xf32>
    %c0_122 = arith.constant 0 : index
    %c14_123 = arith.constant 14 : index
    %c0_124 = arith.constant 0 : index
    %c0_125 = arith.constant 0 : index
    %111 = vector.load %arg4[%c0_122, %c14_123, %c0_124, %c0_125] : memref<2x16x20x128xf32, #tpu.memory_space<vmem>>, vector<1x1x20x128xf32>
    %112 = vector.shape_cast %111 : vector<1x1x20x128xf32> to vector<20x128xf32>
    %cst_126 = arith.constant dense<0.000000e+00> : vector<2x128xf32>
    %113 = tpu.matmul %110, %112, %cst_126 {dimension_numbers = #tpu.dot_dimension_numbers<[1], [0], [0], [1], [0, 0, 1, 1], [], []>} : vector<2x20xf32>, vector<20x128xf32>, vector<2x128xf32> -> vector<2x128xf32>
    %114 = arith.addf %108, %113 : vector<2x128xf32>
    %c0_127 = arith.constant 0 : index
    %c30 = arith.constant 30 : index
    %c0_128 = arith.constant 0 : index
    %115 = vector.load %arg11[%c0_127, %c30, %c0_128] : memref<2x32x20xf32, #tpu.memory_space<vmem>>, vector<1x2x20xf32>
    %116 = vector.shape_cast %115 : vector<1x2x20xf32> to vector<2x20xf32>
    %c0_129 = arith.constant 0 : index
    %c15 = arith.constant 15 : index
    %c0_130 = arith.constant 0 : index
    %c0_131 = arith.constant 0 : index
    %117 = vector.load %arg4[%c0_129, %c15, %c0_130, %c0_131] : memref<2x16x20x128xf32, #tpu.memory_space<vmem>>, vector<1x1x20x128xf32>
    %118 = vector.shape_cast %117 : vector<1x1x20x128xf32> to vector<20x128xf32>
    %cst_132 = arith.constant dense<0.000000e+00> : vector<2x128xf32>
    %119 = tpu.matmul %116, %118, %cst_132 {dimension_numbers = #tpu.dot_dimension_numbers<[1], [0], [0], [1], [0, 0, 1, 1], [], []>} : vector<2x20xf32>, vector<20x128xf32>, vector<2x128xf32> -> vector<2x128xf32>
    %120 = arith.addf %114, %119 : vector<2x128xf32>
    %c0_133 = arith.constant 0 : index
    %c0_134 = arith.constant 0 : index
    %c0_135 = arith.constant 0 : index
    %121 = vector.load %arg5[%c0_133, %c0_134, %c0_135] : memref<2x1x128xf32, #tpu.memory_space<vmem>>, vector<1x1x128xf32>
    %122 = vector.shape_cast %121 : vector<1x1x128xf32> to vector<1x128xf32>
    %123 = vector.broadcast %122 : vector<1x128xf32> to vector<2x128xf32>
    %124 = arith.addf %120, %123 : vector<2x128xf32>
    %cst_136 = arith.constant 0.000000e+00 : f32
    %125 = vector.broadcast %cst_136 : f32 to vector<2x128xf32>
    %126 = arith.maximumf %124, %125 : vector<2x128xf32>
    %c0_137 = arith.constant 0 : index
    %c0_138 = arith.constant 0 : index
    %c0_139 = arith.constant 0 : index
    %127 = vector.load %arg6[%c0_137, %c0_138, %c0_139] : memref<2x128x128xf32, #tpu.memory_space<vmem>>, vector<1x128x128xf32>
    %128 = vector.shape_cast %127 : vector<1x128x128xf32> to vector<128x128xf32>
    %cst_140 = arith.constant dense<0.000000e+00> : vector<2x128xf32>
    %129 = tpu.matmul %126, %128, %cst_140 {dimension_numbers = #tpu.dot_dimension_numbers<[1], [0], [0], [1], [0, 0, 1, 1], [], []>} : vector<2x128xf32>, vector<128x128xf32>, vector<2x128xf32> -> vector<2x128xf32>
    %c0_141 = arith.constant 0 : index
    %c0_142 = arith.constant 0 : index
    %c0_143 = arith.constant 0 : index
    %130 = vector.load %arg7[%c0_141, %c0_142, %c0_143] : memref<2x1x128xf32, #tpu.memory_space<vmem>>, vector<1x1x128xf32>
    %131 = vector.shape_cast %130 : vector<1x1x128xf32> to vector<1x128xf32>
    %132 = vector.broadcast %131 : vector<1x128xf32> to vector<2x128xf32>
    %133 = arith.addf %129, %132 : vector<2x128xf32>
    %cst_144 = arith.constant dense<0xFF800000> : vector<2xf32>
    %134 = vector.multi_reduction <maximumf>, %133, %cst_144 [1] : vector<2x128xf32> to vector<2xf32>
    %135 = vector.shape_cast %134 : vector<2xf32> to vector<2x1xf32>
    %136 = vector.broadcast %135 : vector<2x1xf32> to vector<2x128xf32>
    %137 = arith.subf %133, %136 : vector<2x128xf32>
    %138 = math.exp %137 : vector<2x128xf32>
    %cst_145 = arith.constant dense<0.000000e+00> : vector<2xf32>
    %139 = vector.multi_reduction <add>, %138, %cst_145 [1] : vector<2x128xf32> to vector<2xf32>
    %140 = vector.shape_cast %139 : vector<2xf32> to vector<2x1xf32>
    %141 = math.log %140 : vector<2x1xf32>
    %142 = vector.broadcast %141 : vector<2x1xf32> to vector<2x128xf32>
    %143 = arith.subf %137, %142 : vector<2x128xf32>
    %c0_146 = arith.constant 0 : index
    %c0_147 = arith.constant 0 : index
    %c0_148 = arith.constant 0 : index
    %144 = vector.load %arg10[%c0_146, %c0_147, %c0_148] : memref<3x2x128xf32, #tpu.memory_space<vmem>>, vector<1x2x128xf32>
    %145 = vector.shape_cast %144 : vector<1x2x128xf32> to vector<2x128xf32>
    %146 = vector.shape_cast %143 : vector<2x128xf32> to vector<1x2x128xf32>
    tpu.vector_store %arg10[%c0_146, %c0_147, %c0_148], %146 {strides = array<i32>} : memref<3x2x128xf32, #tpu.memory_space<vmem>>, vector<1x2x128xf32>,
    %c1_149 = arith.constant 1 : index
    %c0_150 = arith.constant 0 : index
    %c0_151 = arith.constant 0 : index
    %147 = vector.load %arg2[%c1_149, %c0_150, %c0_151] : memref<2x256x20xf32, #tpu.memory_space<vmem>>, vector<1x256x20xf32>
    %148 = vector.shape_cast %147 : vector<1x256x20xf32> to vector<256x20xf32>
    %c1_152 = arith.constant 1 : index
    %c0_153 = arith.constant 0 : index
    %c0_154 = arith.constant 0 : index
    %c0_155 = arith.constant 0 : index
    %149 = vector.load %arg1[%c1_152, %c0_153, %c0_154, %c0_155] : memref<2x4x32x256xf32, #tpu.memory_space<vmem>>, vector<1x1x32x256xf32>
    %150 = vector.shape_cast %149 : vector<1x1x32x256xf32> to vector<32x256xf32>
    %cst_156 = arith.constant dense<0.000000e+00> : vector<32x20xf32>
    %151 = tpu.matmul %150, %148, %cst_156 {dimension_numbers = #tpu.dot_dimension_numbers<[1], [0], [0], [1], [0, 0, 1, 1], [], []>} : vector<32x256xf32>, vector<256x20xf32>, vector<32x20xf32> -> vector<32x20xf32>
    %c1_157 = arith.constant 1 : index
    %c1_158 = arith.constant 1 : index
    %c0_159 = arith.constant 0 : index
    %c0_160 = arith.constant 0 : index
    %152 = vector.load %arg1[%c1_157, %c1_158, %c0_159, %c0_160] : memref<2x4x32x256xf32, #tpu.memory_space<vmem>>, vector<1x1x32x256xf32>
    %153 = vector.shape_cast %152 : vector<1x1x32x256xf32> to vector<32x256xf32>
    %cst_161 = arith.constant dense<0.000000e+00> : vector<32x20xf32>
    %154 = tpu.matmul %153, %148, %cst_161 {dimension_numbers = #tpu.dot_dimension_numbers<[1], [0], [0], [1], [0, 0, 1, 1], [], []>} : vector<32x256xf32>, vector<256x20xf32>, vector<32x20xf32> -> vector<32x20xf32>
    %155 = arith.maximumf %151, %154 : vector<32x20xf32>
    %c1_162 = arith.constant 1 : index
    %c2_163 = arith.constant 2 : index
    %c0_164 = arith.constant 0 : index
    %c0_165 = arith.constant 0 : index
    %156 = vector.load %arg1[%c1_162, %c2_163, %c0_164, %c0_165] : memref<2x4x32x256xf32, #tpu.memory_space<vmem>>, vector<1x1x32x256xf32>
    %157 = vector.shape_cast %156 : vector<1x1x32x256xf32> to vector<32x256xf32>
    %cst_166 = arith.constant dense<0.000000e+00> : vector<32x20xf32>
    %158 = tpu.matmul %157, %148, %cst_166 {dimension_numbers = #tpu.dot_dimension_numbers<[1], [0], [0], [1], [0, 0, 1, 1], [], []>} : vector<32x256xf32>, vector<256x20xf32>, vector<32x20xf32> -> vector<32x20xf32>
    %159 = arith.maximumf %155, %158 : vector<32x20xf32>
    %c1_167 = arith.constant 1 : index
    %c3_168 = arith.constant 3 : index
    %c0_169 = arith.constant 0 : index
    %c0_170 = arith.constant 0 : index
    %160 = vector.load %arg1[%c1_167, %c3_168, %c0_169, %c0_170] : memref<2x4x32x256xf32, #tpu.memory_space<vmem>>, vector<1x1x32x256xf32>
    %161 = vector.shape_cast %160 : vector<1x1x32x256xf32> to vector<32x256xf32>
    %cst_171 = arith.constant dense<0.000000e+00> : vector<32x20xf32>
    %162 = tpu.matmul %161, %148, %cst_171 {dimension_numbers = #tpu.dot_dimension_numbers<[1], [0], [0], [1], [0, 0, 1, 1], [], []>} : vector<32x256xf32>, vector<256x20xf32>, vector<32x20xf32> -> vector<32x20xf32>
    %163 = arith.maximumf %159, %162 : vector<32x20xf32>
    %c1_172 = arith.constant 1 : index
    %c0_173 = arith.constant 0 : index
    %c0_174 = arith.constant 0 : index
    %164 = vector.load %arg3[%c1_172, %c0_173, %c0_174] : memref<2x1x20xf32, #tpu.memory_space<vmem>>, vector<1x1x20xf32>
    %165 = vector.shape_cast %164 : vector<1x1x20xf32> to vector<1x20xf32>
    %166 = vector.broadcast %165 : vector<1x20xf32> to vector<32x20xf32>
    %167 = arith.addf %163, %166 : vector<32x20xf32>
    %cst_175 = arith.constant 0.000000e+00 : f32
    %168 = vector.broadcast %cst_175 : f32 to vector<32x20xf32>
    %169 = arith.maximumf %167, %168 : vector<32x20xf32>
    %c1_176 = arith.constant 1 : index
    %c0_177 = arith.constant 0 : index
    %c0_178 = arith.constant 0 : index
    %170 = vector.load %arg11[%c1_176, %c0_177, %c0_178] : memref<2x32x20xf32, #tpu.memory_space<vmem>>, vector<1x32x20xf32>
    %171 = vector.shape_cast %170 : vector<1x32x20xf32> to vector<32x20xf32>
    %172 = vector.shape_cast %169 : vector<32x20xf32> to vector<1x32x20xf32>
    tpu.vector_store %arg11[%c1_176, %c0_177, %c0_178], %172 {strides = array<i32>} : memref<2x32x20xf32, #tpu.memory_space<vmem>>, vector<1x32x20xf32>,
    %c1_179 = arith.constant 1 : index
    %c0_180 = arith.constant 0 : index
    %c0_181 = arith.constant 0 : index
    %173 = vector.load %arg11[%c1_179, %c0_180, %c0_181] : memref<2x32x20xf32, #tpu.memory_space<vmem>>, vector<1x2x20xf32>
    %174 = vector.shape_cast %173 : vector<1x2x20xf32> to vector<2x20xf32>
    %c1_182 = arith.constant 1 : index
    %c0_183 = arith.constant 0 : index
    %c0_184 = arith.constant 0 : index
    %c0_185 = arith.constant 0 : index
    %175 = vector.load %arg4[%c1_182, %c0_183, %c0_184, %c0_185] : memref<2x16x20x128xf32, #tpu.memory_space<vmem>>, vector<1x1x20x128xf32>
    %176 = vector.shape_cast %175 : vector<1x1x20x128xf32> to vector<20x128xf32>
    %cst_186 = arith.constant dense<0.000000e+00> : vector<2x128xf32>
    %177 = tpu.matmul %174, %176, %cst_186 {dimension_numbers = #tpu.dot_dimension_numbers<[1], [0], [0], [1], [0, 0, 1, 1], [], []>} : vector<2x20xf32>, vector<20x128xf32>, vector<2x128xf32> -> vector<2x128xf32>
    %c1_187 = arith.constant 1 : index
    %c2_188 = arith.constant 2 : index
    %c0_189 = arith.constant 0 : index
    %178 = vector.load %arg11[%c1_187, %c2_188, %c0_189] : memref<2x32x20xf32, #tpu.memory_space<vmem>>, vector<1x2x20xf32>
    %179 = vector.shape_cast %178 : vector<1x2x20xf32> to vector<2x20xf32>
    %c1_190 = arith.constant 1 : index
    %c1_191 = arith.constant 1 : index
    %c0_192 = arith.constant 0 : index
    %c0_193 = arith.constant 0 : index
    %180 = vector.load %arg4[%c1_190, %c1_191, %c0_192, %c0_193] : memref<2x16x20x128xf32, #tpu.memory_space<vmem>>, vector<1x1x20x128xf32>
    %181 = vector.shape_cast %180 : vector<1x1x20x128xf32> to vector<20x128xf32>
    %cst_194 = arith.constant dense<0.000000e+00> : vector<2x128xf32>
    %182 = tpu.matmul %179, %181, %cst_194 {dimension_numbers = #tpu.dot_dimension_numbers<[1], [0], [0], [1], [0, 0, 1, 1], [], []>} : vector<2x20xf32>, vector<20x128xf32>, vector<2x128xf32> -> vector<2x128xf32>
    %183 = arith.addf %177, %182 : vector<2x128xf32>
    %c1_195 = arith.constant 1 : index
    %c4_196 = arith.constant 4 : index
    %c0_197 = arith.constant 0 : index
    %184 = vector.load %arg11[%c1_195, %c4_196, %c0_197] : memref<2x32x20xf32, #tpu.memory_space<vmem>>, vector<1x2x20xf32>
    %185 = vector.shape_cast %184 : vector<1x2x20xf32> to vector<2x20xf32>
    %c1_198 = arith.constant 1 : index
    %c2_199 = arith.constant 2 : index
    %c0_200 = arith.constant 0 : index
    %c0_201 = arith.constant 0 : index
    %186 = vector.load %arg4[%c1_198, %c2_199, %c0_200, %c0_201] : memref<2x16x20x128xf32, #tpu.memory_space<vmem>>, vector<1x1x20x128xf32>
    %187 = vector.shape_cast %186 : vector<1x1x20x128xf32> to vector<20x128xf32>
    %cst_202 = arith.constant dense<0.000000e+00> : vector<2x128xf32>
    %188 = tpu.matmul %185, %187, %cst_202 {dimension_numbers = #tpu.dot_dimension_numbers<[1], [0], [0], [1], [0, 0, 1, 1], [], []>} : vector<2x20xf32>, vector<20x128xf32>, vector<2x128xf32> -> vector<2x128xf32>
    %189 = arith.addf %183, %188 : vector<2x128xf32>
    %c1_203 = arith.constant 1 : index
    %c6_204 = arith.constant 6 : index
    %c0_205 = arith.constant 0 : index
    %190 = vector.load %arg11[%c1_203, %c6_204, %c0_205] : memref<2x32x20xf32, #tpu.memory_space<vmem>>, vector<1x2x20xf32>
    %191 = vector.shape_cast %190 : vector<1x2x20xf32> to vector<2x20xf32>
    %c1_206 = arith.constant 1 : index
    %c3_207 = arith.constant 3 : index
    %c0_208 = arith.constant 0 : index
    %c0_209 = arith.constant 0 : index
    %192 = vector.load %arg4[%c1_206, %c3_207, %c0_208, %c0_209] : memref<2x16x20x128xf32, #tpu.memory_space<vmem>>, vector<1x1x20x128xf32>
    %193 = vector.shape_cast %192 : vector<1x1x20x128xf32> to vector<20x128xf32>
    %cst_210 = arith.constant dense<0.000000e+00> : vector<2x128xf32>
    %194 = tpu.matmul %191, %193, %cst_210 {dimension_numbers = #tpu.dot_dimension_numbers<[1], [0], [0], [1], [0, 0, 1, 1], [], []>} : vector<2x20xf32>, vector<20x128xf32>, vector<2x128xf32> -> vector<2x128xf32>
    %195 = arith.addf %189, %194 : vector<2x128xf32>
    %c1_211 = arith.constant 1 : index
    %c8_212 = arith.constant 8 : index
    %c0_213 = arith.constant 0 : index
    %196 = vector.load %arg11[%c1_211, %c8_212, %c0_213] : memref<2x32x20xf32, #tpu.memory_space<vmem>>, vector<1x2x20xf32>
    %197 = vector.shape_cast %196 : vector<1x2x20xf32> to vector<2x20xf32>
    %c1_214 = arith.constant 1 : index
    %c4_215 = arith.constant 4 : index
    %c0_216 = arith.constant 0 : index
    %c0_217 = arith.constant 0 : index
    %198 = vector.load %arg4[%c1_214, %c4_215, %c0_216, %c0_217] : memref<2x16x20x128xf32, #tpu.memory_space<vmem>>, vector<1x1x20x128xf32>
    %199 = vector.shape_cast %198 : vector<1x1x20x128xf32> to vector<20x128xf32>
    %cst_218 = arith.constant dense<0.000000e+00> : vector<2x128xf32>
    %200 = tpu.matmul %197, %199, %cst_218 {dimension_numbers = #tpu.dot_dimension_numbers<[1], [0], [0], [1], [0, 0, 1, 1], [], []>} : vector<2x20xf32>, vector<20x128xf32>, vector<2x128xf32> -> vector<2x128xf32>
    %201 = arith.addf %195, %200 : vector<2x128xf32>
    %c1_219 = arith.constant 1 : index
    %c10_220 = arith.constant 10 : index
    %c0_221 = arith.constant 0 : index
    %202 = vector.load %arg11[%c1_219, %c10_220, %c0_221] : memref<2x32x20xf32, #tpu.memory_space<vmem>>, vector<1x2x20xf32>
    %203 = vector.shape_cast %202 : vector<1x2x20xf32> to vector<2x20xf32>
    %c1_222 = arith.constant 1 : index
    %c5_223 = arith.constant 5 : index
    %c0_224 = arith.constant 0 : index
    %c0_225 = arith.constant 0 : index
    %204 = vector.load %arg4[%c1_222, %c5_223, %c0_224, %c0_225] : memref<2x16x20x128xf32, #tpu.memory_space<vmem>>, vector<1x1x20x128xf32>
    %205 = vector.shape_cast %204 : vector<1x1x20x128xf32> to vector<20x128xf32>
    %cst_226 = arith.constant dense<0.000000e+00> : vector<2x128xf32>
    %206 = tpu.matmul %203, %205, %cst_226 {dimension_numbers = #tpu.dot_dimension_numbers<[1], [0], [0], [1], [0, 0, 1, 1], [], []>} : vector<2x20xf32>, vector<20x128xf32>, vector<2x128xf32> -> vector<2x128xf32>
    %207 = arith.addf %201, %206 : vector<2x128xf32>
    %c1_227 = arith.constant 1 : index
    %c12_228 = arith.constant 12 : index
    %c0_229 = arith.constant 0 : index
    %208 = vector.load %arg11[%c1_227, %c12_228, %c0_229] : memref<2x32x20xf32, #tpu.memory_space<vmem>>, vector<1x2x20xf32>
    %209 = vector.shape_cast %208 : vector<1x2x20xf32> to vector<2x20xf32>
    %c1_230 = arith.constant 1 : index
    %c6_231 = arith.constant 6 : index
    %c0_232 = arith.constant 0 : index
    %c0_233 = arith.constant 0 : index
    %210 = vector.load %arg4[%c1_230, %c6_231, %c0_232, %c0_233] : memref<2x16x20x128xf32, #tpu.memory_space<vmem>>, vector<1x1x20x128xf32>
    %211 = vector.shape_cast %210 : vector<1x1x20x128xf32> to vector<20x128xf32>
    %cst_234 = arith.constant dense<0.000000e+00> : vector<2x128xf32>
    %212 = tpu.matmul %209, %211, %cst_234 {dimension_numbers = #tpu.dot_dimension_numbers<[1], [0], [0], [1], [0, 0, 1, 1], [], []>} : vector<2x20xf32>, vector<20x128xf32>, vector<2x128xf32> -> vector<2x128xf32>
    %213 = arith.addf %207, %212 : vector<2x128xf32>
    %c1_235 = arith.constant 1 : index
    %c14_236 = arith.constant 14 : index
    %c0_237 = arith.constant 0 : index
    %214 = vector.load %arg11[%c1_235, %c14_236, %c0_237] : memref<2x32x20xf32, #tpu.memory_space<vmem>>, vector<1x2x20xf32>
    %215 = vector.shape_cast %214 : vector<1x2x20xf32> to vector<2x20xf32>
    %c1_238 = arith.constant 1 : index
    %c7_239 = arith.constant 7 : index
    %c0_240 = arith.constant 0 : index
    %c0_241 = arith.constant 0 : index
    %216 = vector.load %arg4[%c1_238, %c7_239, %c0_240, %c0_241] : memref<2x16x20x128xf32, #tpu.memory_space<vmem>>, vector<1x1x20x128xf32>
    %217 = vector.shape_cast %216 : vector<1x1x20x128xf32> to vector<20x128xf32>
    %cst_242 = arith.constant dense<0.000000e+00> : vector<2x128xf32>
    %218 = tpu.matmul %215, %217, %cst_242 {dimension_numbers = #tpu.dot_dimension_numbers<[1], [0], [0], [1], [0, 0, 1, 1], [], []>} : vector<2x20xf32>, vector<20x128xf32>, vector<2x128xf32> -> vector<2x128xf32>
    %219 = arith.addf %213, %218 : vector<2x128xf32>
    %c1_243 = arith.constant 1 : index
    %c16_244 = arith.constant 16 : index
    %c0_245 = arith.constant 0 : index
    %220 = vector.load %arg11[%c1_243, %c16_244, %c0_245] : memref<2x32x20xf32, #tpu.memory_space<vmem>>, vector<1x2x20xf32>
    %221 = vector.shape_cast %220 : vector<1x2x20xf32> to vector<2x20xf32>
    %c1_246 = arith.constant 1 : index
    %c8_247 = arith.constant 8 : index
    %c0_248 = arith.constant 0 : index
    %c0_249 = arith.constant 0 : index
    %222 = vector.load %arg4[%c1_246, %c8_247, %c0_248, %c0_249] : memref<2x16x20x128xf32, #tpu.memory_space<vmem>>, vector<1x1x20x128xf32>
    %223 = vector.shape_cast %222 : vector<1x1x20x128xf32> to vector<20x128xf32>
    %cst_250 = arith.constant dense<0.000000e+00> : vector<2x128xf32>
    %224 = tpu.matmul %221, %223, %cst_250 {dimension_numbers = #tpu.dot_dimension_numbers<[1], [0], [0], [1], [0, 0, 1, 1], [], []>} : vector<2x20xf32>, vector<20x128xf32>, vector<2x128xf32> -> vector<2x128xf32>
    %225 = arith.addf %219, %224 : vector<2x128xf32>
    %c1_251 = arith.constant 1 : index
    %c18_252 = arith.constant 18 : index
    %c0_253 = arith.constant 0 : index
    %226 = vector.load %arg11[%c1_251, %c18_252, %c0_253] : memref<2x32x20xf32, #tpu.memory_space<vmem>>, vector<1x2x20xf32>
    %227 = vector.shape_cast %226 : vector<1x2x20xf32> to vector<2x20xf32>
    %c1_254 = arith.constant 1 : index
    %c9_255 = arith.constant 9 : index
    %c0_256 = arith.constant 0 : index
    %c0_257 = arith.constant 0 : index
    %228 = vector.load %arg4[%c1_254, %c9_255, %c0_256, %c0_257] : memref<2x16x20x128xf32, #tpu.memory_space<vmem>>, vector<1x1x20x128xf32>
    %229 = vector.shape_cast %228 : vector<1x1x20x128xf32> to vector<20x128xf32>
    %cst_258 = arith.constant dense<0.000000e+00> : vector<2x128xf32>
    %230 = tpu.matmul %227, %229, %cst_258 {dimension_numbers = #tpu.dot_dimension_numbers<[1], [0], [0], [1], [0, 0, 1, 1], [], []>} : vector<2x20xf32>, vector<20x128xf32>, vector<2x128xf32> -> vector<2x128xf32>
    %231 = arith.addf %225, %230 : vector<2x128xf32>
    %c1_259 = arith.constant 1 : index
    %c20_260 = arith.constant 20 : index
    %c0_261 = arith.constant 0 : index
    %232 = vector.load %arg11[%c1_259, %c20_260, %c0_261] : memref<2x32x20xf32, #tpu.memory_space<vmem>>, vector<1x2x20xf32>
    %233 = vector.shape_cast %232 : vector<1x2x20xf32> to vector<2x20xf32>
    %c1_262 = arith.constant 1 : index
    %c10_263 = arith.constant 10 : index
    %c0_264 = arith.constant 0 : index
    %c0_265 = arith.constant 0 : index
    %234 = vector.load %arg4[%c1_262, %c10_263, %c0_264, %c0_265] : memref<2x16x20x128xf32, #tpu.memory_space<vmem>>, vector<1x1x20x128xf32>
    %235 = vector.shape_cast %234 : vector<1x1x20x128xf32> to vector<20x128xf32>
    %cst_266 = arith.constant dense<0.000000e+00> : vector<2x128xf32>
    %236 = tpu.matmul %233, %235, %cst_266 {dimension_numbers = #tpu.dot_dimension_numbers<[1], [0], [0], [1], [0, 0, 1, 1], [], []>} : vector<2x20xf32>, vector<20x128xf32>, vector<2x128xf32> -> vector<2x128xf32>
    %237 = arith.addf %231, %236 : vector<2x128xf32>
    %c1_267 = arith.constant 1 : index
    %c22_268 = arith.constant 22 : index
    %c0_269 = arith.constant 0 : index
    %238 = vector.load %arg11[%c1_267, %c22_268, %c0_269] : memref<2x32x20xf32, #tpu.memory_space<vmem>>, vector<1x2x20xf32>
    %239 = vector.shape_cast %238 : vector<1x2x20xf32> to vector<2x20xf32>
    %c1_270 = arith.constant 1 : index
    %c11_271 = arith.constant 11 : index
    %c0_272 = arith.constant 0 : index
    %c0_273 = arith.constant 0 : index
    %240 = vector.load %arg4[%c1_270, %c11_271, %c0_272, %c0_273] : memref<2x16x20x128xf32, #tpu.memory_space<vmem>>, vector<1x1x20x128xf32>
    %241 = vector.shape_cast %240 : vector<1x1x20x128xf32> to vector<20x128xf32>
    %cst_274 = arith.constant dense<0.000000e+00> : vector<2x128xf32>
    %242 = tpu.matmul %239, %241, %cst_274 {dimension_numbers = #tpu.dot_dimension_numbers<[1], [0], [0], [1], [0, 0, 1, 1], [], []>} : vector<2x20xf32>, vector<20x128xf32>, vector<2x128xf32> -> vector<2x128xf32>
    %243 = arith.addf %237, %242 : vector<2x128xf32>
    %c1_275 = arith.constant 1 : index
    %c24_276 = arith.constant 24 : index
    %c0_277 = arith.constant 0 : index
    %244 = vector.load %arg11[%c1_275, %c24_276, %c0_277] : memref<2x32x20xf32, #tpu.memory_space<vmem>>, vector<1x2x20xf32>
    %245 = vector.shape_cast %244 : vector<1x2x20xf32> to vector<2x20xf32>
    %c1_278 = arith.constant 1 : index
    %c12_279 = arith.constant 12 : index
    %c0_280 = arith.constant 0 : index
    %c0_281 = arith.constant 0 : index
    %246 = vector.load %arg4[%c1_278, %c12_279, %c0_280, %c0_281] : memref<2x16x20x128xf32, #tpu.memory_space<vmem>>, vector<1x1x20x128xf32>
    %247 = vector.shape_cast %246 : vector<1x1x20x128xf32> to vector<20x128xf32>
    %cst_282 = arith.constant dense<0.000000e+00> : vector<2x128xf32>
    %248 = tpu.matmul %245, %247, %cst_282 {dimension_numbers = #tpu.dot_dimension_numbers<[1], [0], [0], [1], [0, 0, 1, 1], [], []>} : vector<2x20xf32>, vector<20x128xf32>, vector<2x128xf32> -> vector<2x128xf32>
    %249 = arith.addf %243, %248 : vector<2x128xf32>
    %c1_283 = arith.constant 1 : index
    %c26_284 = arith.constant 26 : index
    %c0_285 = arith.constant 0 : index
    %250 = vector.load %arg11[%c1_283, %c26_284, %c0_285] : memref<2x32x20xf32, #tpu.memory_space<vmem>>, vector<1x2x20xf32>
    %251 = vector.shape_cast %250 : vector<1x2x20xf32> to vector<2x20xf32>
    %c1_286 = arith.constant 1 : index
    %c13_287 = arith.constant 13 : index
    %c0_288 = arith.constant 0 : index
    %c0_289 = arith.constant 0 : index
    %252 = vector.load %arg4[%c1_286, %c13_287, %c0_288, %c0_289] : memref<2x16x20x128xf32, #tpu.memory_space<vmem>>, vector<1x1x20x128xf32>
    %253 = vector.shape_cast %252 : vector<1x1x20x128xf32> to vector<20x128xf32>
    %cst_290 = arith.constant dense<0.000000e+00> : vector<2x128xf32>
    %254 = tpu.matmul %251, %253, %cst_290 {dimension_numbers = #tpu.dot_dimension_numbers<[1], [0], [0], [1], [0, 0, 1, 1], [], []>} : vector<2x20xf32>, vector<20x128xf32>, vector<2x128xf32> -> vector<2x128xf32>
    %255 = arith.addf %249, %254 : vector<2x128xf32>
    %c1_291 = arith.constant 1 : index
    %c28_292 = arith.constant 28 : index
    %c0_293 = arith.constant 0 : index
    %256 = vector.load %arg11[%c1_291, %c28_292, %c0_293] : memref<2x32x20xf32, #tpu.memory_space<vmem>>, vector<1x2x20xf32>
    %257 = vector.shape_cast %256 : vector<1x2x20xf32> to vector<2x20xf32>
    %c1_294 = arith.constant 1 : index
    %c14_295 = arith.constant 14 : index
    %c0_296 = arith.constant 0 : index
    %c0_297 = arith.constant 0 : index
    %258 = vector.load %arg4[%c1_294, %c14_295, %c0_296, %c0_297] : memref<2x16x20x128xf32, #tpu.memory_space<vmem>>, vector<1x1x20x128xf32>
    %259 = vector.shape_cast %258 : vector<1x1x20x128xf32> to vector<20x128xf32>
    %cst_298 = arith.constant dense<0.000000e+00> : vector<2x128xf32>
    %260 = tpu.matmul %257, %259, %cst_298 {dimension_numbers = #tpu.dot_dimension_numbers<[1], [0], [0], [1], [0, 0, 1, 1], [], []>} : vector<2x20xf32>, vector<20x128xf32>, vector<2x128xf32> -> vector<2x128xf32>
    %261 = arith.addf %255, %260 : vector<2x128xf32>
    %c1_299 = arith.constant 1 : index
    %c30_300 = arith.constant 30 : index
    %c0_301 = arith.constant 0 : index
    %262 = vector.load %arg11[%c1_299, %c30_300, %c0_301] : memref<2x32x20xf32, #tpu.memory_space<vmem>>, vector<1x2x20xf32>
    %263 = vector.shape_cast %262 : vector<1x2x20xf32> to vector<2x20xf32>
    %c1_302 = arith.constant 1 : index
    %c15_303 = arith.constant 15 : index
    %c0_304 = arith.constant 0 : index
    %c0_305 = arith.constant 0 : index
    %264 = vector.load %arg4[%c1_302, %c15_303, %c0_304, %c0_305] : memref<2x16x20x128xf32, #tpu.memory_space<vmem>>, vector<1x1x20x128xf32>
    %265 = vector.shape_cast %264 : vector<1x1x20x128xf32> to vector<20x128xf32>
    %cst_306 = arith.constant dense<0.000000e+00> : vector<2x128xf32>
    %266 = tpu.matmul %263, %265, %cst_306 {dimension_numbers = #tpu.dot_dimension_numbers<[1], [0], [0], [1], [0, 0, 1, 1], [], []>} : vector<2x20xf32>, vector<20x128xf32>, vector<2x128xf32> -> vector<2x128xf32>
    %267 = arith.addf %261, %266 : vector<2x128xf32>
    %c1_307 = arith.constant 1 : index
    %c0_308 = arith.constant 0 : index
    %c0_309 = arith.constant 0 : index
    %268 = vector.load %arg5[%c1_307, %c0_308, %c0_309] : memref<2x1x128xf32, #tpu.memory_space<vmem>>, vector<1x1x128xf32>
    %269 = vector.shape_cast %268 : vector<1x1x128xf32> to vector<1x128xf32>
    %270 = vector.broadcast %269 : vector<1x128xf32> to vector<2x128xf32>
    %271 = arith.addf %267, %270 : vector<2x128xf32>
    %cst_310 = arith.constant 0.000000e+00 : f32
    %272 = vector.broadcast %cst_310 : f32 to vector<2x128xf32>
    %273 = arith.maximumf %271, %272 : vector<2x128xf32>
    %c1_311 = arith.constant 1 : index
    %c0_312 = arith.constant 0 : index
    %c0_313 = arith.constant 0 : index
    %274 = vector.load %arg6[%c1_311, %c0_312, %c0_313] : memref<2x128x128xf32, #tpu.memory_space<vmem>>, vector<1x128x128xf32>
    %275 = vector.shape_cast %274 : vector<1x128x128xf32> to vector<128x128xf32>
    %cst_314 = arith.constant dense<0.000000e+00> : vector<2x128xf32>
    %276 = tpu.matmul %273, %275, %cst_314 {dimension_numbers = #tpu.dot_dimension_numbers<[1], [0], [0], [1], [0, 0, 1, 1], [], []>} : vector<2x128xf32>, vector<128x128xf32>, vector<2x128xf32> -> vector<2x128xf32>
    %c1_315 = arith.constant 1 : index
    %c0_316 = arith.constant 0 : index
    %c0_317 = arith.constant 0 : index
    %277 = vector.load %arg7[%c1_315, %c0_316, %c0_317] : memref<2x1x128xf32, #tpu.memory_space<vmem>>, vector<1x1x128xf32>
    %278 = vector.shape_cast %277 : vector<1x1x128xf32> to vector<1x128xf32>
    %279 = vector.broadcast %278 : vector<1x128xf32> to vector<2x128xf32>
    %280 = arith.addf %276, %279 : vector<2x128xf32>
    %cst_318 = arith.constant dense<0xFF800000> : vector<2xf32>
    %281 = vector.multi_reduction <maximumf>, %280, %cst_318 [1] : vector<2x128xf32> to vector<2xf32>
    %282 = vector.shape_cast %281 : vector<2xf32> to vector<2x1xf32>
    %283 = vector.broadcast %282 : vector<2x1xf32> to vector<2x128xf32>
    %284 = arith.subf %280, %283 : vector<2x128xf32>
    %285 = math.exp %284 : vector<2x128xf32>
    %cst_319 = arith.constant dense<0.000000e+00> : vector<2xf32>
    %286 = vector.multi_reduction <add>, %285, %cst_319 [1] : vector<2x128xf32> to vector<2xf32>
    %287 = vector.shape_cast %286 : vector<2xf32> to vector<2x1xf32>
    %288 = math.log %287 : vector<2x1xf32>
    %289 = vector.broadcast %288 : vector<2x1xf32> to vector<2x128xf32>
    %290 = arith.subf %284, %289 : vector<2x128xf32>
    %c1_320 = arith.constant 1 : index
    %c0_321 = arith.constant 0 : index
    %c0_322 = arith.constant 0 : index
    %291 = vector.load %arg10[%c1_320, %c0_321, %c0_322] : memref<3x2x128xf32, #tpu.memory_space<vmem>>, vector<1x2x128xf32>
    %292 = vector.shape_cast %291 : vector<1x2x128xf32> to vector<2x128xf32>
    %293 = vector.shape_cast %290 : vector<2x128xf32> to vector<1x2x128xf32>
    tpu.vector_store %arg10[%c1_320, %c0_321, %c0_322], %293 {strides = array<i32>} : memref<3x2x128xf32, #tpu.memory_space<vmem>>, vector<1x2x128xf32>,
    %294 = arith.addf %126, %273 : vector<2x128xf32>
    %cst_323 = arith.constant 5.000000e-01 : f32
    %295 = vector.broadcast %cst_323 : f32 to vector<2x128xf32>
    %296 = arith.mulf %295, %294 : vector<2x128xf32>
    %c0_324 = arith.constant 0 : index
    %c0_325 = arith.constant 0 : index
    %297 = vector.load %arg8[%c0_324, %c0_325] : memref<128x128xf32, #tpu.memory_space<vmem>>, vector<128x128xf32>
    %cst_326 = arith.constant dense<0.000000e+00> : vector<2x128xf32>
    %298 = tpu.matmul %296, %297, %cst_326 {dimension_numbers = #tpu.dot_dimension_numbers<[1], [0], [0], [1], [0, 0, 1, 1], [], []>} : vector<2x128xf32>, vector<128x128xf32>, vector<2x128xf32> -> vector<2x128xf32>
    %c0_327 = arith.constant 0 : index
    %c0_328 = arith.constant 0 : index
    %299 = vector.load %arg9[%c0_327, %c0_328] : memref<1x128xf32, #tpu.memory_space<vmem>>, vector<1x128xf32>
    %300 = vector.broadcast %299 : vector<1x128xf32> to vector<2x128xf32>
    %301 = arith.addf %298, %300 : vector<2x128xf32>
    %cst_329 = arith.constant dense<0xFF800000> : vector<2xf32>
    %302 = vector.multi_reduction <maximumf>, %301, %cst_329 [1] : vector<2x128xf32> to vector<2xf32>
    %303 = vector.shape_cast %302 : vector<2xf32> to vector<2x1xf32>
    %304 = vector.broadcast %303 : vector<2x1xf32> to vector<2x128xf32>
    %305 = arith.subf %301, %304 : vector<2x128xf32>
    %306 = math.exp %305 : vector<2x128xf32>
    %cst_330 = arith.constant dense<0.000000e+00> : vector<2xf32>
    %307 = vector.multi_reduction <add>, %306, %cst_330 [1] : vector<2x128xf32> to vector<2xf32>
    %308 = vector.shape_cast %307 : vector<2xf32> to vector<2x1xf32>
    %309 = math.log %308 : vector<2x1xf32>
    %310 = vector.broadcast %309 : vector<2x1xf32> to vector<2x128xf32>
    %311 = arith.subf %305, %310 : vector<2x128xf32>
    %c2_331 = arith.constant 2 : index
    %c0_332 = arith.constant 0 : index
    %c0_333 = arith.constant 0 : index
    %312 = vector.load %arg10[%c2_331, %c0_332, %c0_333] : memref<3x2x128xf32, #tpu.memory_space<vmem>>, vector<1x2x128xf32>
    %313 = vector.shape_cast %312 : vector<1x2x128xf32> to vector<2x128xf32>
    %314 = vector.shape_cast %311 : vector<2x128xf32> to vector<1x2x128xf32>
    tpu.vector_store %arg10[%c2_331, %c0_332, %c0_333], %314 {strides = array<i32>} : memref<3x2x128xf32, #tpu.memory_space<vmem>>, vector<1x2x128xf32>,
    return
  }
  func.func @transform_0(%arg0: i32) -> (i32, i32, i32, i32) {
    %c0_i32 = arith.constant 0 : i32
    %c0_i32_0 = arith.constant 0 : i32
    %c0_i32_1 = arith.constant 0 : i32
    %c0_i32_2 = arith.constant 0 : i32
    %c0_i32_3 = arith.constant 0 : i32
    return %c0_i32, %c0_i32_0, %c0_i32_1, %c0_i32_2 : i32, i32, i32, i32
  }
  func.func @transform_1(%arg0: i32) -> (i32, i32, i32) {
    %c0_i32 = arith.constant 0 : i32
    %c0_i32_0 = arith.constant 0 : i32
    %c0_i32_1 = arith.constant 0 : i32
    %c0_i32_2 = arith.constant 0 : i32
    return %c0_i32, %c0_i32_0, %c0_i32_1 : i32, i32, i32
  }
  func.func @transform_2(%arg0: i32) -> (i32, i32, i32) {
    %c0_i32 = arith.constant 0 : i32
    %c0_i32_0 = arith.constant 0 : i32
    %c0_i32_1 = arith.constant 0 : i32
    %c0_i32_2 = arith.constant 0 : i32
    return %c0_i32, %c0_i32_0, %c0_i32_1 : i32, i32, i32
  }
  func.func @transform_3(%arg0: i32) -> (i32, i32, i32, i32) {
    %c0_i32 = arith.constant 0 : i32
    %c0_i32_0 = arith.constant 0 : i32
    %c0_i32_1 = arith.constant 0 : i32
    %c0_i32_2 = arith.constant 0 : i32
    %c0_i32_3 = arith.constant 0 : i32
    return %c0_i32, %c0_i32_0, %c0_i32_1, %c0_i32_2 : i32, i32, i32, i32
  }
  func.func @transform_4(%arg0: i32) -> (i32, i32, i32) {
    %c0_i32 = arith.constant 0 : i32
    %c0_i32_0 = arith.constant 0 : i32
    %c0_i32_1 = arith.constant 0 : i32
    %c0_i32_2 = arith.constant 0 : i32
    return %c0_i32, %c0_i32_0, %c0_i32_1 : i32, i32, i32
  }
  func.func @transform_5(%arg0: i32) -> (i32, i32, i32) {
    %c0_i32 = arith.constant 0 : i32
    %c0_i32_0 = arith.constant 0 : i32
    %c0_i32_1 = arith.constant 0 : i32
    %c0_i32_2 = arith.constant 0 : i32
    return %c0_i32, %c0_i32_0, %c0_i32_1 : i32, i32, i32
  }
  func.func @transform_6(%arg0: i32) -> (i32, i32, i32) {
    %c0_i32 = arith.constant 0 : i32
    %c0_i32_0 = arith.constant 0 : i32
    %c0_i32_1 = arith.constant 0 : i32
    %c0_i32_2 = arith.constant 0 : i32
    return %c0_i32, %c0_i32_0, %c0_i32_1 : i32, i32, i32
  }
  func.func @transform_7(%arg0: i32) -> (i32, i32) {
    %c0_i32 = arith.constant 0 : i32
    %c0_i32_0 = arith.constant 0 : i32
    %c0_i32_1 = arith.constant 0 : i32
    return %c0_i32, %c0_i32_0 : i32, i32
  }
  func.func @transform_8(%arg0: i32) -> (i32, i32) {
    %c0_i32 = arith.constant 0 : i32
    %c0_i32_0 = arith.constant 0 : i32
    %c0_i32_1 = arith.constant 0 : i32
    return %c0_i32, %c0_i32_0 : i32, i32
  }
  func.func @transform_9(%arg0: i32) -> (i32, i32, i32) {
    %c0_i32 = arith.constant 0 : i32
    %c0_i32_0 = arith.constant 0 : i32
    %c0_i32_1 = arith.constant 0 : i32
    %c0_i32_2 = arith.constant 0 : i32
    return %c0_i32, %c0_i32_0, %c0_i32_1 : i32, i32, i32
  }
}

</mosaic_0001>

<llo_original>
// kernel: mmnet_forward.2
$region0: #{mmnet_forward.2}
  #allocation0 [shape = 'u32[]', space=smem, size = 0x4, offset = 0x4, fixed_abs, tag = 'smem constant byte address 0x4 - core index']
  #allocation1 [shape = 'u32[144,128]{1,0:T(1,128)}', space=vmem, size = 0x12000, scoped, tag = 'internal scratch']
  %s0 = inlined_call_operand.vmem [shape: f32[2,4,32,288], index: 0, kind: input, shape index: {}]
  %s1 = inlined_call_operand.vmem [shape: f32[2,16,32], index: 1, kind: input, shape index: {}]
  %s2 = inlined_call_operand.vmem [shape: f32[2,16,1], index: 2, kind: input, shape index: {}]
  %s3 = inlined_call_operand.vmem [shape: f32[2,16,288], index: 3, kind: output, shape index: {}]
  %s4 = sld [smem:[#allocation0]]
  $region45: #{mmnet_forward.2} parent=0
    _
  %s6 = ssub.s32 1, %s4
  %s7 = scalar_select 0, %s6, %s4
  loop: start=0, step=1, limit=4
  $region2: #{mmnet_forward.2} parent=0 // loop_pre_header
    _
  $region3: #{mmnet_forward.2} parent=0 // loop_header
    %s9 = sphi 0, %s13
    %p10 = scmp.ge.s32.totalorder %s9, 4
    %s19 = sphi 0, %s21
    %s22 = sphi 0, %s19
    %s23 = sphi 0, %s22
    %s39 = sphi 0, %s23
    %s45 = sphi 0, %s47
    %s48 = sphi 0, %s45
    %s49 = sphi 0, %s48
    %s65 = sphi 0, %s49
    %s71 = sphi 0, %s73
    %s74 = sphi 0, %s71
    %s75 = sphi 0, %s74
    %s91 = sphi 0, %s75
    %s97 = sphi 0, %s99
    %s100 = sphi 0, %s97
    %s101 = sphi 0, %s100
    %s117 = sphi 0, %s101
  $region4: #{mmnet_forward.2} parent=0 // loop_header_branch
    %12 = sbr.rel (%p10) target = $region8
  $region5: #{mmnet_forward.2} parent=0 // loop_body
    %s14 = ssub.s32 %s9, 1
    %s15 = ssub.s32 %s9, 2
    %s16 = sadd.s32 %s9, 1
    %s17 = ssub.s32 %s9, %s16
    %p18 = scmp.eq.s32.totalorder %s17, 0
    %s20 = sadd.s32 %s19, 1
    %s21 = scalar_select %p18, %s19, %s20
    %p24 = pneg %p18
    %p25 = scmp.eq.s32.totalorder %s9, 1
    %p26 = por %p24, %p25
    %p27 = scmp.ne.s32.totalorder %s19, %s22
    %p28 = scmp.eq.s32.totalorder %s9, 0
    %p29 = por %p27, %p28
    %p30 = scmp.ne.s32.totalorder %s19, %s22
    %p31 = scmp.eq.s32.totalorder %s14, 1
    %p32 = por %p30, %p31
    %p33 = scmp.ne.s32.totalorder %s22, %s23
    %p34 = scmp.eq.s32.totalorder %s14, 0
    %p35 = por %p33, %p34
    %p36 = scmp.ne.s32.totalorder %s22, %s23
    %p37 = scmp.eq.s32.totalorder %s15, 1
    %p38 = por %p36, %p37
    %p40 = scmp.ne.s32.totalorder %s23, %s39
    %p41 = scmp.eq.s32.totalorder %s15, 0
    %p42 = por %p40, %p41
    %s43 = ssub.s32 %s9, %s16
    %p44 = scmp.eq.s32.totalorder %s43, 0
    %s46 = sadd.s32 %s45, 1
    %s47 = scalar_select %p44, %s45, %s46
    %p50 = pneg %p44
    %p51 = scmp.eq.s32.totalorder %s9, 1
    %p52 = por %p50, %p51
    %p53 = scmp.ne.s32.totalorder %s45, %s48
    %p54 = scmp.eq.s32.totalorder %s9, 0
    %p55 = por %p53, %p54
    %p56 = scmp.ne.s32.totalorder %s45, %s48
    %p57 = scmp.eq.s32.totalorder %s14, 1
    %p58 = por %p56, %p57
    %p59 = scmp.ne.s32.totalorder %s48, %s49
    %p60 = scmp.eq.s32.totalorder %s14, 0
    %p61 = por %p59, %p60
    %p62 = scmp.ne.s32.totalorder %s48, %s49
    %p63 = scmp.eq.s32.totalorder %s15, 1
    %p64 = por %p62, %p63
    %p66 = scmp.ne.s32.totalorder %s49, %s65
    %p67 = scmp.eq.s32.totalorder %s15, 0
    %p68 = por %p66, %p67
    %s69 = ssub.s32 %s9, %s16
    %p70 = scmp.eq.s32.totalorder %s69, 0
    %s72 = sadd.s32 %s71, 1
    %s73 = scalar_select %p70, %s71, %s72
    %p76 = pneg %p70
    %p77 = scmp.eq.s32.totalorder %s9, 1
    %p78 = por %p76, %p77
    %p79 = scmp.ne.s32.totalorder %s71, %s74
    %p80 = scmp.eq.s32.totalorder %s9, 0
    %p81 = por %p79, %p80
    %p82 = scmp.ne.s32.totalorder %s71, %s74
    %p83 = scmp.eq.s32.totalorder %s14, 1
    %p84 = por %p82, %p83
    %p85 = scmp.ne.s32.totalorder %s74, %s75
    %p86 = scmp.eq.s32.totalorder %s14, 0
    %p87 = por %p85, %p86
    %p88 = scmp.ne.s32.totalorder %s74, %s75
    %p89 = scmp.eq.s32.totalorder %s15, 1
    %p90 = por %p88, %p89
    %p92 = scmp.ne.s32.totalorder %s75, %s91
    %p93 = scmp.eq.s32.totalorder %s15, 0
    %p94 = por %p92, %p93
    %s95 = ssub.s32 %s9, %s16
    %p96 = scmp.eq.s32.totalorder %s95, 0
    %s98 = sadd.s32 %s97, 1
    %s99 = scalar_select %p96, %s97, %s98
    %p102 = pneg %p96
    %p103 = scmp.eq.s32.totalorder %s9, 1
    %p104 = por %p102, %p103
    %p105 = scmp.ne.s32.totalorder %s97, %s100
    %p106 = scmp.eq.s32.totalorder %s9, 0
    %p107 = por %p105, %p106
    %p108 = scmp.ne.s32.totalorder %s97, %s100
    %p109 = scmp.eq.s32.totalorder %s14, 1
    %p110 = por %p108, %p109
    %p111 = scmp.ne.s32.totalorder %s100, %s101
    %p112 = scmp.eq.s32.totalorder %s14, 0
    %p113 = por %p111, %p112
    %p114 = scmp.ne.s32.totalorder %s100, %s101
    %p115 = scmp.eq.s32.totalorder %s15, 1
    %p116 = por %p114, %p115
    %p118 = scmp.ne.s32.totalorder %s101, %s117
    %p119 = scmp.eq.s32.totalorder %s15, 0
    %p120 = por %p118, %p119
    %p121 = scmp.le.s32.totalorder 1, %s9
    %p122 = scmp.lt.s32.totalorder %s9, 3
    %p123 = pnand %p121, %p122
    %p124 = pneg %p123
    // Predicated region
    $region9: #{mmnet_forward.2} parent=5 // pred_check
      _
    $region10: #{mmnet_forward.2} parent=5 // pred_check_branch
      %126 = sbr.rel (%p123) target = $region12
    $region11: #{mmnet_forward.2} parent=5 // pred_region
      %s127 = ssub.s32 %s9, 1
    $region12: #{mmnet_forward.2} parent=5 // pred_fallthru
      _
    %p128 = scmp.lt.s32.totalorder %s9, 2
    // Predicated region
    $region13: #{mmnet_forward.2} parent=5 // pred_check
      %p129 = pneg %p128
    $region14: #{mmnet_forward.2} parent=5 // pred_check_branch
      %131 = sbr.rel (%p129) target = $region16
    $region15: #{mmnet_forward.2} parent=5 // pred_region
      // Predicated region
      $region17: #{mmnet_forward.2} parent=15 // pred_check
        %p132 = pneg %p29
      $region18: #{mmnet_forward.2} parent=15 // pred_check_branch
        %134 = sbr.rel (%p132) target = $region20
      $region19: #{mmnet_forward.2} parent=15 // pred_region
        %p135 = scmp.lt.s32.totalorder %s9, 1
        %s136 = scalar_select %p135, %s9, 1
        %s137 = smul.addr %s136, 48
        %s138 = smul.addr %s137, 8
        %s139 = scalar_lea.vmem %s0, %s138
      $region20: #{mmnet_forward.2} parent=15 // pred_fallthru
        _
      // Predicated region
      $region21: #{mmnet_forward.2} parent=15 // pred_check
        %p140 = pneg %p55
      $region22: #{mmnet_forward.2} parent=15 // pred_check_branch
        %142 = sbr.rel (%p140) target = $region24
      $region23: #{mmnet_forward.2} parent=15 // pred_region
        %p143 = scmp.lt.s32.totalorder %s9, 1
        %s144 = scalar_select %p143, %s9, 1
        %s145 = smul.addr %s144, 2
        %s146 = smul.addr %s145, 8
        %s147 = scalar_lea.vmem %s1, %s146
      $region24: #{mmnet_forward.2} parent=15 // pred_fallthru
        _
      // Predicated region
      $region25: #{mmnet_forward.2} parent=15 // pred_check
        %p148 = pneg %p81
      $region26: #{mmnet_forward.2} parent=15 // pred_check_branch
        %150 = sbr.rel (%p148) target = $region28
      $region27: #{mmnet_forward.2} parent=15 // pred_region
        %p151 = scmp.lt.s32.totalorder %s9, 1
        %s152 = scalar_select %p151, %s9, 1
        %s153 = smul.addr %s152, 2
        %s154 = smul.addr %s153, 8
        %s155 = scalar_lea.vmem %s2, %s154
      $region28: #{mmnet_forward.2} parent=15 // pred_fallthru
        _
    $region16: #{mmnet_forward.2} parent=5 // pred_fallthru
      _
    %p156 = scmp.le.s32.totalorder 1, %s9
    %p157 = scmp.lt.s32.totalorder %s9, 3
    %p158 = pnand %p156, %p157
    %p159 = pneg %p158
    // Predicated region
    $region29: #{mmnet_forward.2} parent=5 // pred_check
      _
    $region30: #{mmnet_forward.2} parent=5 // pred_check_branch
      %161 = sbr.rel (%p158) target = $region32
    $region31: #{mmnet_forward.2} parent=5 // pred_region
      %s162 = ssub.s32 %s9, 1
      %p163 = scmp.lt.s32.totalorder %s14, 1
      %s164 = scalar_select %p163, %s14, 1
      %s165 = smul.addr %s164, 48
      %s166 = smul.addr %s165, 8
      %s167 = scalar_lea.vmem %s0, %s166
      %p168 = pneg %p35
      %p169 = pneg %p32
      %p170 = scmp.lt.s32.totalorder %s14, 1
      %s171 = scalar_select %p170, %s14, 1
      %s172 = smul.addr %s171, 2
      %s173 = smul.addr %s172, 8
      %s174 = scalar_lea.vmem %s1, %s173
      %p175 = pneg %p61
      %p176 = pneg %p58
      %p177 = scmp.lt.s32.totalorder %s14, 1
      %s178 = scalar_select %p177, %s14, 1
      %s179 = smul.addr %s178, 2
      %s180 = smul.addr %s179, 8
      %s181 = scalar_lea.vmem %s2, %s180
      %p182 = pneg %p87
      %p183 = pneg %p84
      %p184 = pneg %p113
      %p185 = pneg %p110
      %p186 = scmp.lt.s32.totalorder %s14, 1
      %s187 = scalar_select %p186, %s14, 1
      %s188 = smul.addr %s187, 6
      %s189 = smul.addr %s188, 8
      %s190 = scalar_lea.vmem %s3, %s189
      %p191 = scmp.lt.s32.totalorder %s14, 1
      %s192 = scalar_select %p191, %s14, 1
      %s193 = smul.addr %s192, 48
      %s194 = smul.addr %s193, 8
      %s195 = scalar_lea.vmem %s0, %s194
      %p196 = scmp.lt.s32.totalorder %s14, 1
      %s197 = scalar_select %p196, %s14, 1
      %s198 = smul.addr %s197, 2
      %s199 = smul.addr %s198, 8
      %s200 = scalar_lea.vmem %s1, %s199
      %p201 = scmp.lt.s32.totalorder %s14, 1
      %s202 = scalar_select %p201, %s14, 1
      %s203 = smul.addr %s202, 2
      %s204 = smul.addr %s203, 8
      %s205 = scalar_lea.vmem %s2, %s204
      %p206 = scmp.lt.s32.totalorder %s14, 1
      %s207 = scalar_select %p206, %s14, 1
      %s208 = smul.addr %s207, 6
      %s209 = smul.addr %s208, 8
      %s210 = scalar_lea.vmem %s3, %s209
      %v211 = vld [vmem:[%s200] sm:$0xff]
      %v212 = vld [vmem:[%s200 + $0x8] sm:$0xff]
      %v213 = vld [vmem:[%s195] sm:$0xff]
      %v214 = vld [vmem:[%s195 + $0x8] sm:$0xff]
      %v215 = vld [vmem:[%s195 + $0x10] sm:$0xff]
      %v216 = vld [vmem:[%s195 + $0x18] sm:$0xff]
      %v217 = vld [vmem:[%s195 + $0x20] sm:$0xff]
      %v218 = vld [vmem:[%s195 + $0x28] sm:$0xff]
      %v219 = vld [vmem:[%s195 + $0x30] sm:$0xff]
      %v220 = vld [vmem:[%s195 + $0x38] sm:$0xff]
      %v221 = vld [vmem:[%s195 + $0x40] sm:$0xff]
      %v222 = vld [vmem:[%s195 + $0x48] sm:$0xff]
      %v223 = vld [vmem:[%s195 + $0x50] sm:$0xff]
      %v224 = vld [vmem:[%s195 + $0x58] sm:$0xff]
      %vm225 = vcmask 261120
      %v227 = vsel %vm225, %v211, 0
      %v230 = vsel %vm225, %v212, 0
      %232 = vmatprep.subr.mxu0 0.0
      %233 = vmatpush1.msra.mxu0 0.0
      %234 = vmatprep.subr.mxu0 0.0
      %235 = vmatpush1.msra.mxu0 0.0
      %236 = vmatprep.subr.mxu0 0.0
      %237 = vmatpush1.msra.mxu0 0.0
      %238 = vmatprep.subr.mxu0 0.0
      %239 = vmatpush1.msra.mxu0 0.0
      %240 = vmatprep.subr.mxu0 0.0
      %241 = vmatpush1.msra.mxu0 0.0
      %242 = vmatprep.subr.mxu0 0.0
      %243 = vmatpush1.msra.mxu0 0.0
      %244 = vmatprep.subr.mxu0 0.0
      %245 = vmatpush1.msra.mxu0 0.0
      %246 = vmatprep.subr.mxu0 0.0
      %247 = vmatpush1.msra.mxu0 0.0
      %248 = vmatprep.subr.mxu0 0.0
      %249 = vmatpush1.msra.mxu0 0.0
      %250 = vmatprep.subr.mxu0 0.0
      %251 = vmatpush1.msra.mxu0 0.0
      %252 = vmatprep.subr.mxu0 0.0
      %253 = vmatpush1.msra.mxu0 0.0
      %254 = vmatprep.subr.mxu0 0.0
      %255 = vmatpush1.msra.mxu0 0.0
      %256 = vmatprep.subr.mxu0 %v223
      %257 = vmatpush1.msra.mxu0 %v222
      %258 = vmatprep.subr.mxu0 %v220
      %259 = vmatpush1.msra.mxu0 %v219
      %260 = vmatprep.subr.mxu0 %v217
      %261 = vmatpush1.msra.mxu0 %v216
      %262 = vmatprep.subr.mxu0 %v214
      %263 = vmatpush1.msra.mxu0 %v213
      %264 = vmatprep.subr.mxu0 0.0
      %265 = vmatpush2.msra.mxu0 0.0
      %266 = vmatprep.subr.mxu0 0.0
      %267 = vmatpush2.msra.mxu0 0.0
      %268 = vmatprep.subr.mxu0 0.0
      %269 = vmatpush2.msra.mxu0 0.0
      %270 = vmatprep.subr.mxu0 0.0
      %271 = vmatpush2.msra.mxu0 0.0
      %272 = vmatprep.subr.mxu0 0.0
      %273 = vmatpush2.msra.mxu0 0.0
      %274 = vmatprep.subr.mxu0 0.0
      %275 = vmatpush2.msra.mxu0 0.0
      %276 = vmatprep.subr.mxu0 0.0
      %277 = vmatpush2.msra.mxu0 0.0
      %278 = vmatprep.subr.mxu0 0.0
      %279 = vmatpush2.msra.mxu0 0.0
      %280 = vmatprep.subr.mxu0 0.0
      %281 = vmatpush2.msra.mxu0 0.0
      %282 = vmatprep.subr.mxu0 0.0
      %283 = vmatpush2.msra.mxu0 0.0
      %284 = vmatprep.subr.mxu0 0.0
      %285 = vmatpush2.msra.mxu0 0.0
      %286 = vmatprep.subr.mxu0 0.0
      %287 = vmatpush2.msra.mxu0 0.0
      %288 = vmatprep.subr.mxu0 0.0
      %289 = vmatpush2.msra.mxu0 0.0
      %290 = vmatprep.subr.mxu0 0.0
      %291 = vmatpush2.msra.mxu0 0.0
      %292 = vmatprep.subr.mxu0 0.0
      %293 = vmatpush2.msra.mxu0 0.0
      %294 = vmatprep.subr.mxu0 0.0
      %295 = vmatpush2.msra.mxu0 0.0
      %296 = vmatprep.mubr.f32.mxu0 0.0
      %297 = vmatmul.mubr.f32.gmra.mxu0 %v227
      %v298 = vpop.f32.mrf.mxu0
      %v299 = vadd.f32 0.0, %v298
      %v300 = vpop.f32.mrf.mxu0
      %v301 = vadd.f32 0.0, %v300
      %302 = vmatprep.mubr.f32.mxu0 0.0
      %303 = vmatmul.mubr.f32.gmra.mxu0 %v230
      %v304 = vpop.f32.mrf.mxu0
      %v305 = vadd.f32 0.0, %v304
      %v306 = vpop.f32.mrf.mxu0
      %v307 = vadd.f32 0.0, %v306
      %308 = vdwg.mxu0
      %309 = vmatprep.subr.mxu0 0.0
      %310 = vmatpush1.msra.mxu0 0.0
      %311 = vmatprep.subr.mxu0 0.0
      %312 = vmatpush1.msra.mxu0 0.0
      %313 = vmatprep.subr.mxu0 0.0
      %314 = vmatpush1.msra.mxu0 0.0
      %315 = vmatprep.subr.mxu0 0.0
      %316 = vmatpush1.msra.mxu0 0.0
      %317 = vmatprep.subr.mxu0 0.0
      %318 = vmatpush1.msra.mxu0 0.0
      %319 = vmatprep.subr.mxu0 0.0
      %320 = vmatpush1.msra.mxu0 0.0
      %321 = vmatprep.subr.mxu0 0.0
      %322 = vmatpush1.msra.mxu0 0.0
      %323 = vmatprep.subr.mxu0 0.0
      %324 = vmatpush1.msra.mxu0 0.0
      %325 = vmatprep.subr.mxu0 0.0
      %326 = vmatpush1.msra.mxu0 0.0
      %327 = vmatprep.subr.mxu0 0.0
      %328 = vmatpush1.msra.mxu0 0.0
      %329 = vmatprep.subr.mxu0 0.0
      %330 = vmatpush1.msra.mxu0 0.0
      %331 = vmatprep.subr.mxu0 0.0
      %332 = vmatpush1.msra.mxu0 0.0
      %333 = vmatprep.subr.mxu0 0.0
      %334 = vmatpush1.msra.mxu0 %v224
      %335 = vmatprep.subr.mxu0 0.0
      %336 = vmatpush1.msra.mxu0 %v221
      %337 = vmatprep.subr.mxu0 0.0
      %338 = vmatpush1.msra.mxu0 %v218
      %339 = vmatprep.subr.mxu0 0.0
      %340 = vmatpush1.msra.mxu0 %v215
      %341 = vmatprep.subr.mxu0 0.0
      %342 = vmatpush2.msra.mxu0 0.0
      %343 = vmatprep.subr.mxu0 0.0
      %344 = vmatpush2.msra.mxu0 0.0
      %345 = vmatprep.subr.mxu0 0.0
      %346 = vmatpush2.msra.mxu0 0.0
      %347 = vmatprep.subr.mxu0 0.0
      %348 = vmatpush2.msra.mxu0 0.0
      %349 = vmatprep.subr.mxu0 0.0
      %350 = vmatpush2.msra.mxu0 0.0
      %351 = vmatprep.subr.mxu0 0.0
      %352 = vmatpush2.msra.mxu0 0.0
      %353 = vmatprep.subr.mxu0 0.0
      %354 = vmatpush2.msra.mxu0 0.0
      %355 = vmatprep.subr.mxu0 0.0
      %356 = vmatpush2.msra.mxu0 0.0
      %357 = vmatprep.subr.mxu0 0.0
      %358 = vmatpush2.msra.mxu0 0.0
      %359 = vmatprep.subr.mxu0 0.0
      %360 = vmatpush2.msra.mxu0 0.0
      %361 = vmatprep.subr.mxu0 0.0
      %362 = vmatpush2.msra.mxu0 0.0
      %363 = vmatprep.subr.mxu0 0.0
      %364 = vmatpush2.msra.mxu0 0.0
      %365 = vmatprep.subr.mxu0 0.0
      %366 = vmatpush2.msra.mxu0 0.0
      %367 = vmatprep.subr.mxu0 0.0
      %368 = vmatpush2.msra.mxu0 0.0
      %369 = vmatprep.subr.mxu0 0.0
      %370 = vmatpush2.msra.mxu0 0.0
      %371 = vmatprep.subr.mxu0 0.0
      %372 = vmatpush2.msra.mxu0 0.0
      %373 = vmatprep.mubr.f32.mxu0 0.0
      %374 = vmatmul.mubr.f32.gmra.mxu0 %v227
      %v375 = vpop.f32.mrf.mxu0
      %v376 = vadd.f32 0.0, %v375
      %v377 = vpop.f32.mrf.mxu0
      %378 = vmatprep.mubr.f32.mxu0 0.0
      %379 = vmatmul.mubr.f32.gmra.mxu0 %v230
      %v380 = vpop.f32.mrf.mxu0
      %v381 = vadd.f32 0.0, %v380
      %v382 = vpop.f32.mrf.mxu0
      %383 = vdwg.mxu0
      %s384 = scalar_lea.vmem %s195, 96
      %v385 = vld [vmem:[%s384] sm:$0xff]
      %v386 = vld [vmem:[%s384 + $0x8] sm:$0xff]
      %v387 = vld [vmem:[%s384 + $0x10] sm:$0xff]
      %v388 = vld [vmem:[%s384 + $0x18] sm:$0xff]
      %v389 = vld [vmem:[%s384 + $0x20] sm:$0xff]
      %v390 = vld [vmem:[%s384 + $0x28] sm:$0xff]
      %v391 = vld [vmem:[%s384 + $0x30] sm:$0xff]
      %v392 = vld [vmem:[%s384 + $0x38] sm:$0xff]
      %v393 = vld [vmem:[%s384 + $0x40] sm:$0xff]
      %v394 = vld [vmem:[%s384 + $0x48] sm:$0xff]
      %v395 = vld [vmem:[%s384 + $0x50] sm:$0xff]
      %v396 = vld [vmem:[%s384 + $0x58] sm:$0xff]
      %397 = vmatprep.subr.mxu0 0.0
      %398 = vmatpush1.msra.mxu0 0.0
      %399 = vmatprep.subr.mxu0 0.0
      %400 = vmatpush1.msra.mxu0 0.0
      %401 = vmatprep.subr.mxu0 0.0
      %402 = vmatpush1.msra.mxu0 0.0
      %403 = vmatprep.subr.mxu0 0.0
      %404 = vmatpush1.msra.mxu0 0.0
      %405 = vmatprep.subr.mxu0 0.0
      %406 = vmatpush1.msra.mxu0 0.0
      %407 = vmatprep.subr.mxu0 0.0
      %408 = vmatpush1.msra.mxu0 0.0
      %409 = vmatprep.subr.mxu0 0.0
      %410 = vmatpush1.msra.mxu0 0.0
      %411 = vmatprep.subr.mxu0 0.0
      %412 = vmatpush1.msra.mxu0 0.0
      %413 = vmatprep.subr.mxu0 0.0
      %414 = vmatpush1.msra.mxu0 0.0
      %415 = vmatprep.subr.mxu0 0.0
      %416 = vmatpush1.msra.mxu0 0.0
      %417 = vmatprep.subr.mxu0 0.0
      %418 = vmatpush1.msra.mxu0 0.0
      %419 = vmatprep.subr.mxu0 0.0
      %420 = vmatpush1.msra.mxu0 0.0
      %421 = vmatprep.subr.mxu0 %v395
      %422 = vmatpush1.msra.mxu0 %v394
      %423 = vmatprep.subr.mxu0 %v392
      %424 = vmatpush1.msra.mxu0 %v391
      %425 = vmatprep.subr.mxu0 %v389
      %426 = vmatpush1.msra.mxu0 %v388
      %427 = vmatprep.subr.mxu0 %v386
      %428 = vmatpush1.msra.mxu0 %v385
      %429 = vmatprep.subr.mxu0 0.0
      %430 = vmatpush2.msra.mxu0 0.0
      %431 = vmatprep.subr.mxu0 0.0
      %432 = vmatpush2.msra.mxu0 0.0
      %433 = vmatprep.subr.mxu0 0.0
      %434 = vmatpush2.msra.mxu0 0.0
      %435 = vmatprep.subr.mxu0 0.0
      %436 = vmatpush2.msra.mxu0 0.0
      %437 = vmatprep.subr.mxu0 0.0
      %438 = vmatpush2.msra.mxu0 0.0
      %439 = vmatprep.subr.mxu0 0.0
      %440 = vmatpush2.msra.mxu0 0.0
      %441 = vmatprep.subr.mxu0 0.0
      %442 = vmatpush2.msra.mxu0 0.0
      %443 = vmatprep.subr.mxu0 0.0
      %444 = vmatpush2.msra.mxu0 0.0
      %445 = vmatprep.subr.mxu0 0.0
      %446 = vmatpush2.msra.mxu0 0.0
      %447 = vmatprep.subr.mxu0 0.0
      %448 = vmatpush2.msra.mxu0 0.0
      %449 = vmatprep.subr.mxu0 0.0
      %450 = vmatpush2.msra.mxu0 0.0
      %451 = vmatprep.subr.mxu0 0.0
      %452 = vmatpush2.msra.mxu0 0.0
      %453 = vmatprep.subr.mxu0 0.0
      %454 = vmatpush2.msra.mxu0 0.0
      %455 = vmatprep.subr.mxu0 0.0
      %456 = vmatpush2.msra.mxu0 0.0
      %457 = vmatprep.subr.mxu0 0.0
      %458 = vmatpush2.msra.mxu0 0.0
      %459 = vmatprep.subr.mxu0 0.0
      %460 = vmatpush2.msra.mxu0 0.0
      %461 = vmatprep.mubr.f32.mxu0 0.0
      %462 = vmatmul.mubr.f32.gmra.mxu0 %v227
      %v463 = vpop.f32.mrf.mxu0
      %v464 = vadd.f32 0.0, %v463
      %v465 = vpop.f32.mrf.mxu0
      %v466 = vadd.f32 0.0, %v465
      %467 = vmatprep.mubr.f32.mxu0 0.0
      %468 = vmatmul.mubr.f32.gmra.mxu0 %v230
      %v469 = vpop.f32.mrf.mxu0
      %v470 = vadd.f32 0.0, %v469
      %v471 = vpop.f32.mrf.mxu0
      %v472 = vadd.f32 0.0, %v471
      %473 = vdwg.mxu0
      %474 = vmatprep.subr.mxu0 0.0
      %475 = vmatpush1.msra.mxu0 0.0
      %476 = vmatprep.subr.mxu0 0.0
      %477 = vmatpush1.msra.mxu0 0.0
      %478 = vmatprep.subr.mxu0 0.0
      %479 = vmatpush1.msra.mxu0 0.0
      %480 = vmatprep.subr.mxu0 0.0
      %481 = vmatpush1.msra.mxu0 0.0
      %482 = vmatprep.subr.mxu0 0.0
      %483 = vmatpush1.msra.mxu0 0.0
      %484 = vmatprep.subr.mxu0 0.0
      %485 = vmatpush1.msra.mxu0 0.0
      %486 = vmatprep.subr.mxu0 0.0
      %487 = vmatpush1.msra.mxu0 0.0
      %488 = vmatprep.subr.mxu0 0.0
      %489 = vmatpush1.msra.mxu0 0.0
      %490 = vmatprep.subr.mxu0 0.0
      %491 = vmatpush1.msra.mxu0 0.0
      %492 = vmatprep.subr.mxu0 0.0
      %493 = vmatpush1.msra.mxu0 0.0
      %494 = vmatprep.subr.mxu0 0.0
      %495 = vmatpush1.msra.mxu0 0.0
      %496 = vmatprep.subr.mxu0 0.0
      %497 = vmatpush1.msra.mxu0 0.0
      %498 = vmatprep.subr.mxu0 0.0
      %499 = vmatpush1.msra.mxu0 %v396
      %500 = vmatprep.subr.mxu0 0.0
      %501 = vmatpush1.msra.mxu0 %v393
      %502 = vmatprep.subr.mxu0 0.0
      %503 = vmatpush1.msra.mxu0 %v390
      %504 = vmatprep.subr.mxu0 0.0
      %505 = vmatpush1.msra.mxu0 %v387
      %506 = vmatprep.subr.mxu0 0.0
      %507 = vmatpush2.msra.mxu0 0.0
      %508 = vmatprep.subr.mxu0 0.0
      %509 = vmatpush2.msra.mxu0 0.0
      %510 = vmatprep.subr.mxu0 0.0
      %511 = vmatpush2.msra.mxu0 0.0
      %512 = vmatprep.subr.mxu0 0.0
      %513 = vmatpush2.msra.mxu0 0.0
      %514 = vmatprep.subr.mxu0 0.0
      %515 = vmatpush2.msra.mxu0 0.0
      %516 = vmatprep.subr.mxu0 0.0
      %517 = vmatpush2.msra.mxu0 0.0
      %518 = vmatprep.subr.mxu0 0.0
      %519 = vmatpush2.msra.mxu0 0.0
      %520 = vmatprep.subr.mxu0 0.0
      %521 = vmatpush2.msra.mxu0 0.0
      %522 = vmatprep.subr.mxu0 0.0
      %523 = vmatpush2.msra.mxu0 0.0
      %524 = vmatprep.subr.mxu0 0.0
      %525 = vmatpush2.msra.mxu0 0.0
      %526 = vmatprep.subr.mxu0 0.0
      %527 = vmatpush2.msra.mxu0 0.0
      %528 = vmatprep.subr.mxu0 0.0
      %529 = vmatpush2.msra.mxu0 0.0
      %530 = vmatprep.subr.mxu0 0.0
      %531 = vmatpush2.msra.mxu0 0.0
      %532 = vmatprep.subr.mxu0 0.0
      %533 = vmatpush2.msra.mxu0 0.0
      %534 = vmatprep.subr.mxu0 0.0
      %535 = vmatpush2.msra.mxu0 0.0
      %536 = vmatprep.subr.mxu0 0.0
      %537 = vmatpush2.msra.mxu0 0.0
      %538 = vmatprep.mubr.f32.mxu0 0.0
      %539 = vmatmul.mubr.f32.gmra.mxu0 %v227
      %v540 = vpop.f32.mrf.mxu0
      %v541 = vadd.f32 0.0, %v540
      %v542 = vpop.f32.mrf.mxu0
      %543 = vmatprep.mubr.f32.mxu0 0.0
      %544 = vmatmul.mubr.f32.gmra.mxu0 %v230
      %v545 = vpop.f32.mrf.mxu0
      %v546 = vadd.f32 0.0, %v545
      %v547 = vpop.f32.mrf.mxu0
      %548 = vdwg.mxu0
      %v549 = vmax.f32 %v299, %v464
      %v550 = vmax.f32 %v301, %v466
      %v551 = vmax.f32 %v376, %v541
      %v552 = vmax.f32 %v305, %v470
      %v553 = vmax.f32 %v307, %v472
      %v554 = vmax.f32 %v381, %v546
      %s555 = scalar_lea.vmem %s195, 192
      %v556 = vld [vmem:[%s555] sm:$0xff]
      %v557 = vld [vmem:[%s555 + $0x8] sm:$0xff]
      %v558 = vld [vmem:[%s555 + $0x10] sm:$0xff]
      %v559 = vld [vmem:[%s555 + $0x18] sm:$0xff]
      %v560 = vld [vmem:[%s555 + $0x20] sm:$0xff]
      %v561 = vld [vmem:[%s555 + $0x28] sm:$0xff]
      %v562 = vld [vmem:[%s555 + $0x30] sm:$0xff]
      %v563 = vld [vmem:[%s555 + $0x38] sm:$0xff]
      %v564 = vld [vmem:[%s555 + $0x40] sm:$0xff]
      %v565 = vld [vmem:[%s555 + $0x48] sm:$0xff]
      %v566 = vld [vmem:[%s555 + $0x50] sm:$0xff]
      %v567 = vld [vmem:[%s555 + $0x58] sm:$0xff]
      %568 = vmatprep.subr.mxu0 0.0
      %569 = vmatpush1.msra.mxu0 0.0
      %570 = vmatprep.subr.mxu0 0.0
      %571 = vmatpush1.msra.mxu0 0.0
      %572 = vmatprep.subr.mxu0 0.0
      %573 = vmatpush1.msra.mxu0 0.0
      %574 = vmatprep.subr.mxu0 0.0
      %575 = vmatpush1.msra.mxu0 0.0
      %576 = vmatprep.subr.mxu0 0.0
      %577 = vmatpush1.msra.mxu0 0.0
      %578 = vmatprep.subr.mxu0 0.0
      %579 = vmatpush1.msra.mxu0 0.0
      %580 = vmatprep.subr.mxu0 0.0
      %581 = vmatpush1.msra.mxu0 0.0
      %582 = vmatprep.subr.mxu0 0.0
      %583 = vmatpush1.msra.mxu0 0.0
      %584 = vmatprep.subr.mxu0 0.0
      %585 = vmatpush1.msra.mxu0 0.0
      %586 = vmatprep.subr.mxu0 0.0
      %587 = vmatpush1.msra.mxu0 0.0
      %588 = vmatprep.subr.mxu0 0.0
      %589 = vmatpush1.msra.mxu0 0.0
      %590 = vmatprep.subr.mxu0 0.0
      %591 = vmatpush1.msra.mxu0 0.0
      %592 = vmatprep.subr.mxu0 %v566
      %593 = vmatpush1.msra.mxu0 %v565
      %594 = vmatprep.subr.mxu0 %v563
      %595 = vmatpush1.msra.mxu0 %v562
      %596 = vmatprep.subr.mxu0 %v560
      %597 = vmatpush1.msra.mxu0 %v559
      %598 = vmatprep.subr.mxu0 %v557
      %599 = vmatpush1.msra.mxu0 %v556
      %600 = vmatprep.subr.mxu0 0.0
      %601 = vmatpush2.msra.mxu0 0.0
      %602 = vmatprep.subr.mxu0 0.0
      %603 = vmatpush2.msra.mxu0 0.0
      %604 = vmatprep.subr.mxu0 0.0
      %605 = vmatpush2.msra.mxu0 0.0
      %606 = vmatprep.subr.mxu0 0.0
      %607 = vmatpush2.msra.mxu0 0.0
      %608 = vmatprep.subr.mxu0 0.0
      %609 = vmatpush2.msra.mxu0 0.0
      %610 = vmatprep.subr.mxu0 0.0
      %611 = vmatpush2.msra.mxu0 0.0
      %612 = vmatprep.subr.mxu0 0.0
      %613 = vmatpush2.msra.mxu0 0.0
      %614 = vmatprep.subr.mxu0 0.0
      %615 = vmatpush2.msra.mxu0 0.0
      %616 = vmatprep.subr.mxu0 0.0
      %617 = vmatpush2.msra.mxu0 0.0
      %618 = vmatprep.subr.mxu0 0.0
      %619 = vmatpush2.msra.mxu0 0.0
      %620 = vmatprep.subr.mxu0 0.0
      %621 = vmatpush2.msra.mxu0 0.0
      %622 = vmatprep.subr.mxu0 0.0
      %623 = vmatpush2.msra.mxu0 0.0
      %624 = vmatprep.subr.mxu0 0.0
      %625 = vmatpush2.msra.mxu0 0.0
      %626 = vmatprep.subr.mxu0 0.0
      %627 = vmatpush2.msra.mxu0 0.0
      %628 = vmatprep.subr.mxu0 0.0
      %629 = vmatpush2.msra.mxu0 0.0
      %630 = vmatprep.subr.mxu0 0.0
      %631 = vmatpush2.msra.mxu0 0.0
      %632 = vmatprep.mubr.f32.mxu0 0.0
      %633 = vmatmul.mubr.f32.gmra.mxu0 %v227
      %v634 = vpop.f32.mrf.mxu0
      %v635 = vadd.f32 0.0, %v634
      %v636 = vpop.f32.mrf.mxu0
      %v637 = vadd.f32 0.0, %v636
      %638 = vmatprep.mubr.f32.mxu0 0.0
      %639 = vmatmul.mubr.f32.gmra.mxu0 %v230
      %v640 = vpop.f32.mrf.mxu0
      %v641 = vadd.f32 0.0, %v640
      %v642 = vpop.f32.mrf.mxu0
      %v643 = vadd.f32 0.0, %v642
      %644 = vdwg.mxu0
      %645 = vmatprep.subr.mxu0 0.0
      %646 = vmatpush1.msra.mxu0 0.0
      %647 = vmatprep.subr.mxu0 0.0
      %648 = vmatpush1.msra.mxu0 0.0
      %649 = vmatprep.subr.mxu0 0.0
      %650 = vmatpush1.msra.mxu0 0.0
      %651 = vmatprep.subr.mxu0 0.0
      %652 = vmatpush1.msra.mxu0 0.0
      %653 = vmatprep.subr.mxu0 0.0
      %654 = vmatpush1.msra.mxu0 0.0
      %655 = vmatprep.subr.mxu0 0.0
      %656 = vmatpush1.msra.mxu0 0.0
      %657 = vmatprep.subr.mxu0 0.0
      %658 = vmatpush1.msra.mxu0 0.0
      %659 = vmatprep.subr.mxu0 0.0
      %660 = vmatpush1.msra.mxu0 0.0
      %661 = vmatprep.subr.mxu0 0.0
      %662 = vmatpush1.msra.mxu0 0.0
      %663 = vmatprep.subr.mxu0 0.0
      %664 = vmatpush1.msra.mxu0 0.0
      %665 = vmatprep.subr.mxu0 0.0
      %666 = vmatpush1.msra.mxu0 0.0
      %667 = vmatprep.subr.mxu0 0.0
      %668 = vmatpush1.msra.mxu0 0.0
      %669 = vmatprep.subr.mxu0 0.0
      %670 = vmatpush1.msra.mxu0 %v567
      %671 = vmatprep.subr.mxu0 0.0
      %672 = vmatpush1.msra.mxu0 %v564
      %673 = vmatprep.subr.mxu0 0.0
      %674 = vmatpush1.msra.mxu0 %v561
      %675 = vmatprep.subr.mxu0 0.0
      %676 = vmatpush1.msra.mxu0 %v558
      %677 = vmatprep.subr.mxu0 0.0
      %678 = vmatpush2.msra.mxu0 0.0
      %679 = vmatprep.subr.mxu0 0.0
      %680 = vmatpush2.msra.mxu0 0.0
      %681 = vmatprep.subr.mxu0 0.0
      %682 = vmatpush2.msra.mxu0 0.0
      %683 = vmatprep.subr.mxu0 0.0
      %684 = vmatpush2.msra.mxu0 0.0
      %685 = vmatprep.subr.mxu0 0.0
      %686 = vmatpush2.msra.mxu0 0.0
      %687 = vmatprep.subr.mxu0 0.0
      %688 = vmatpush2.msra.mxu0 0.0
      %689 = vmatprep.subr.mxu0 0.0
      %690 = vmatpush2.msra.mxu0 0.0
      %691 = vmatprep.subr.mxu0 0.0
      %692 = vmatpush2.msra.mxu0 0.0
      %693 = vmatprep.subr.mxu0 0.0
      %694 = vmatpush2.msra.mxu0 0.0
      %695 = vmatprep.subr.mxu0 0.0
      %696 = vmatpush2.msra.mxu0 0.0
      %697 = vmatprep.subr.mxu0 0.0
      %698 = vmatpush2.msra.mxu0 0.0
      %699 = vmatprep.subr.mxu0 0.0
      %700 = vmatpush2.msra.mxu0 0.0
      %701 = vmatprep.subr.mxu0 0.0
      %702 = vmatpush2.msra.mxu0 0.0
      %703 = vmatprep.subr.mxu0 0.0
      %704 = vmatpush2.msra.mxu0 0.0
      %705 = vmatprep.subr.mxu0 0.0
      %706 = vmatpush2.msra.mxu0 0.0
      %707 = vmatprep.subr.mxu0 0.0
      %708 = vmatpush2.msra.mxu0 0.0
      %709 = vmatprep.mubr.f32.mxu0 0.0
      %710 = vmatmul.mubr.f32.gmra.mxu0 %v227
      %v711 = vpop.f32.mrf.mxu0
      %v712 = vadd.f32 0.0, %v711
      %v713 = vpop.f32.mrf.mxu0
      %714 = vmatprep.mubr.f32.mxu0 0.0
      %715 = vmatmul.mubr.f32.gmra.mxu0 %v230
      %v716 = vpop.f32.mrf.mxu0
      %v717 = vadd.f32 0.0, %v716
      %v718 = vpop.f32.mrf.mxu0
      %719 = vdwg.mxu0
      %v720 = vmax.f32 %v549, %v635
      %v721 = vmax.f32 %v550, %v637
      %v722 = vmax.f32 %v551, %v712
      %v723 = vmax.f32 %v552, %v641
      %v724 = vmax.f32 %v553, %v643
      %v725 = vmax.f32 %v554, %v717
      %s726 = scalar_lea.vmem %s195, 288
      %v727 = vld [vmem:[%s726] sm:$0xff]
      %v728 = vld [vmem:[%s726 + $0x8] sm:$0xff]
      %v729 = vld [vmem:[%s726 + $0x10] sm:$0xff]
      %v730 = vld [vmem:[%s726 + $0x18] sm:$0xff]
      %v731 = vld [vmem:[%s726 + $0x20] sm:$0xff]
      %v732 = vld [vmem:[%s726 + $0x28] sm:$0xff]
      %v733 = vld [vmem:[%s726 + $0x30] sm:$0xff]
      %v734 = vld [vmem:[%s726 + $0x38] sm:$0xff]
      %v735 = vld [vmem:[%s726 + $0x40] sm:$0xff]
      %v736 = vld [vmem:[%s726 + $0x48] sm:$0xff]
      %v737 = vld [vmem:[%s726 + $0x50] sm:$0xff]
      %v738 = vld [vmem:[%s726 + $0x58] sm:$0xff]
      %739 = vmatprep.subr.mxu0 0.0
      %740 = vmatpush1.msra.mxu0 0.0
      %741 = vmatprep.subr.mxu0 0.0
      %742 = vmatpush1.msra.mxu0 0.0
      %743 = vmatprep.subr.mxu0 0.0
      %744 = vmatpush1.msra.mxu0 0.0
      %745 = vmatprep.subr.mxu0 0.0
      %746 = vmatpush1.msra.mxu0 0.0
      %747 = vmatprep.subr.mxu0 0.0
      %748 = vmatpush1.msra.mxu0 0.0
      %749 = vmatprep.subr.mxu0 0.0
      %750 = vmatpush1.msra.mxu0 0.0
      %751 = vmatprep.subr.mxu0 0.0
      %752 = vmatpush1.msra.mxu0 0.0
      %753 = vmatprep.subr.mxu0 0.0
      %754 = vmatpush1.msra.mxu0 0.0
      %755 = vmatprep.subr.mxu0 0.0
      %756 = vmatpush1.msra.mxu0 0.0
      %757 = vmatprep.subr.mxu0 0.0
      %758 = vmatpush1.msra.mxu0 0.0
      %759 = vmatprep.subr.mxu0 0.0
      %760 = vmatpush1.msra.mxu0 0.0
      %761 = vmatprep.subr.mxu0 0.0
      %762 = vmatpush1.msra.mxu0 0.0
      %763 = vmatprep.subr.mxu0 %v737
      %764 = vmatpush1.msra.mxu0 %v736
      %765 = vmatprep.subr.mxu0 %v734
      %766 = vmatpush1.msra.mxu0 %v733
      %767 = vmatprep.subr.mxu0 %v731
      %768 = vmatpush1.msra.mxu0 %v730
      %769 = vmatprep.subr.mxu0 %v728
      %770 = vmatpush1.msra.mxu0 %v727
      %771 = vmatprep.subr.mxu0 0.0
      %772 = vmatpush2.msra.mxu0 0.0
      %773 = vmatprep.subr.mxu0 0.0
      %774 = vmatpush2.msra.mxu0 0.0
      %775 = vmatprep.subr.mxu0 0.0
      %776 = vmatpush2.msra.mxu0 0.0
      %777 = vmatprep.subr.mxu0 0.0
      %778 = vmatpush2.msra.mxu0 0.0
      %779 = vmatprep.subr.mxu0 0.0
      %780 = vmatpush2.msra.mxu0 0.0
      %781 = vmatprep.subr.mxu0 0.0
      %782 = vmatpush2.msra.mxu0 0.0
      %783 = vmatprep.subr.mxu0 0.0
      %784 = vmatpush2.msra.mxu0 0.0
      %785 = vmatprep.subr.mxu0 0.0
      %786 = vmatpush2.msra.mxu0 0.0
      %787 = vmatprep.subr.mxu0 0.0
      %788 = vmatpush2.msra.mxu0 0.0
      %789 = vmatprep.subr.mxu0 0.0
      %790 = vmatpush2.msra.mxu0 0.0
      %791 = vmatprep.subr.mxu0 0.0
      %792 = vmatpush2.msra.mxu0 0.0
      %793 = vmatprep.subr.mxu0 0.0
      %794 = vmatpush2.msra.mxu0 0.0
      %795 = vmatprep.subr.mxu0 0.0
      %796 = vmatpush2.msra.mxu0 0.0
      %797 = vmatprep.subr.mxu0 0.0
      %798 = vmatpush2.msra.mxu0 0.0
      %799 = vmatprep.subr.mxu0 0.0
      %800 = vmatpush2.msra.mxu0 0.0
      %801 = vmatprep.subr.mxu0 0.0
      %802 = vmatpush2.msra.mxu0 0.0
      %803 = vmatprep.mubr.f32.mxu0 0.0
      %804 = vmatmul.mubr.f32.gmra.mxu0 %v227
      %v805 = vpop.f32.mrf.mxu0
      %v806 = vadd.f32 0.0, %v805
      %v807 = vpop.f32.mrf.mxu0
      %v808 = vadd.f32 0.0, %v807
      %809 = vmatprep.mubr.f32.mxu0 0.0
      %810 = vmatmul.mubr.f32.gmra.mxu0 %v230
      %v811 = vpop.f32.mrf.mxu0
      %v812 = vadd.f32 0.0, %v811
      %v813 = vpop.f32.mrf.mxu0
      %v814 = vadd.f32 0.0, %v813
      %815 = vdwg.mxu0
      %816 = vmatprep.subr.mxu0 0.0
      %817 = vmatpush1.msra.mxu0 0.0
      %818 = vmatprep.subr.mxu0 0.0
      %819 = vmatpush1.msra.mxu0 0.0
      %820 = vmatprep.subr.mxu0 0.0
      %821 = vmatpush1.msra.mxu0 0.0
      %822 = vmatprep.subr.mxu0 0.0
      %823 = vmatpush1.msra.mxu0 0.0
      %824 = vmatprep.subr.mxu0 0.0
      %825 = vmatpush1.msra.mxu0 0.0
      %826 = vmatprep.subr.mxu0 0.0
      %827 = vmatpush1.msra.mxu0 0.0
      %828 = vmatprep.subr.mxu0 0.0
      %829 = vmatpush1.msra.mxu0 0.0
      %830 = vmatprep.subr.mxu0 0.0
      %831 = vmatpush1.msra.mxu0 0.0
      %832 = vmatprep.subr.mxu0 0.0
      %833 = vmatpush1.msra.mxu0 0.0
      %834 = vmatprep.subr.mxu0 0.0
      %835 = vmatpush1.msra.mxu0 0.0
      %836 = vmatprep.subr.mxu0 0.0
      %837 = vmatpush1.msra.mxu0 0.0
      %838 = vmatprep.subr.mxu0 0.0
      %839 = vmatpush1.msra.mxu0 0.0
      %840 = vmatprep.subr.mxu0 0.0
      %841 = vmatpush1.msra.mxu0 %v738
      %842 = vmatprep.subr.mxu0 0.0
      %843 = vmatpush1.msra.mxu0 %v735
      %844 = vmatprep.subr.mxu0 0.0
      %845 = vmatpush1.msra.mxu0 %v732
      %846 = vmatprep.subr.mxu0 0.0
      %847 = vmatpush1.msra.mxu0 %v729
      %848 = vmatprep.subr.mxu0 0.0
      %849 = vmatpush2.msra.mxu0 0.0
      %850 = vmatprep.subr.mxu0 0.0
      %851 = vmatpush2.msra.mxu0 0.0
      %852 = vmatprep.subr.mxu0 0.0
      %853 = vmatpush2.msra.mxu0 0.0
      %854 = vmatprep.subr.mxu0 0.0
      %855 = vmatpush2.msra.mxu0 0.0
      %856 = vmatprep.subr.mxu0 0.0
      %857 = vmatpush2.msra.mxu0 0.0
      %858 = vmatprep.subr.mxu0 0.0
      %859 = vmatpush2.msra.mxu0 0.0
      %860 = vmatprep.subr.mxu0 0.0
      %861 = vmatpush2.msra.mxu0 0.0
      %862 = vmatprep.subr.mxu0 0.0
      %863 = vmatpush2.msra.mxu0 0.0
      %864 = vmatprep.subr.mxu0 0.0
      %865 = vmatpush2.msra.mxu0 0.0
      %866 = vmatprep.subr.mxu0 0.0
      %867 = vmatpush2.msra.mxu0 0.0
      %868 = vmatprep.subr.mxu0 0.0
      %869 = vmatpush2.msra.mxu0 0.0
      %870 = vmatprep.subr.mxu0 0.0
      %871 = vmatpush2.msra.mxu0 0.0
      %872 = vmatprep.subr.mxu0 0.0
      %873 = vmatpush2.msra.mxu0 0.0
      %874 = vmatprep.subr.mxu0 0.0
      %875 = vmatpush2.msra.mxu0 0.0
      %876 = vmatprep.subr.mxu0 0.0
      %877 = vmatpush2.msra.mxu0 0.0
      %878 = vmatprep.subr.mxu0 0.0
      %879 = vmatpush2.msra.mxu0 0.0
      %880 = vmatprep.mubr.f32.mxu0 0.0
      %881 = vmatmul.mubr.f32.gmra.mxu0 %v227
      %v882 = vpop.f32.mrf.mxu0
      %v883 = vadd.f32 0.0, %v882
      %v884 = vpop.f32.mrf.mxu0
      %885 = vmatprep.mubr.f32.mxu0 0.0
      %886 = vmatmul.mubr.f32.gmra.mxu0 %v230
      %v887 = vpop.f32.mrf.mxu0
      %v888 = vadd.f32 0.0, %v887
      %v889 = vpop.f32.mrf.mxu0
      %890 = vdwg.mxu0
      %v891 = vmax.f32 %v720, %v806
      %v892 = vmax.f32 %v721, %v808
      %v893 = vmax.f32 %v722, %v883
      %v894 = vmax.f32 %v723, %v812
      %v895 = vmax.f32 %v724, %v814
      %v896 = vmax.f32 %v725, %v888
      %v897 = vld [vmem:[%s205] sm:$0xff]
      %v898 = vld [vmem:[%s205 + $0x8] sm:$0xff]
      %900 = vset.pattern.permute.xlu0 0
      %901 = vperm.xlu0 %900, %v897
      %v902 = vpop.permute.xlu0 %901
      %905 = vset.pattern.permute.xlu0 0
      %906 = vperm.xlu0 %905, %v898
      %v907 = vpop.permute.xlu0 %906
      %v909 = vadd.f32 %v891, %v902
      %v910 = vadd.f32 %v892, %v902
      %v911 = vadd.f32 %v893, %v902
      %v912 = vadd.f32 %v894, %v907
      %v913 = vadd.f32 %v895, %v907
      %v914 = vadd.f32 %v896, %v907
      %v915 = vmax.f32 %v909, 0.0
      %v916 = vmax.f32 %v910, 0.0
      %v917 = vmax.f32 %v911, 0.0
      %v918 = vmax.f32 %v912, 0.0
      %v919 = vmax.f32 %v913, 0.0
      %v920 = vmax.f32 %v914, 0.0
      %921 = vst [vmem:[%s210] sm:$0xff] %v915
      %922 = vst [vmem:[%s210 + $0x8] sm:$0xff] %v916
      %923 = vst.msk [vmem:[%s210 + $0x10] sm:$0xff] %vm225, %v917
      %924 = vst [vmem:[%s210 + $0x18] sm:$0xff] %v918
      %925 = vst [vmem:[%s210 + $0x20] sm:$0xff] %v919
      %926 = vst.msk [vmem:[%s210 + $0x28] sm:$0xff] %vm225, %v920
      %p927 = scmp.lt.s32.totalorder %s14, 1
      %s928 = scalar_select %p927, %s14, 1
      %s929 = smul.addr %s928, 6
      %s930 = smul.addr %s929, 8
      %s931 = scalar_lea.vmem %s3, %s930
      // Predicated region
      $region33: #{mmnet_forward.2} parent=31 // pred_check
        %p932 = pneg %p110
      $region34: #{mmnet_forward.2} parent=31 // pred_check_branch
        %934 = sbr.rel (%p932) target = $region36
      $region35: #{mmnet_forward.2} parent=31 // pred_region
        _
      $region36: #{mmnet_forward.2} parent=31 // pred_fallthru
        _
    $region32: #{mmnet_forward.2} parent=5 // pred_fallthru
      _
    %p935 = scmp.le.s32.totalorder 2, %s9
    // Predicated region
    $region37: #{mmnet_forward.2} parent=5 // pred_check
      %p936 = pneg %p935
    $region38: #{mmnet_forward.2} parent=5 // pred_check_branch
      %938 = sbr.rel (%p936) target = $region40
    $region39: #{mmnet_forward.2} parent=5 // pred_region
      %s939 = ssub.s32 %s9, 2
      // Predicated region
      $region41: #{mmnet_forward.2} parent=39 // pred_check
        %p940 = pneg %p116
      $region42: #{mmnet_forward.2} parent=39 // pred_check_branch
        %942 = sbr.rel (%p940) target = $region44
      $region43: #{mmnet_forward.2} parent=39 // pred_region
        %p943 = scmp.lt.s32.totalorder %s15, 1
        %s944 = scalar_select %p943, %s15, 1
        %s945 = smul.addr %s944, 6
        %s946 = smul.addr %s945, 8
        %s947 = scalar_lea.vmem %s3, %s946
      $region44: #{mmnet_forward.2} parent=39 // pred_fallthru
        _
    $region40: #{mmnet_forward.2} parent=5 // pred_fallthru
      _
  $region6: #{mmnet_forward.2} parent=0 // loop_footer
    %s13 = sadd.s32 1, %s9
  $region7: #{mmnet_forward.2} parent=0 // loop_footer_branch
    %8 = sbr.rel target = $region3
  $region8: #{mmnet_forward.2} parent=0 // loop_exit
    _

// kernel: mmnet_forward.3
$region0: #{mmnet_forward.3}
  #allocation0 [shape = 'u32[]', space=smem, size = 0x4, offset = 0x4, fixed_abs, tag = 'smem constant byte address 0x4 - core index']
  #allocation1 [shape = 'u32[144,128]{1,0:T(1,128)}', space=vmem, size = 0x12000, scoped, tag = 'internal scratch']
  #allocation2 [shape = 'f32[2,32,20]{2,1,0:T(8,128)}', space=vmem, size = 0x8000, scoped, tag = 'scratch operand']
  %s0 = inlined_call_operand.vmem [shape: f32[2,4,32,256], index: 0, kind: input, shape index: {}]
  %s1 = inlined_call_operand.vmem [shape: f32[2,256,20], index: 1, kind: input, shape index: {}]
  %s2 = inlined_call_operand.vmem [shape: f32[2,1,20], index: 2, kind: input, shape index: {}]
  %s3 = inlined_call_operand.vmem [shape: f32[2,16,20,128], index: 3, kind: input, shape index: {}]
  %s4 = inlined_call_operand.vmem [shape: f32[2,1,128], index: 4, kind: input, shape index: {}]
  %s5 = inlined_call_operand.vmem [shape: f32[2,128,128], index: 5, kind: input, shape index: {}]
  %s6 = inlined_call_operand.vmem [shape: f32[2,1,128], index: 6, kind: input, shape index: {}]
  %s7 = inlined_call_operand.vmem [shape: f32[128,128], index: 7, kind: input, shape index: {}]
  %s8 = inlined_call_operand.vmem [shape: f32[1,128], index: 8, kind: input, shape index: {}]
  %s9 = inlined_call_operand.vmem [shape: f32[3,2,128], index: 9, kind: output, shape index: {}]
  %s10 = sld [smem:[#allocation0]]
  $region46: #{mmnet_forward.3} parent=0
    _
  %s12 = ssub.s32 1, %s10
  %s13 = scalar_select 0, %s12, %s10
  // Predicated region
  $region2: #{mmnet_forward.3} parent=0 // pred_check
    _
  $region3: #{mmnet_forward.3} parent=0 // pred_check_branch
    %15 = sbr.rel (0) target = $region5
  $region4: #{mmnet_forward.3} parent=0 // pred_region
    _
  $region5: #{mmnet_forward.3} parent=0 // pred_fallthru
    _
  // Predicated region
  $region6: #{mmnet_forward.3} parent=0 // pred_check
    _
  $region7: #{mmnet_forward.3} parent=0 // pred_check_branch
    %17 = sbr.rel (0) target = $region9
  $region8: #{mmnet_forward.3} parent=0 // pred_region
    _
  $region9: #{mmnet_forward.3} parent=0 // pred_fallthru
    _
  // Predicated region
  $region10: #{mmnet_forward.3} parent=0 // pred_check
    _
  $region11: #{mmnet_forward.3} parent=0 // pred_check_branch
    %19 = sbr.rel (0) target = $region13
  $region12: #{mmnet_forward.3} parent=0 // pred_region
    _
  $region13: #{mmnet_forward.3} parent=0 // pred_fallthru
    _
  // Predicated region
  $region14: #{mmnet_forward.3} parent=0 // pred_check
    _
  $region15: #{mmnet_forward.3} parent=0 // pred_check_branch
    %21 = sbr.rel (0) target = $region17
  $region16: #{mmnet_forward.3} parent=0 // pred_region
    _
  $region17: #{mmnet_forward.3} parent=0 // pred_fallthru
    _
  // Predicated region
  $region18: #{mmnet_forward.3} parent=0 // pred_check
    _
  $region19: #{mmnet_forward.3} parent=0 // pred_check_branch
    %23 = sbr.rel (0) target = $region21
  $region20: #{mmnet_forward.3} parent=0 // pred_region
    _
  $region21: #{mmnet_forward.3} parent=0 // pred_fallthru
    _
  // Predicated region
  $region22: #{mmnet_forward.3} parent=0 // pred_check
    _
  $region23: #{mmnet_forward.3} parent=0 // pred_check_branch
    %25 = sbr.rel (0) target = $region25
  $region24: #{mmnet_forward.3} parent=0 // pred_region
    _
  $region25: #{mmnet_forward.3} parent=0 // pred_fallthru
    _
  // Predicated region
  $region26: #{mmnet_forward.3} parent=0 // pred_check
    _
  $region27: #{mmnet_forward.3} parent=0 // pred_check_branch
    %27 = sbr.rel (0) target = $region29
  $region28: #{mmnet_forward.3} parent=0 // pred_region
    _
  $region29: #{mmnet_forward.3} parent=0 // pred_fallthru
    _
  // Predicated region
  $region30: #{mmnet_forward.3} parent=0 // pred_check
    _
  $region31: #{mmnet_forward.3} parent=0 // pred_check_branch
    %29 = sbr.rel (0) target = $region33
  $region32: #{mmnet_forward.3} parent=0 // pred_region
    _
  $region33: #{mmnet_forward.3} parent=0 // pred_fallthru
    _
  // Predicated region
  $region34: #{mmnet_forward.3} parent=0 // pred_check
    _
  $region35: #{mmnet_forward.3} parent=0 // pred_check_branch
    %31 = sbr.rel (0) target = $region37
  $region36: #{mmnet_forward.3} parent=0 // pred_region
    _
  $region37: #{mmnet_forward.3} parent=0 // pred_fallthru
    _
  %v32 = vld [vmem:[%s1] sm:$0xff]
  %v33 = vld [vmem:[%s1 + $0x8] sm:$0xff]
  %v34 = vld [vmem:[%s1 + $0x10] sm:$0xff]
  %v35 = vld [vmem:[%s1 + $0x18] sm:$0xff]
  %v36 = vld [vmem:[%s1 + $0x20] sm:$0xff]
  %v37 = vld [vmem:[%s1 + $0x28] sm:$0xff]
  %v38 = vld [vmem:[%s1 + $0x30] sm:$0xff]
  %v39 = vld [vmem:[%s1 + $0x38] sm:$0xff]
  %v40 = vld [vmem:[%s1 + $0x40] sm:$0xff]
  %v41 = vld [vmem:[%s1 + $0x48] sm:$0xff]
  %v42 = vld [vmem:[%s1 + $0x50] sm:$0xff]
  %v43 = vld [vmem:[%s1 + $0x58] sm:$0xff]
  %v44 = vld [vmem:[%s1 + $0x60] sm:$0xff]
  %v45 = vld [vmem:[%s1 + $0x68] sm:$0xff]
  %v46 = vld [vmem:[%s1 + $0x70] sm:$0xff]
  %v47 = vld [vmem:[%s1 + $0x78] sm:$0xff]
  %v48 = vld [vmem:[%s1 + $0x80] sm:$0xff]
  %v49 = vld [vmem:[%s1 + $0x88] sm:$0xff]
  %v50 = vld [vmem:[%s1 + $0x90] sm:$0xff]
  %v51 = vld [vmem:[%s1 + $0x98] sm:$0xff]
  %v52 = vld [vmem:[%s1 + $0xa0] sm:$0xff]
  %v53 = vld [vmem:[%s1 + $0xa8] sm:$0xff]
  %v54 = vld [vmem:[%s1 + $0xb0] sm:$0xff]
  %v55 = vld [vmem:[%s1 + $0xb8] sm:$0xff]
  %v56 = vld [vmem:[%s1 + $0xc0] sm:$0xff]
  %v57 = vld [vmem:[%s1 + $0xc8] sm:$0xff]
  %v58 = vld [vmem:[%s1 + $0xd0] sm:$0xff]
  %v59 = vld [vmem:[%s1 + $0xd8] sm:$0xff]
  %v60 = vld [vmem:[%s1 + $0xe0] sm:$0xff]
  %v61 = vld [vmem:[%s1 + $0xe8] sm:$0xff]
  %v62 = vld [vmem:[%s1 + $0xf0] sm:$0xff]
  %v63 = vld [vmem:[%s1 + $0xf8] sm:$0xff]
  %v64 = vld [vmem:[%s0] sm:$0xff]
  %v65 = vld [vmem:[%s0 + $0x8] sm:$0xff]
  %v66 = vld [vmem:[%s0 + $0x10] sm:$0xff]
  %v67 = vld [vmem:[%s0 + $0x18] sm:$0xff]
  %v68 = vld [vmem:[%s0 + $0x20] sm:$0xff]
  %v69 = vld [vmem:[%s0 + $0x28] sm:$0xff]
  %v70 = vld [vmem:[%s0 + $0x30] sm:$0xff]
  %v71 = vld [vmem:[%s0 + $0x38] sm:$0xff]
  %72 = vmatprep.subr.mxu0 0.0
  %73 = vmatpush1.msra.mxu0 %v47
  %74 = vmatprep.subr.mxu0 0.0
  %75 = vmatpush1.msra.mxu0 %v46
  %76 = vmatprep.subr.mxu0 0.0
  %77 = vmatpush1.msra.mxu0 %v45
  %78 = vmatprep.subr.mxu0 0.0
  %79 = vmatpush1.msra.mxu0 %v44
  %80 = vmatprep.subr.mxu0 0.0
  %81 = vmatpush1.msra.mxu0 %v43
  %82 = vmatprep.subr.mxu0 0.0
  %83 = vmatpush1.msra.mxu0 %v42
  %84 = vmatprep.subr.mxu0 0.0
  %85 = vmatpush1.msra.mxu0 %v41
  %86 = vmatprep.subr.mxu0 0.0
  %87 = vmatpush1.msra.mxu0 %v40
  %88 = vmatprep.subr.mxu0 0.0
  %89 = vmatpush1.msra.mxu0 %v39
  %90 = vmatprep.subr.mxu0 0.0
  %91 = vmatpush1.msra.mxu0 %v38
  %92 = vmatprep.subr.mxu0 0.0
  %93 = vmatpush1.msra.mxu0 %v37
  %94 = vmatprep.subr.mxu0 0.0
  %95 = vmatpush1.msra.mxu0 %v36
  %96 = vmatprep.subr.mxu0 0.0
  %97 = vmatpush1.msra.mxu0 %v35
  %98 = vmatprep.subr.mxu0 0.0
  %99 = vmatpush1.msra.mxu0 %v34
  %100 = vmatprep.subr.mxu0 0.0
  %101 = vmatpush1.msra.mxu0 %v33
  %102 = vmatprep.subr.mxu0 0.0
  %103 = vmatpush1.msra.mxu0 %v32
  %104 = vmatprep.subr.mxu0 0.0
  %105 = vmatpush2.msra.mxu0 %v63
  %106 = vmatprep.subr.mxu0 0.0
  %107 = vmatpush2.msra.mxu0 %v62
  %108 = vmatprep.subr.mxu0 0.0
  %109 = vmatpush2.msra.mxu0 %v61
  %110 = vmatprep.subr.mxu0 0.0
  %111 = vmatpush2.msra.mxu0 %v60
  %112 = vmatprep.subr.mxu0 0.0
  %113 = vmatpush2.msra.mxu0 %v59
  %114 = vmatprep.subr.mxu0 0.0
  %115 = vmatpush2.msra.mxu0 %v58
  %116 = vmatprep.subr.mxu0 0.0
  %117 = vmatpush2.msra.mxu0 %v57
  %118 = vmatprep.subr.mxu0 0.0
  %119 = vmatpush2.msra.mxu0 %v56
  %120 = vmatprep.subr.mxu0 0.0
  %121 = vmatpush2.msra.mxu0 %v55
  %122 = vmatprep.subr.mxu0 0.0
  %123 = vmatpush2.msra.mxu0 %v54
  %124 = vmatprep.subr.mxu0 0.0
  %125 = vmatpush2.msra.mxu0 %v53
  %126 = vmatprep.subr.mxu0 0.0
  %127 = vmatpush2.msra.mxu0 %v52
  %128 = vmatprep.subr.mxu0 0.0
  %129 = vmatpush2.msra.mxu0 %v51
  %130 = vmatprep.subr.mxu0 0.0
  %131 = vmatpush2.msra.mxu0 %v50
  %132 = vmatprep.subr.mxu0 0.0
  %133 = vmatpush2.msra.mxu0 %v49
  %134 = vmatprep.subr.mxu0 0.0
  %135 = vmatpush2.msra.mxu0 %v48
  %136 = vmatprep.mubr.f32.mxu0 %v65
  %137 = vmatmul.mubr.f32.gmra.mxu0 %v64
  %v138 = vpop.f32.mrf.mxu0
  %v139 = vadd.f32 0.0, %v138
  %v140 = vpop.f32.mrf.mxu0
  %141 = vmatprep.mubr.f32.mxu0 %v67
  %142 = vmatmul.mubr.f32.gmra.mxu0 %v66
  %v143 = vpop.f32.mrf.mxu0
  %v144 = vadd.f32 0.0, %v143
  %v145 = vpop.f32.mrf.mxu0
  %146 = vmatprep.mubr.f32.mxu0 %v69
  %147 = vmatmul.mubr.f32.gmra.mxu0 %v68
  %v148 = vpop.f32.mrf.mxu0
  %v149 = vadd.f32 0.0, %v148
  %v150 = vpop.f32.mrf.mxu0
  %151 = vmatprep.mubr.f32.mxu0 %v71
  %152 = vmatmul.mubr.f32.gmra.mxu0 %v70
  %v153 = vpop.f32.mrf.mxu0
  %v154 = vadd.f32 0.0, %v153
  %v155 = vpop.f32.mrf.mxu0
  %156 = vdwg.mxu0
  %s157 = scalar_lea.vmem %s0, 64
  %v158 = vld [vmem:[%s157] sm:$0xff]
  %v159 = vld [vmem:[%s157 + $0x8] sm:$0xff]
  %v160 = vld [vmem:[%s157 + $0x10] sm:$0xff]
  %v161 = vld [vmem:[%s157 + $0x18] sm:$0xff]
  %v162 = vld [vmem:[%s157 + $0x20] sm:$0xff]
  %v163 = vld [vmem:[%s157 + $0x28] sm:$0xff]
  %v164 = vld [vmem:[%s157 + $0x30] sm:$0xff]
  %v165 = vld [vmem:[%s157 + $0x38] sm:$0xff]
  %166 = vmatprep.subr.mxu0 0.0
  %167 = vmatpush1.msra.mxu0 %v47
  %168 = vmatprep.subr.mxu0 0.0
  %169 = vmatpush1.msra.mxu0 %v46
  %170 = vmatprep.subr.mxu0 0.0
  %171 = vmatpush1.msra.mxu0 %v45
  %172 = vmatprep.subr.mxu0 0.0
  %173 = vmatpush1.msra.mxu0 %v44
  %174 = vmatprep.subr.mxu0 0.0
  %175 = vmatpush1.msra.mxu0 %v43
  %176 = vmatprep.subr.mxu0 0.0
  %177 = vmatpush1.msra.mxu0 %v42
  %178 = vmatprep.subr.mxu0 0.0
  %179 = vmatpush1.msra.mxu0 %v41
  %180 = vmatprep.subr.mxu0 0.0
  %181 = vmatpush1.msra.mxu0 %v40
  %182 = vmatprep.subr.mxu0 0.0
  %183 = vmatpush1.msra.mxu0 %v39
  %184 = vmatprep.subr.mxu0 0.0
  %185 = vmatpush1.msra.mxu0 %v38
  %186 = vmatprep.subr.mxu0 0.0
  %187 = vmatpush1.msra.mxu0 %v37
  %188 = vmatprep.subr.mxu0 0.0
  %189 = vmatpush1.msra.mxu0 %v36
  %190 = vmatprep.subr.mxu0 0.0
  %191 = vmatpush1.msra.mxu0 %v35
  %192 = vmatprep.subr.mxu0 0.0
  %193 = vmatpush1.msra.mxu0 %v34
  %194 = vmatprep.subr.mxu0 0.0
  %195 = vmatpush1.msra.mxu0 %v33
  %196 = vmatprep.subr.mxu0 0.0
  %197 = vmatpush1.msra.mxu0 %v32
  %198 = vmatprep.subr.mxu0 0.0
  %199 = vmatpush2.msra.mxu0 %v63
  %200 = vmatprep.subr.mxu0 0.0
  %201 = vmatpush2.msra.mxu0 %v62
  %202 = vmatprep.subr.mxu0 0.0
  %203 = vmatpush2.msra.mxu0 %v61
  %204 = vmatprep.subr.mxu0 0.0
  %205 = vmatpush2.msra.mxu0 %v60
  %206 = vmatprep.subr.mxu0 0.0
  %207 = vmatpush2.msra.mxu0 %v59
  %208 = vmatprep.subr.mxu0 0.0
  %209 = vmatpush2.msra.mxu0 %v58
  %210 = vmatprep.subr.mxu0 0.0
  %211 = vmatpush2.msra.mxu0 %v57
  %212 = vmatprep.subr.mxu0 0.0
  %213 = vmatpush2.msra.mxu0 %v56
  %214 = vmatprep.subr.mxu0 0.0
  %215 = vmatpush2.msra.mxu0 %v55
  %216 = vmatprep.subr.mxu0 0.0
  %217 = vmatpush2.msra.mxu0 %v54
  %218 = vmatprep.subr.mxu0 0.0
  %219 = vmatpush2.msra.mxu0 %v53
  %220 = vmatprep.subr.mxu0 0.0
  %221 = vmatpush2.msra.mxu0 %v52
  %222 = vmatprep.subr.mxu0 0.0
  %223 = vmatpush2.msra.mxu0 %v51
  %224 = vmatprep.subr.mxu0 0.0
  %225 = vmatpush2.msra.mxu0 %v50
  %226 = vmatprep.subr.mxu0 0.0
  %227 = vmatpush2.msra.mxu0 %v49
  %228 = vmatprep.subr.mxu0 0.0
  %229 = vmatpush2.msra.mxu0 %v48
  %230 = vmatprep.mubr.f32.mxu0 %v159
  %231 = vmatmul.mubr.f32.gmra.mxu0 %v158
  %v232 = vpop.f32.mrf.mxu0
  %v233 = vadd.f32 0.0, %v232
  %v234 = vpop.f32.mrf.mxu0
  %235 = vmatprep.mubr.f32.mxu0 %v161
  %236 = vmatmul.mubr.f32.gmra.mxu0 %v160
  %v237 = vpop.f32.mrf.mxu0
  %v238 = vadd.f32 0.0, %v237
  %v239 = vpop.f32.mrf.mxu0
  %240 = vmatprep.mubr.f32.mxu0 %v163
  %241 = vmatmul.mubr.f32.gmra.mxu0 %v162
  %v242 = vpop.f32.mrf.mxu0
  %v243 = vadd.f32 0.0, %v242
  %v244 = vpop.f32.mrf.mxu0
  %245 = vmatprep.mubr.f32.mxu0 %v165
  %246 = vmatmul.mubr.f32.gmra.mxu0 %v164
  %v247 = vpop.f32.mrf.mxu0
  %v248 = vadd.f32 0.0, %v247
  %v249 = vpop.f32.mrf.mxu0
  %250 = vdwg.mxu0
  %v251 = vmax.f32 %v139, %v233
  %v252 = vmax.f32 %v144, %v238
  %v253 = vmax.f32 %v149, %v243
  %v254 = vmax.f32 %v154, %v248
  %s255 = scalar_lea.vmem %s0, 128
  %v256 = vld [vmem:[%s255] sm:$0xff]
  %v257 = vld [vmem:[%s255 + $0x8] sm:$0xff]
  %v258 = vld [vmem:[%s255 + $0x10] sm:$0xff]
  %v259 = vld [vmem:[%s255 + $0x18] sm:$0xff]
  %v260 = vld [vmem:[%s255 + $0x20] sm:$0xff]
  %v261 = vld [vmem:[%s255 + $0x28] sm:$0xff]
  %v262 = vld [vmem:[%s255 + $0x30] sm:$0xff]
  %v263 = vld [vmem:[%s255 + $0x38] sm:$0xff]
  %264 = vmatprep.subr.mxu0 0.0
  %265 = vmatpush1.msra.mxu0 %v47
  %266 = vmatprep.subr.mxu0 0.0
  %267 = vmatpush1.msra.mxu0 %v46
  %268 = vmatprep.subr.mxu0 0.0
  %269 = vmatpush1.msra.mxu0 %v45
  %270 = vmatprep.subr.mxu0 0.0
  %271 = vmatpush1.msra.mxu0 %v44
  %272 = vmatprep.subr.mxu0 0.0
  %273 = vmatpush1.msra.mxu0 %v43
  %274 = vmatprep.subr.mxu0 0.0
  %275 = vmatpush1.msra.mxu0 %v42
  %276 = vmatprep.subr.mxu0 0.0
  %277 = vmatpush1.msra.mxu0 %v41
  %278 = vmatprep.subr.mxu0 0.0
  %279 = vmatpush1.msra.mxu0 %v40
  %280 = vmatprep.subr.mxu0 0.0
  %281 = vmatpush1.msra.mxu0 %v39
  %282 = vmatprep.subr.mxu0 0.0
  %283 = vmatpush1.msra.mxu0 %v38
  %284 = vmatprep.subr.mxu0 0.0
  %285 = vmatpush1.msra.mxu0 %v37
  %286 = vmatprep.subr.mxu0 0.0
  %287 = vmatpush1.msra.mxu0 %v36
  %288 = vmatprep.subr.mxu0 0.0
  %289 = vmatpush1.msra.mxu0 %v35
  %290 = vmatprep.subr.mxu0 0.0
  %291 = vmatpush1.msra.mxu0 %v34
  %292 = vmatprep.subr.mxu0 0.0
  %293 = vmatpush1.msra.mxu0 %v33
  %294 = vmatprep.subr.mxu0 0.0
  %295 = vmatpush1.msra.mxu0 %v32
  %296 = vmatprep.subr.mxu0 0.0
  %297 = vmatpush2.msra.mxu0 %v63
  %298 = vmatprep.subr.mxu0 0.0
  %299 = vmatpush2.msra.mxu0 %v62
  %300 = vmatprep.subr.mxu0 0.0
  %301 = vmatpush2.msra.mxu0 %v61
  %302 = vmatprep.subr.mxu0 0.0
  %303 = vmatpush2.msra.mxu0 %v60
  %304 = vmatprep.subr.mxu0 0.0
  %305 = vmatpush2.msra.mxu0 %v59
  %306 = vmatprep.subr.mxu0 0.0
  %307 = vmatpush2.msra.mxu0 %v58
  %308 = vmatprep.subr.mxu0 0.0
  %309 = vmatpush2.msra.mxu0 %v57
  %310 = vmatprep.subr.mxu0 0.0
  %311 = vmatpush2.msra.mxu0 %v56
  %312 = vmatprep.subr.mxu0 0.0
  %313 = vmatpush2.msra.mxu0 %v55
  %314 = vmatprep.subr.mxu0 0.0
  %315 = vmatpush2.msra.mxu0 %v54
  %316 = vmatprep.subr.mxu0 0.0
  %317 = vmatpush2.msra.mxu0 %v53
  %318 = vmatprep.subr.mxu0 0.0
  %319 = vmatpush2.msra.mxu0 %v52
  %320 = vmatprep.subr.mxu0 0.0
  %321 = vmatpush2.msra.mxu0 %v51
  %322 = vmatprep.subr.mxu0 0.0
  %323 = vmatpush2.msra.mxu0 %v50
  %324 = vmatprep.subr.mxu0 0.0
  %325 = vmatpush2.msra.mxu0 %v49
  %326 = vmatprep.subr.mxu0 0.0
  %327 = vmatpush2.msra.mxu0 %v48
  %328 = vmatprep.mubr.f32.mxu0 %v257
  %329 = vmatmul.mubr.f32.gmra.mxu0 %v256
  %v330 = vpop.f32.mrf.mxu0
  %v331 = vadd.f32 0.0, %v330
  %v332 = vpop.f32.mrf.mxu0
  %333 = vmatprep.mubr.f32.mxu0 %v259
  %334 = vmatmul.mubr.f32.gmra.mxu0 %v258
  %v335 = vpop.f32.mrf.mxu0
  %v336 = vadd.f32 0.0, %v335
  %v337 = vpop.f32.mrf.mxu0
  %338 = vmatprep.mubr.f32.mxu0 %v261
  %339 = vmatmul.mubr.f32.gmra.mxu0 %v260
  %v340 = vpop.f32.mrf.mxu0
  %v341 = vadd.f32 0.0, %v340
  %v342 = vpop.f32.mrf.mxu0
  %343 = vmatprep.mubr.f32.mxu0 %v263
  %344 = vmatmul.mubr.f32.gmra.mxu0 %v262
  %v345 = vpop.f32.mrf.mxu0
  %v346 = vadd.f32 0.0, %v345
  %v347 = vpop.f32.mrf.mxu0
  %348 = vdwg.mxu0
  %v349 = vmax.f32 %v251, %v331
  %v350 = vmax.f32 %v252, %v336
  %v351 = vmax.f32 %v253, %v341
  %v352 = vmax.f32 %v254, %v346
  %s353 = scalar_lea.vmem %s0, 192
  %v354 = vld [vmem:[%s353] sm:$0xff]
  %v355 = vld [vmem:[%s353 + $0x8] sm:$0xff]
  %v356 = vld [vmem:[%s353 + $0x10] sm:$0xff]
  %v357 = vld [vmem:[%s353 + $0x18] sm:$0xff]
  %v358 = vld [vmem:[%s353 + $0x20] sm:$0xff]
  %v359 = vld [vmem:[%s353 + $0x28] sm:$0xff]
  %v360 = vld [vmem:[%s353 + $0x30] sm:$0xff]
  %v361 = vld [vmem:[%s353 + $0x38] sm:$0xff]
  %362 = vmatprep.subr.mxu0 0.0
  %363 = vmatpush1.msra.mxu0 %v47
  %364 = vmatprep.subr.mxu0 0.0
  %365 = vmatpush1.msra.mxu0 %v46
  %366 = vmatprep.subr.mxu0 0.0
  %367 = vmatpush1.msra.mxu0 %v45
  %368 = vmatprep.subr.mxu0 0.0
  %369 = vmatpush1.msra.mxu0 %v44
  %370 = vmatprep.subr.mxu0 0.0
  %371 = vmatpush1.msra.mxu0 %v43
  %372 = vmatprep.subr.mxu0 0.0
  %373 = vmatpush1.msra.mxu0 %v42
  %374 = vmatprep.subr.mxu0 0.0
  %375 = vmatpush1.msra.mxu0 %v41
  %376 = vmatprep.subr.mxu0 0.0
  %377 = vmatpush1.msra.mxu0 %v40
  %378 = vmatprep.subr.mxu0 0.0
  %379 = vmatpush1.msra.mxu0 %v39
  %380 = vmatprep.subr.mxu0 0.0
  %381 = vmatpush1.msra.mxu0 %v38
  %382 = vmatprep.subr.mxu0 0.0
  %383 = vmatpush1.msra.mxu0 %v37
  %384 = vmatprep.subr.mxu0 0.0
  %385 = vmatpush1.msra.mxu0 %v36
  %386 = vmatprep.subr.mxu0 0.0
  %387 = vmatpush1.msra.mxu0 %v35
  %388 = vmatprep.subr.mxu0 0.0
  %389 = vmatpush1.msra.mxu0 %v34
  %390 = vmatprep.subr.mxu0 0.0
  %391 = vmatpush1.msra.mxu0 %v33
  %392 = vmatprep.subr.mxu0 0.0
  %393 = vmatpush1.msra.mxu0 %v32
  %394 = vmatprep.subr.mxu0 0.0
  %395 = vmatpush2.msra.mxu0 %v63
  %396 = vmatprep.subr.mxu0 0.0
  %397 = vmatpush2.msra.mxu0 %v62
  %398 = vmatprep.subr.mxu0 0.0
  %399 = vmatpush2.msra.mxu0 %v61
  %400 = vmatprep.subr.mxu0 0.0
  %401 = vmatpush2.msra.mxu0 %v60
  %402 = vmatprep.subr.mxu0 0.0
  %403 = vmatpush2.msra.mxu0 %v59
  %404 = vmatprep.subr.mxu0 0.0
  %405 = vmatpush2.msra.mxu0 %v58
  %406 = vmatprep.subr.mxu0 0.0
  %407 = vmatpush2.msra.mxu0 %v57
  %408 = vmatprep.subr.mxu0 0.0
  %409 = vmatpush2.msra.mxu0 %v56
  %410 = vmatprep.subr.mxu0 0.0
  %411 = vmatpush2.msra.mxu0 %v55
  %412 = vmatprep.subr.mxu0 0.0
  %413 = vmatpush2.msra.mxu0 %v54
  %414 = vmatprep.subr.mxu0 0.0
  %415 = vmatpush2.msra.mxu0 %v53
  %416 = vmatprep.subr.mxu0 0.0
  %417 = vmatpush2.msra.mxu0 %v52
  %418 = vmatprep.subr.mxu0 0.0
  %419 = vmatpush2.msra.mxu0 %v51
  %420 = vmatprep.subr.mxu0 0.0
  %421 = vmatpush2.msra.mxu0 %v50
  %422 = vmatprep.subr.mxu0 0.0
  %423 = vmatpush2.msra.mxu0 %v49
  %424 = vmatprep.subr.mxu0 0.0
  %425 = vmatpush2.msra.mxu0 %v48
  %426 = vmatprep.mubr.f32.mxu0 %v355
  %427 = vmatmul.mubr.f32.gmra.mxu0 %v354
  %v428 = vpop.f32.mrf.mxu0
  %v429 = vadd.f32 0.0, %v428
  %v430 = vpop.f32.mrf.mxu0
  %431 = vmatprep.mubr.f32.mxu0 %v357
  %432 = vmatmul.mubr.f32.gmra.mxu0 %v356
  %v433 = vpop.f32.mrf.mxu0
  %v434 = vadd.f32 0.0, %v433
  %v435 = vpop.f32.mrf.mxu0
  %436 = vmatprep.mubr.f32.mxu0 %v359
  %437 = vmatmul.mubr.f32.gmra.mxu0 %v358
  %v438 = vpop.f32.mrf.mxu0
  %v439 = vadd.f32 0.0, %v438
  %v440 = vpop.f32.mrf.mxu0
  %441 = vmatprep.mubr.f32.mxu0 %v361
  %442 = vmatmul.mubr.f32.gmra.mxu0 %v360
  %v443 = vpop.f32.mrf.mxu0
  %v444 = vadd.f32 0.0, %v443
  %v445 = vpop.f32.mrf.mxu0
  %446 = vdwg.mxu0
  %v447 = vmax.f32 %v349, %v429
  %v448 = vmax.f32 %v350, %v434
  %v449 = vmax.f32 %v351, %v439
  %v450 = vmax.f32 %v352, %v444
  %v451 = vld [vmem:[%s2] sm:$0x1]
  %v453 = vlaneseq
  %v454 = vshrl.u32 %v453, 7
  %v455 = vsub.s32 0, %v454
  %v456 = vrot.slane %v451, %v455
  %v458 = vadd.f32 %v447, %v456
  %v459 = vadd.f32 %v448, %v456
  %v460 = vadd.f32 %v449, %v456
  %v461 = vadd.f32 %v450, %v456
  %v462 = vmax.f32 %v458, 0.0
  %v463 = vmax.f32 %v459, 0.0
  %v464 = vmax.f32 %v460, 0.0
  %v465 = vmax.f32 %v461, 0.0
  %vm466 = vcmask 162816
  %467 = vst.msk [vmem:[#allocation2] sm:$0xff] %vm466, %v462
  %468 = vst.msk [vmem:[#allocation2 + $0x8] sm:$0xff] %vm466, %v463
  %469 = vst.msk [vmem:[#allocation2 + $0x10] sm:$0xff] %vm466, %v464
  %470 = vst.msk [vmem:[#allocation2 + $0x18] sm:$0xff] %vm466, %v465
  %v471 = vld [vmem:[#allocation2] sm:$0x3]
  %v472 = vld [vmem:[%s3] sm:$0xff]
  %v473 = vld [vmem:[%s3 + $0x8] sm:$0xff]
  %v474 = vld [vmem:[%s3 + $0x10] sm:$0xf]
  %v475 = vld [vmem:[#allocation2 + $0x2] sm:$0x3]
  %s476 = scalar_lea.vmem %s3, 24
  %v477 = vld [vmem:[%s476] sm:$0xff]
  %v478 = vld [vmem:[%s476 + $0x8] sm:$0xff]
  %v479 = vld [vmem:[%s476 + $0x10] sm:$0xf]
  %v481 = vsel %vm466, %v475, 0
  %vm483 = vcmask 1043456
  %v485 = vsel %vm483, %v479, 0
  %487 = vmatprep.subr.mxu0 0.0
  %488 = vmatpush1.msra.mxu0 0.0
  %489 = vmatprep.subr.mxu0 0.0
  %490 = vmatpush1.msra.mxu0 0.0
  %491 = vmatprep.subr.mxu0 0.0
  %492 = vmatpush1.msra.mxu0 0.0
  %493 = vmatprep.subr.mxu0 0.0
  %494 = vmatpush1.msra.mxu0 0.0
  %495 = vmatprep.subr.mxu0 0.0
  %496 = vmatpush1.msra.mxu0 0.0
  %497 = vmatprep.subr.mxu0 0.0
  %498 = vmatpush1.msra.mxu0 0.0
  %499 = vmatprep.subr.mxu0 0.0
  %500 = vmatpush1.msra.mxu0 0.0
  %501 = vmatprep.subr.mxu0 0.0
  %502 = vmatpush1.msra.mxu0 0.0
  %503 = vmatprep.subr.mxu0 0.0
  %504 = vmatpush1.msra.mxu0 0.0
  %505 = vmatprep.subr.mxu0 0.0
  %506 = vmatpush1.msra.mxu0 0.0
  %507 = vmatprep.subr.mxu0 0.0
  %508 = vmatpush1.msra.mxu0 0.0
  %509 = vmatprep.subr.mxu0 0.0
  %510 = vmatpush1.msra.mxu0 0.0
  %511 = vmatprep.subr.mxu0 0.0
  %512 = vmatpush1.msra.mxu0 0.0
  %513 = vmatprep.subr.mxu0 0.0
  %514 = vmatpush1.msra.mxu0 %v485
  %515 = vmatprep.subr.mxu0 0.0
  %516 = vmatpush1.msra.mxu0 %v478
  %517 = vmatprep.subr.mxu0 0.0
  %518 = vmatpush1.msra.mxu0 %v477
  %519 = vmatprep.subr.mxu0 0.0
  %520 = vmatpush2.msra.mxu0 0.0
  %521 = vmatprep.subr.mxu0 0.0
  %522 = vmatpush2.msra.mxu0 0.0
  %523 = vmatprep.subr.mxu0 0.0
  %524 = vmatpush2.msra.mxu0 0.0
  %525 = vmatprep.subr.mxu0 0.0
  %526 = vmatpush2.msra.mxu0 0.0
  %527 = vmatprep.subr.mxu0 0.0
  %528 = vmatpush2.msra.mxu0 0.0
  %529 = vmatprep.subr.mxu0 0.0
  %530 = vmatpush2.msra.mxu0 0.0
  %531 = vmatprep.subr.mxu0 0.0
  %532 = vmatpush2.msra.mxu0 0.0
  %533 = vmatprep.subr.mxu0 0.0
  %534 = vmatpush2.msra.mxu0 0.0
  %535 = vmatprep.subr.mxu0 0.0
  %536 = vmatpush2.msra.mxu0 0.0
  %537 = vmatprep.subr.mxu0 0.0
  %538 = vmatpush2.msra.mxu0 0.0
  %539 = vmatprep.subr.mxu0 0.0
  %540 = vmatpush2.msra.mxu0 0.0
  %541 = vmatprep.subr.mxu0 0.0
  %542 = vmatpush2.msra.mxu0 0.0
  %543 = vmatprep.subr.mxu0 0.0
  %544 = vmatpush2.msra.mxu0 0.0
  %545 = vmatprep.subr.mxu0 0.0
  %546 = vmatpush2.msra.mxu0 0.0
  %547 = vmatprep.subr.mxu0 0.0
  %548 = vmatpush2.msra.mxu0 0.0
  %549 = vmatprep.subr.mxu0 0.0
  %550 = vmatpush2.msra.mxu0 0.0
  %551 = vmatprep.mubr.f32.mxu0 0.0
  %552 = vmatmul.mubr.f32.gmra.mxu0 %v481
  %v553 = vpop.f32.mrf.mxu0
  %v554 = vadd.f32 0.0, %v553
  %v555 = vpop.f32.mrf.mxu0
  %556 = vdwg.mxu0
  %v558 = vsel %vm466, %v471, 0
  %v561 = vsel %vm483, %v474, 0
  %563 = vmatprep.subr.mxu0 0.0
  %564 = vmatpush1.msra.mxu0 0.0
  %565 = vmatprep.subr.mxu0 0.0
  %566 = vmatpush1.msra.mxu0 0.0
  %567 = vmatprep.subr.mxu0 0.0
  %568 = vmatpush1.msra.mxu0 0.0
  %569 = vmatprep.subr.mxu0 0.0
  %570 = vmatpush1.msra.mxu0 0.0
  %571 = vmatprep.subr.mxu0 0.0
  %572 = vmatpush1.msra.mxu0 0.0
  %573 = vmatprep.subr.mxu0 0.0
  %574 = vmatpush1.msra.mxu0 0.0
  %575 = vmatprep.subr.mxu0 0.0
  %576 = vmatpush1.msra.mxu0 0.0
  %577 = vmatprep.subr.mxu0 0.0
  %578 = vmatpush1.msra.mxu0 0.0
  %579 = vmatprep.subr.mxu0 0.0
  %580 = vmatpush1.msra.mxu0 0.0
  %581 = vmatprep.subr.mxu0 0.0
  %582 = vmatpush1.msra.mxu0 0.0
  %583 = vmatprep.subr.mxu0 0.0
  %584 = vmatpush1.msra.mxu0 0.0
  %585 = vmatprep.subr.mxu0 0.0
  %586 = vmatpush1.msra.mxu0 0.0
  %587 = vmatprep.subr.mxu0 0.0
  %588 = vmatpush1.msra.mxu0 0.0
  %589 = vmatprep.subr.mxu0 0.0
  %590 = vmatpush1.msra.mxu0 %v561
  %591 = vmatprep.subr.mxu0 0.0
  %592 = vmatpush1.msra.mxu0 %v473
  %593 = vmatprep.subr.mxu0 0.0
  %594 = vmatpush1.msra.mxu0 %v472
  %595 = vmatprep.subr.mxu0 0.0
  %596 = vmatpush2.msra.mxu0 0.0
  %597 = vmatprep.subr.mxu0 0.0
  %598 = vmatpush2.msra.mxu0 0.0
  %599 = vmatprep.subr.mxu0 0.0
  %600 = vmatpush2.msra.mxu0 0.0
  %601 = vmatprep.subr.mxu0 0.0
  %602 = vmatpush2.msra.mxu0 0.0
  %603 = vmatprep.subr.mxu0 0.0
  %604 = vmatpush2.msra.mxu0 0.0
  %605 = vmatprep.subr.mxu0 0.0
  %606 = vmatpush2.msra.mxu0 0.0
  %607 = vmatprep.subr.mxu0 0.0
  %608 = vmatpush2.msra.mxu0 0.0
  %609 = vmatprep.subr.mxu0 0.0
  %610 = vmatpush2.msra.mxu0 0.0
  %611 = vmatprep.subr.mxu0 0.0
  %612 = vmatpush2.msra.mxu0 0.0
  %613 = vmatprep.subr.mxu0 0.0
  %614 = vmatpush2.msra.mxu0 0.0
  %615 = vmatprep.subr.mxu0 0.0
  %616 = vmatpush2.msra.mxu0 0.0
  %617 = vmatprep.subr.mxu0 0.0
  %618 = vmatpush2.msra.mxu0 0.0
  %619 = vmatprep.subr.mxu0 0.0
  %620 = vmatpush2.msra.mxu0 0.0
  %621 = vmatprep.subr.mxu0 0.0
  %622 = vmatpush2.msra.mxu0 0.0
  %623 = vmatprep.subr.mxu0 0.0
  %624 = vmatpush2.msra.mxu0 0.0
  %625 = vmatprep.subr.mxu0 0.0
  %626 = vmatpush2.msra.mxu0 0.0
  %627 = vmatprep.mubr.f32.mxu0 0.0
  %628 = vmatmul.mubr.f32.gmra.mxu0 %v558
  %v629 = vpop.f32.mrf.mxu0
  %v630 = vadd.f32 %v554, %v629
  %v631 = vpop.f32.mrf.mxu0
  %632 = vdwg.mxu0
  %v633 = vld [vmem:[#allocation2 + $0x4] sm:$0x3]
  %s634 = scalar_lea.vmem %s3, 48
  %v635 = vld [vmem:[%s634] sm:$0xff]
  %v636 = vld [vmem:[%s634 + $0x8] sm:$0xff]
  %v637 = vld [vmem:[%s634 + $0x10] sm:$0xf]
  %v639 = vsel %vm466, %v633, 0
  %v642 = vsel %vm483, %v637, 0
  %644 = vmatprep.subr.mxu0 0.0
  %645 = vmatpush1.msra.mxu0 0.0
  %646 = vmatprep.subr.mxu0 0.0
  %647 = vmatpush1.msra.mxu0 0.0
  %648 = vmatprep.subr.mxu0 0.0
  %649 = vmatpush1.msra.mxu0 0.0
  %650 = vmatprep.subr.mxu0 0.0
  %651 = vmatpush1.msra.mxu0 0.0
  %652 = vmatprep.subr.mxu0 0.0
  %653 = vmatpush1.msra.mxu0 0.0
  %654 = vmatprep.subr.mxu0 0.0
  %655 = vmatpush1.msra.mxu0 0.0
  %656 = vmatprep.subr.mxu0 0.0
  %657 = vmatpush1.msra.mxu0 0.0
  %658 = vmatprep.subr.mxu0 0.0
  %659 = vmatpush1.msra.mxu0 0.0
  %660 = vmatprep.subr.mxu0 0.0
  %661 = vmatpush1.msra.mxu0 0.0
  %662 = vmatprep.subr.mxu0 0.0
  %663 = vmatpush1.msra.mxu0 0.0
  %664 = vmatprep.subr.mxu0 0.0
  %665 = vmatpush1.msra.mxu0 0.0
  %666 = vmatprep.subr.mxu0 0.0
  %667 = vmatpush1.msra.mxu0 0.0
  %668 = vmatprep.subr.mxu0 0.0
  %669 = vmatpush1.msra.mxu0 0.0
  %670 = vmatprep.subr.mxu0 0.0
  %671 = vmatpush1.msra.mxu0 %v642
  %672 = vmatprep.subr.mxu0 0.0
  %673 = vmatpush1.msra.mxu0 %v636
  %674 = vmatprep.subr.mxu0 0.0
  %675 = vmatpush1.msra.mxu0 %v635
  %676 = vmatprep.subr.mxu0 0.0
  %677 = vmatpush2.msra.mxu0 0.0
  %678 = vmatprep.subr.mxu0 0.0
  %679 = vmatpush2.msra.mxu0 0.0
  %680 = vmatprep.subr.mxu0 0.0
  %681 = vmatpush2.msra.mxu0 0.0
  %682 = vmatprep.subr.mxu0 0.0
  %683 = vmatpush2.msra.mxu0 0.0
  %684 = vmatprep.subr.mxu0 0.0
  %685 = vmatpush2.msra.mxu0 0.0
  %686 = vmatprep.subr.mxu0 0.0
  %687 = vmatpush2.msra.mxu0 0.0
  %688 = vmatprep.subr.mxu0 0.0
  %689 = vmatpush2.msra.mxu0 0.0
  %690 = vmatprep.subr.mxu0 0.0
  %691 = vmatpush2.msra.mxu0 0.0
  %692 = vmatprep.subr.mxu0 0.0
  %693 = vmatpush2.msra.mxu0 0.0
  %694 = vmatprep.subr.mxu0 0.0
  %695 = vmatpush2.msra.mxu0 0.0
  %696 = vmatprep.subr.mxu0 0.0
  %697 = vmatpush2.msra.mxu0 0.0
  %698 = vmatprep.subr.mxu0 0.0
  %699 = vmatpush2.msra.mxu0 0.0
  %700 = vmatprep.subr.mxu0 0.0
  %701 = vmatpush2.msra.mxu0 0.0
  %702 = vmatprep.subr.mxu0 0.0
  %703 = vmatpush2.msra.mxu0 0.0
  %704 = vmatprep.subr.mxu0 0.0
  %705 = vmatpush2.msra.mxu0 0.0
  %706 = vmatprep.subr.mxu0 0.0
  %707 = vmatpush2.msra.mxu0 0.0
  %708 = vmatprep.mubr.f32.mxu0 0.0
  %709 = vmatmul.mubr.f32.gmra.mxu0 %v639
  %v710 = vpop.f32.mrf.mxu0
  %v711 = vadd.f32 0.0, %v710
  %v712 = vpop.f32.mrf.mxu0
  %713 = vdwg.mxu0
  %v714 = vadd.f32 %v630, %v711
  %v715 = vld [vmem:[#allocation2 + $0x6] sm:$0x3]
  %s716 = scalar_lea.vmem %s3, 72
  %v717 = vld [vmem:[%s716] sm:$0xff]
  %v718 = vld [vmem:[%s716 + $0x8] sm:$0xff]
  %v719 = vld [vmem:[%s716 + $0x10] sm:$0xf]
  %v721 = vsel %vm466, %v715, 0
  %v724 = vsel %vm483, %v719, 0
  %726 = vmatprep.subr.mxu0 0.0
  %727 = vmatpush1.msra.mxu0 0.0
  %728 = vmatprep.subr.mxu0 0.0
  %729 = vmatpush1.msra.mxu0 0.0
  %730 = vmatprep.subr.mxu0 0.0
  %731 = vmatpush1.msra.mxu0 0.0
  %732 = vmatprep.subr.mxu0 0.0
  %733 = vmatpush1.msra.mxu0 0.0
  %734 = vmatprep.subr.mxu0 0.0
  %735 = vmatpush1.msra.mxu0 0.0
  %736 = vmatprep.subr.mxu0 0.0
  %737 = vmatpush1.msra.mxu0 0.0
  %738 = vmatprep.subr.mxu0 0.0
  %739 = vmatpush1.msra.mxu0 0.0
  %740 = vmatprep.subr.mxu0 0.0
  %741 = vmatpush1.msra.mxu0 0.0
  %742 = vmatprep.subr.mxu0 0.0
  %743 = vmatpush1.msra.mxu0 0.0
  %744 = vmatprep.subr.mxu0 0.0
  %745 = vmatpush1.msra.mxu0 0.0
  %746 = vmatprep.subr.mxu0 0.0
  %747 = vmatpush1.msra.mxu0 0.0
  %748 = vmatprep.subr.mxu0 0.0
  %749 = vmatpush1.msra.mxu0 0.0
  %750 = vmatprep.subr.mxu0 0.0
  %751 = vmatpush1.msra.mxu0 0.0
  %752 = vmatprep.subr.mxu0 0.0
  %753 = vmatpush1.msra.mxu0 %v724
  %754 = vmatprep.subr.mxu0 0.0
  %755 = vmatpush1.msra.mxu0 %v718
  %756 = vmatprep.subr.mxu0 0.0
  %757 = vmatpush1.msra.mxu0 %v717
  %758 = vmatprep.subr.mxu0 0.0
  %759 = vmatpush2.msra.mxu0 0.0
  %760 = vmatprep.subr.mxu0 0.0
  %761 = vmatpush2.msra.mxu0 0.0
  %762 = vmatprep.subr.mxu0 0.0
  %763 = vmatpush2.msra.mxu0 0.0
  %764 = vmatprep.subr.mxu0 0.0
  %765 = vmatpush2.msra.mxu0 0.0
  %766 = vmatprep.subr.mxu0 0.0
  %767 = vmatpush2.msra.mxu0 0.0
  %768 = vmatprep.subr.mxu0 0.0
  %769 = vmatpush2.msra.mxu0 0.0
  %770 = vmatprep.subr.mxu0 0.0
  %771 = vmatpush2.msra.mxu0 0.0
  %772 = vmatprep.subr.mxu0 0.0
  %773 = vmatpush2.msra.mxu0 0.0
  %774 = vmatprep.subr.mxu0 0.0
  %775 = vmatpush2.msra.mxu0 0.0
  %776 = vmatprep.subr.mxu0 0.0
  %777 = vmatpush2.msra.mxu0 0.0
  %778 = vmatprep.subr.mxu0 0.0
  %779 = vmatpush2.msra.mxu0 0.0
  %780 = vmatprep.subr.mxu0 0.0
  %781 = vmatpush2.msra.mxu0 0.0
  %782 = vmatprep.subr.mxu0 0.0
  %783 = vmatpush2.msra.mxu0 0.0
  %784 = vmatprep.subr.mxu0 0.0
  %785 = vmatpush2.msra.mxu0 0.0
  %786 = vmatprep.subr.mxu0 0.0
  %787 = vmatpush2.msra.mxu0 0.0
  %788 = vmatprep.subr.mxu0 0.0
  %789 = vmatpush2.msra.mxu0 0.0
  %790 = vmatprep.mubr.f32.mxu0 0.0
  %791 = vmatmul.mubr.f32.gmra.mxu0 %v721
  %v792 = vpop.f32.mrf.mxu0
  %v793 = vadd.f32 0.0, %v792
  %v794 = vpop.f32.mrf.mxu0
  %795 = vdwg.mxu0
  %v796 = vadd.f32 %v714, %v793
  %v797 = vld [vmem:[#allocation2 + $0x8] sm:$0x3]
  %s798 = scalar_lea.vmem %s3, 96
  %v799 = vld [vmem:[%s798] sm:$0xff]
  %v800 = vld [vmem:[%s798 + $0x8] sm:$0xff]
  %v801 = vld [vmem:[%s798 + $0x10] sm:$0xf]
  %v803 = vsel %vm466, %v797, 0
  %v806 = vsel %vm483, %v801, 0
  %808 = vmatprep.subr.mxu0 0.0
  %809 = vmatpush1.msra.mxu0 0.0
  %810 = vmatprep.subr.mxu0 0.0
  %811 = vmatpush1.msra.mxu0 0.0
  %812 = vmatprep.subr.mxu0 0.0
  %813 = vmatpush1.msra.mxu0 0.0
  %814 = vmatprep.subr.mxu0 0.0
  %815 = vmatpush1.msra.mxu0 0.0
  %816 = vmatprep.subr.mxu0 0.0
  %817 = vmatpush1.msra.mxu0 0.0
  %818 = vmatprep.subr.mxu0 0.0
  %819 = vmatpush1.msra.mxu0 0.0
  %820 = vmatprep.subr.mxu0 0.0
  %821 = vmatpush1.msra.mxu0 0.0
  %822 = vmatprep.subr.mxu0 0.0
  %823 = vmatpush1.msra.mxu0 0.0
  %824 = vmatprep.subr.mxu0 0.0
  %825 = vmatpush1.msra.mxu0 0.0
  %826 = vmatprep.subr.mxu0 0.0
  %827 = vmatpush1.msra.mxu0 0.0
  %828 = vmatprep.subr.mxu0 0.0
  %829 = vmatpush1.msra.mxu0 0.0
  %830 = vmatprep.subr.mxu0 0.0
  %831 = vmatpush1.msra.mxu0 0.0
  %832 = vmatprep.subr.mxu0 0.0
  %833 = vmatpush1.msra.mxu0 0.0
  %834 = vmatprep.subr.mxu0 0.0
  %835 = vmatpush1.msra.mxu0 %v806
  %836 = vmatprep.subr.mxu0 0.0
  %837 = vmatpush1.msra.mxu0 %v800
  %838 = vmatprep.subr.mxu0 0.0
  %839 = vmatpush1.msra.mxu0 %v799
  %840 = vmatprep.subr.mxu0 0.0
  %841 = vmatpush2.msra.mxu0 0.0
  %842 = vmatprep.subr.mxu0 0.0
  %843 = vmatpush2.msra.mxu0 0.0
  %844 = vmatprep.subr.mxu0 0.0
  %845 = vmatpush2.msra.mxu0 0.0
  %846 = vmatprep.subr.mxu0 0.0
  %847 = vmatpush2.msra.mxu0 0.0
  %848 = vmatprep.subr.mxu0 0.0
  %849 = vmatpush2.msra.mxu0 0.0
  %850 = vmatprep.subr.mxu0 0.0
  %851 = vmatpush2.msra.mxu0 0.0
  %852 = vmatprep.subr.mxu0 0.0
  %853 = vmatpush2.msra.mxu0 0.0
  %854 = vmatprep.subr.mxu0 0.0
  %855 = vmatpush2.msra.mxu0 0.0
  %856 = vmatprep.subr.mxu0 0.0
  %857 = vmatpush2.msra.mxu0 0.0
  %858 = vmatprep.subr.mxu0 0.0
  %859 = vmatpush2.msra.mxu0 0.0
  %860 = vmatprep.subr.mxu0 0.0
  %861 = vmatpush2.msra.mxu0 0.0
  %862 = vmatprep.subr.mxu0 0.0
  %863 = vmatpush2.msra.mxu0 0.0
  %864 = vmatprep.subr.mxu0 0.0
  %865 = vmatpush2.msra.mxu0 0.0
  %866 = vmatprep.subr.mxu0 0.0
  %867 = vmatpush2.msra.mxu0 0.0
  %868 = vmatprep.subr.mxu0 0.0
  %869 = vmatpush2.msra.mxu0 0.0
  %870 = vmatprep.subr.mxu0 0.0
  %871 = vmatpush2.msra.mxu0 0.0
  %872 = vmatprep.mubr.f32.mxu0 0.0
  %873 = vmatmul.mubr.f32.gmra.mxu0 %v803
  %v874 = vpop.f32.mrf.mxu0
  %v875 = vadd.f32 0.0, %v874
  %v876 = vpop.f32.mrf.mxu0
  %877 = vdwg.mxu0
  %v878 = vadd.f32 %v796, %v875
  %v879 = vld [vmem:[#allocation2 + $0xa] sm:$0x3]
  %s880 = scalar_lea.vmem %s3, 120
  %v881 = vld [vmem:[%s880] sm:$0xff]
  %v882 = vld [vmem:[%s880 + $0x8] sm:$0xff]
  %v883 = vld [vmem:[%s880 + $0x10] sm:$0xf]
  %v885 = vsel %vm466, %v879, 0
  %v888 = vsel %vm483, %v883, 0
  %890 = vmatprep.subr.mxu0 0.0
  %891 = vmatpush1.msra.mxu0 0.0
  %892 = vmatprep.subr.mxu0 0.0
  %893 = vmatpush1.msra.mxu0 0.0
  %894 = vmatprep.subr.mxu0 0.0
  %895 = vmatpush1.msra.mxu0 0.0
  %896 = vmatprep.subr.mxu0 0.0
  %897 = vmatpush1.msra.mxu0 0.0
  %898 = vmatprep.subr.mxu0 0.0
  %899 = vmatpush1.msra.mxu0 0.0
  %900 = vmatprep.subr.mxu0 0.0
  %901 = vmatpush1.msra.mxu0 0.0
  %902 = vmatprep.subr.mxu0 0.0
  %903 = vmatpush1.msra.mxu0 0.0
  %904 = vmatprep.subr.mxu0 0.0
  %905 = vmatpush1.msra.mxu0 0.0
  %906 = vmatprep.subr.mxu0 0.0
  %907 = vmatpush1.msra.mxu0 0.0
  %908 = vmatprep.subr.mxu0 0.0
  %909 = vmatpush1.msra.mxu0 0.0
  %910 = vmatprep.subr.mxu0 0.0
  %911 = vmatpush1.msra.mxu0 0.0
  %912 = vmatprep.subr.mxu0 0.0
  %913 = vmatpush1.msra.mxu0 0.0
  %914 = vmatprep.subr.mxu0 0.0
  %915 = vmatpush1.msra.mxu0 0.0
  %916 = vmatprep.subr.mxu0 0.0
  %917 = vmatpush1.msra.mxu0 %v888
  %918 = vmatprep.subr.mxu0 0.0
  %919 = vmatpush1.msra.mxu0 %v882
  %920 = vmatprep.subr.mxu0 0.0
  %921 = vmatpush1.msra.mxu0 %v881
  %922 = vmatprep.subr.mxu0 0.0
  %923 = vmatpush2.msra.mxu0 0.0
  %924 = vmatprep.subr.mxu0 0.0
  %925 = vmatpush2.msra.mxu0 0.0
  %926 = vmatprep.subr.mxu0 0.0
  %927 = vmatpush2.msra.mxu0 0.0
  %928 = vmatprep.subr.mxu0 0.0
  %929 = vmatpush2.msra.mxu0 0.0
  %930 = vmatprep.subr.mxu0 0.0
  %931 = vmatpush2.msra.mxu0 0.0
  %932 = vmatprep.subr.mxu0 0.0
  %933 = vmatpush2.msra.mxu0 0.0
  %934 = vmatprep.subr.mxu0 0.0
  %935 = vmatpush2.msra.mxu0 0.0
  %936 = vmatprep.subr.mxu0 0.0
  %937 = vmatpush2.msra.mxu0 0.0
  %938 = vmatprep.subr.mxu0 0.0
  %939 = vmatpush2.msra.mxu0 0.0
  %940 = vmatprep.subr.mxu0 0.0
  %941 = vmatpush2.msra.mxu0 0.0
  %942 = vmatprep.subr.mxu0 0.0
  %943 = vmatpush2.msra.mxu0 0.0
  %944 = vmatprep.subr.mxu0 0.0
  %945 = vmatpush2.msra.mxu0 0.0
  %946 = vmatprep.subr.mxu0 0.0
  %947 = vmatpush2.msra.mxu0 0.0
  %948 = vmatprep.subr.mxu0 0.0
  %949 = vmatpush2.msra.mxu0 0.0
  %950 = vmatprep.subr.mxu0 0.0
  %951 = vmatpush2.msra.mxu0 0.0
  %952 = vmatprep.subr.mxu0 0.0
  %953 = vmatpush2.msra.mxu0 0.0
  %954 = vmatprep.mubr.f32.mxu0 0.0
  %955 = vmatmul.mubr.f32.gmra.mxu0 %v885
  %v956 = vpop.f32.mrf.mxu0
  %v957 = vadd.f32 0.0, %v956
  %v958 = vpop.f32.mrf.mxu0
  %959 = vdwg.mxu0
  %v960 = vadd.f32 %v878, %v957
  %v961 = vld [vmem:[#allocation2 + $0xc] sm:$0x3]
  %s962 = scalar_lea.vmem %s3, 144
  %v963 = vld [vmem:[%s962] sm:$0xff]
  %v964 = vld [vmem:[%s962 + $0x8] sm:$0xff]
  %v965 = vld [vmem:[%s962 + $0x10] sm:$0xf]
  %v967 = vsel %vm466, %v961, 0
  %v970 = vsel %vm483, %v965, 0
  %972 = vmatprep.subr.mxu0 0.0
  %973 = vmatpush1.msra.mxu0 0.0
  %974 = vmatprep.subr.mxu0 0.0
  %975 = vmatpush1.msra.mxu0 0.0
  %976 = vmatprep.subr.mxu0 0.0
  %977 = vmatpush1.msra.mxu0 0.0
  %978 = vmatprep.subr.mxu0 0.0
  %979 = vmatpush1.msra.mxu0 0.0
  %980 = vmatprep.subr.mxu0 0.0
  %981 = vmatpush1.msra.mxu0 0.0
  %982 = vmatprep.subr.mxu0 0.0
  %983 = vmatpush1.msra.mxu0 0.0
  %984 = vmatprep.subr.mxu0 0.0
  %985 = vmatpush1.msra.mxu0 0.0
  %986 = vmatprep.subr.mxu0 0.0
  %987 = vmatpush1.msra.mxu0 0.0
  %988 = vmatprep.subr.mxu0 0.0
  %989 = vmatpush1.msra.mxu0 0.0
  %990 = vmatprep.subr.mxu0 0.0
  %991 = vmatpush1.msra.mxu0 0.0
  %992 = vmatprep.subr.mxu0 0.0
  %993 = vmatpush1.msra.mxu0 0.0
  %994 = vmatprep.subr.mxu0 0.0
  %995 = vmatpush1.msra.mxu0 0.0
  %996 = vmatprep.subr.mxu0 0.0
  %997 = vmatpush1.msra.mxu0 0.0
  %998 = vmatprep.subr.mxu0 0.0
  %999 = vmatpush1.msra.mxu0 %v970
  %1000 = vmatprep.subr.mxu0 0.0
  %1001 = vmatpush1.msra.mxu0 %v964
  %1002 = vmatprep.subr.mxu0 0.0
  %1003 = vmatpush1.msra.mxu0 %v963
  %1004 = vmatprep.subr.mxu0 0.0
  %1005 = vmatpush2.msra.mxu0 0.0
  %1006 = vmatprep.subr.mxu0 0.0
  %1007 = vmatpush2.msra.mxu0 0.0
  %1008 = vmatprep.subr.mxu0 0.0
  %1009 = vmatpush2.msra.mxu0 0.0
  %1010 = vmatprep.subr.mxu0 0.0
  %1011 = vmatpush2.msra.mxu0 0.0
  %1012 = vmatprep.subr.mxu0 0.0
  %1013 = vmatpush2.msra.mxu0 0.0
  %1014 = vmatprep.subr.mxu0 0.0
  %1015 = vmatpush2.msra.mxu0 0.0
  %1016 = vmatprep.subr.mxu0 0.0
  %1017 = vmatpush2.msra.mxu0 0.0
  %1018 = vmatprep.subr.mxu0 0.0
  %1019 = vmatpush2.msra.mxu0 0.0
  %1020 = vmatprep.subr.mxu0 0.0
  %1021 = vmatpush2.msra.mxu0 0.0
  %1022 = vmatprep.subr.mxu0 0.0
  %1023 = vmatpush2.msra.mxu0 0.0
  %1024 = vmatprep.subr.mxu0 0.0
  %1025 = vmatpush2.msra.mxu0 0.0
  %1026 = vmatprep.subr.mxu0 0.0
  %1027 = vmatpush2.msra.mxu0 0.0
  %1028 = vmatprep.subr.mxu0 0.0
  %1029 = vmatpush2.msra.mxu0 0.0
  %1030 = vmatprep.subr.mxu0 0.0
  %1031 = vmatpush2.msra.mxu0 0.0
  %1032 = vmatprep.subr.mxu0 0.0
  %1033 = vmatpush2.msra.mxu0 0.0
  %1034 = vmatprep.subr.mxu0 0.0
  %1035 = vmatpush2.msra.mxu0 0.0
  %1036 = vmatprep.mubr.f32.mxu0 0.0
  %1037 = vmatmul.mubr.f32.gmra.mxu0 %v967
  %v1038 = vpop.f32.mrf.mxu0
  %v1039 = vadd.f32 0.0, %v1038
  %v1040 = vpop.f32.mrf.mxu0
  %1041 = vdwg.mxu0
  %v1042 = vadd.f32 %v960, %v1039
  %v1043 = vld [vmem:[#allocation2 + $0xe] sm:$0x3]
  %s1044 = scalar_lea.vmem %s3, 168
  %v1045 = vld [vmem:[%s1044] sm:$0xff]
  %v1046 = vld [vmem:[%s1044 + $0x8] sm:$0xff]
  %v1047 = vld [vmem:[%s1044 + $0x10] sm:$0xf]
  %v1049 = vsel %vm466, %v1043, 0
  %v1052 = vsel %vm483, %v1047, 0
  %1054 = vmatprep.subr.mxu0 0.0
  %1055 = vmatpush1.msra.mxu0 0.0
  %1056 = vmatprep.subr.mxu0 0.0
  %1057 = vmatpush1.msra.mxu0 0.0
  %1058 = vmatprep.subr.mxu0 0.0
  %1059 = vmatpush1.msra.mxu0 0.0
  %1060 = vmatprep.subr.mxu0 0.0
  %1061 = vmatpush1.msra.mxu0 0.0
  %1062 = vmatprep.subr.mxu0 0.0
  %1063 = vmatpush1.msra.mxu0 0.0
  %1064 = vmatprep.subr.mxu0 0.0
  %1065 = vmatpush1.msra.mxu0 0.0
  %1066 = vmatprep.subr.mxu0 0.0
  %1067 = vmatpush1.msra.mxu0 0.0
  %1068 = vmatprep.subr.mxu0 0.0
  %1069 = vmatpush1.msra.mxu0 0.0
  %1070 = vmatprep.subr.mxu0 0.0
  %1071 = vmatpush1.msra.mxu0 0.0
  %1072 = vmatprep.subr.mxu0 0.0
  %1073 = vmatpush1.msra.mxu0 0.0
  %1074 = vmatprep.subr.mxu0 0.0
  %1075 = vmatpush1.msra.mxu0 0.0
  %1076 = vmatprep.subr.mxu0 0.0
  %1077 = vmatpush1.msra.mxu0 0.0
  %1078 = vmatprep.subr.mxu0 0.0
  %1079 = vmatpush1.msra.mxu0 0.0
  %1080 = vmatprep.subr.mxu0 0.0
  %1081 = vmatpush1.msra.mxu0 %v1052
  %1082 = vmatprep.subr.mxu0 0.0
  %1083 = vmatpush1.msra.mxu0 %v1046
  %1084 = vmatprep.subr.mxu0 0.0
  %1085 = vmatpush1.msra.mxu0 %v1045
  %1086 = vmatprep.subr.mxu0 0.0
  %1087 = vmatpush2.msra.mxu0 0.0
  %1088 = vmatprep.subr.mxu0 0.0
  %1089 = vmatpush2.msra.mxu0 0.0
  %1090 = vmatprep.subr.mxu0 0.0
  %1091 = vmatpush2.msra.mxu0 0.0
  %1092 = vmatprep.subr.mxu0 0.0
  %1093 = vmatpush2.msra.mxu0 0.0
  %1094 = vmatprep.subr.mxu0 0.0
  %1095 = vmatpush2.msra.mxu0 0.0
  %1096 = vmatprep.subr.mxu0 0.0
  %1097 = vmatpush2.msra.mxu0 0.0
  %1098 = vmatprep.subr.mxu0 0.0
  %1099 = vmatpush2.msra.mxu0 0.0
  %1100 = vmatprep.subr.mxu0 0.0
  %1101 = vmatpush2.msra.mxu0 0.0
  %1102 = vmatprep.subr.mxu0 0.0
  %1103 = vmatpush2.msra.mxu0 0.0
  %1104 = vmatprep.subr.mxu0 0.0
  %1105 = vmatpush2.msra.mxu0 0.0
  %1106 = vmatprep.subr.mxu0 0.0
  %1107 = vmatpush2.msra.mxu0 0.0
  %1108 = vmatprep.subr.mxu0 0.0
  %1109 = vmatpush2.msra.mxu0 0.0
  %1110 = vmatprep.subr.mxu0 0.0
  %1111 = vmatpush2.msra.mxu0 0.0
  %1112 = vmatprep.subr.mxu0 0.0
  %1113 = vmatpush2.msra.mxu0 0.0
  %1114 = vmatprep.subr.mxu0 0.0
  %1115 = vmatpush2.msra.mxu0 0.0
  %1116 = vmatprep.subr.mxu0 0.0
  %1117 = vmatpush2.msra.mxu0 0.0
  %1118 = vmatprep.mubr.f32.mxu0 0.0
  %1119 = vmatmul.mubr.f32.gmra.mxu0 %v1049
  %v1120 = vpop.f32.mrf.mxu0
  %v1121 = vadd.f32 0.0, %v1120
  %v1122 = vpop.f32.mrf.mxu0
  %1123 = vdwg.mxu0
  %v1124 = vadd.f32 %v1042, %v1121
  %v1125 = vld [vmem:[#allocation2 + $0x10] sm:$0x3]
  %s1126 = scalar_lea.vmem %s3, 192
  %v1127 = vld [vmem:[%s1126] sm:$0xff]
  %v1128 = vld [vmem:[%s1126 + $0x8] sm:$0xff]
  %v1129 = vld [vmem:[%s1126 + $0x10] sm:$0xf]
  %v1131 = vsel %vm466, %v1125, 0
  %v1134 = vsel %vm483, %v1129, 0
  %1136 = vmatprep.subr.mxu0 0.0
  %1137 = vmatpush1.msra.mxu0 0.0
  %1138 = vmatprep.subr.mxu0 0.0
  %1139 = vmatpush1.msra.mxu0 0.0
  %1140 = vmatprep.subr.mxu0 0.0
  %1141 = vmatpush1.msra.mxu0 0.0
  %1142 = vmatprep.subr.mxu0 0.0
  %1143 = vmatpush1.msra.mxu0 0.0
  %1144 = vmatprep.subr.mxu0 0.0
  %1145 = vmatpush1.msra.mxu0 0.0
  %1146 = vmatprep.subr.mxu0 0.0
  %1147 = vmatpush1.msra.mxu0 0.0
  %1148 = vmatprep.subr.mxu0 0.0
  %1149 = vmatpush1.msra.mxu0 0.0
  %1150 = vmatprep.subr.mxu0 0.0
  %1151 = vmatpush1.msra.mxu0 0.0
  %1152 = vmatprep.subr.mxu0 0.0
  %1153 = vmatpush1.msra.mxu0 0.0
  %1154 = vmatprep.subr.mxu0 0.0
  %1155 = vmatpush1.msra.mxu0 0.0
  %1156 = vmatprep.subr.mxu0 0.0
  %1157 = vmatpush1.msra.mxu0 0.0
  %1158 = vmatprep.subr.mxu0 0.0
  %1159 = vmatpush1.msra.mxu0 0.0
  %1160 = vmatprep.subr.mxu0 0.0
  %1161 = vmatpush1.msra.mxu0 0.0
  %1162 = vmatprep.subr.mxu0 0.0
  %1163 = vmatpush1.msra.mxu0 %v1134
  %1164 = vmatprep.subr.mxu0 0.0
  %1165 = vmatpush1.msra.mxu0 %v1128
  %1166 = vmatprep.subr.mxu0 0.0
  %1167 = vmatpush1.msra.mxu0 %v1127
  %1168 = vmatprep.subr.mxu0 0.0
  %1169 = vmatpush2.msra.mxu0 0.0
  %1170 = vmatprep.subr.mxu0 0.0
  %1171 = vmatpush2.msra.mxu0 0.0
  %1172 = vmatprep.subr.mxu0 0.0
  %1173 = vmatpush2.msra.mxu0 0.0
  %1174 = vmatprep.subr.mxu0 0.0
  %1175 = vmatpush2.msra.mxu0 0.0
  %1176 = vmatprep.subr.mxu0 0.0
  %1177 = vmatpush2.msra.mxu0 0.0
  %1178 = vmatprep.subr.mxu0 0.0
  %1179 = vmatpush2.msra.mxu0 0.0
  %1180 = vmatprep.subr.mxu0 0.0
  %1181 = vmatpush2.msra.mxu0 0.0
  %1182 = vmatprep.subr.mxu0 0.0
  %1183 = vmatpush2.msra.mxu0 0.0
  %1184 = vmatprep.subr.mxu0 0.0
  %1185 = vmatpush2.msra.mxu0 0.0
  %1186 = vmatprep.subr.mxu0 0.0
  %1187 = vmatpush2.msra.mxu0 0.0
  %1188 = vmatprep.subr.mxu0 0.0
  %1189 = vmatpush2.msra.mxu0 0.0
  %1190 = vmatprep.subr.mxu0 0.0
  %1191 = vmatpush2.msra.mxu0 0.0
  %1192 = vmatprep.subr.mxu0 0.0
  %1193 = vmatpush2.msra.mxu0 0.0
  %1194 = vmatprep.subr.mxu0 0.0
  %1195 = vmatpush2.msra.mxu0 0.0
  %1196 = vmatprep.subr.mxu0 0.0
  %1197 = vmatpush2.msra.mxu0 0.0
  %1198 = vmatprep.subr.mxu0 0.0
  %1199 = vmatpush2.msra.mxu0 0.0
  %1200 = vmatprep.mubr.f32.mxu0 0.0
  %1201 = vmatmul.mubr.f32.gmra.mxu0 %v1131
  %v1202 = vpop.f32.mrf.mxu0
  %v1203 = vadd.f32 0.0, %v1202
  %v1204 = vpop.f32.mrf.mxu0
  %1205 = vdwg.mxu0
  %v1206 = vadd.f32 %v1124, %v1203
  %v1207 = vld [vmem:[#allocation2 + $0x12] sm:$0x3]
  %s1208 = scalar_lea.vmem %s3, 216
  %v1209 = vld [vmem:[%s1208] sm:$0xff]
  %v1210 = vld [vmem:[%s1208 + $0x8] sm:$0xff]
  %v1211 = vld [vmem:[%s1208 + $0x10] sm:$0xf]
  %v1213 = vsel %vm466, %v1207, 0
  %v1216 = vsel %vm483, %v1211, 0
  %1218 = vmatprep.subr.mxu0 0.0
  %1219 = vmatpush1.msra.mxu0 0.0
  %1220 = vmatprep.subr.mxu0 0.0
  %1221 = vmatpush1.msra.mxu0 0.0
  %1222 = vmatprep.subr.mxu0 0.0
  %1223 = vmatpush1.msra.mxu0 0.0
  %1224 = vmatprep.subr.mxu0 0.0
  %1225 = vmatpush1.msra.mxu0 0.0
  %1226 = vmatprep.subr.mxu0 0.0
  %1227 = vmatpush1.msra.mxu0 0.0
  %1228 = vmatprep.subr.mxu0 0.0
  %1229 = vmatpush1.msra.mxu0 0.0
  %1230 = vmatprep.subr.mxu0 0.0
  %1231 = vmatpush1.msra.mxu0 0.0
  %1232 = vmatprep.subr.mxu0 0.0
  %1233 = vmatpush1.msra.mxu0 0.0
  %1234 = vmatprep.subr.mxu0 0.0
  %1235 = vmatpush1.msra.mxu0 0.0
  %1236 = vmatprep.subr.mxu0 0.0
  %1237 = vmatpush1.msra.mxu0 0.0
  %1238 = vmatprep.subr.mxu0 0.0
  %1239 = vmatpush1.msra.mxu0 0.0
  %1240 = vmatprep.subr.mxu0 0.0
  %1241 = vmatpush1.msra.mxu0 0.0
  %1242 = vmatprep.subr.mxu0 0.0
  %1243 = vmatpush1.msra.mxu0 0.0
  %1244 = vmatprep.subr.mxu0 0.0
  %1245 = vmatpush1.msra.mxu0 %v1216
  %1246 = vmatprep.subr.mxu0 0.0
  %1247 = vmatpush1.msra.mxu0 %v1210
  %1248 = vmatprep.subr.mxu0 0.0
  %1249 = vmatpush1.msra.mxu0 %v1209
  %1250 = vmatprep.subr.mxu0 0.0
  %1251 = vmatpush2.msra.mxu0 0.0
  %1252 = vmatprep.subr.mxu0 0.0
  %1253 = vmatpush2.msra.mxu0 0.0
  %1254 = vmatprep.subr.mxu0 0.0
  %1255 = vmatpush2.msra.mxu0 0.0
  %1256 = vmatprep.subr.mxu0 0.0
  %1257 = vmatpush2.msra.mxu0 0.0
  %1258 = vmatprep.subr.mxu0 0.0
  %1259 = vmatpush2.msra.mxu0 0.0
  %1260 = vmatprep.subr.mxu0 0.0
  %1261 = vmatpush2.msra.mxu0 0.0
  %1262 = vmatprep.subr.mxu0 0.0
  %1263 = vmatpush2.msra.mxu0 0.0
  %1264 = vmatprep.subr.mxu0 0.0
  %1265 = vmatpush2.msra.mxu0 0.0
  %1266 = vmatprep.subr.mxu0 0.0
  %1267 = vmatpush2.msra.mxu0 0.0
  %1268 = vmatprep.subr.mxu0 0.0
  %1269 = vmatpush2.msra.mxu0 0.0
  %1270 = vmatprep.subr.mxu0 0.0
  %1271 = vmatpush2.msra.mxu0 0.0
  %1272 = vmatprep.subr.mxu0 0.0
  %1273 = vmatpush2.msra.mxu0 0.0
  %1274 = vmatprep.subr.mxu0 0.0
  %1275 = vmatpush2.msra.mxu0 0.0
  %1276 = vmatprep.subr.mxu0 0.0
  %1277 = vmatpush2.msra.mxu0 0.0
  %1278 = vmatprep.subr.mxu0 0.0
  %1279 = vmatpush2.msra.mxu0 0.0
  %1280 = vmatprep.subr.mxu0 0.0
  %1281 = vmatpush2.msra.mxu0 0.0
  %1282 = vmatprep.mubr.f32.mxu0 0.0
  %1283 = vmatmul.mubr.f32.gmra.mxu0 %v1213
  %v1284 = vpop.f32.mrf.mxu0
  %v1285 = vadd.f32 0.0, %v1284
  %v1286 = vpop.f32.mrf.mxu0
  %1287 = vdwg.mxu0
  %v1288 = vadd.f32 %v1206, %v1285
  %v1289 = vld [vmem:[#allocation2 + $0x14] sm:$0x3]
  %s1290 = scalar_lea.vmem %s3, 240
  %v1291 = vld [vmem:[%s1290] sm:$0xff]
  %v1292 = vld [vmem:[%s1290 + $0x8] sm:$0xff]
  %v1293 = vld [vmem:[%s1290 + $0x10] sm:$0xf]
  %v1295 = vsel %vm466, %v1289, 0
  %v1298 = vsel %vm483, %v1293, 0
  %1300 = vmatprep.subr.mxu0 0.0
  %1301 = vmatpush1.msra.mxu0 0.0
  %1302 = vmatprep.subr.mxu0 0.0
  %1303 = vmatpush1.msra.mxu0 0.0
  %1304 = vmatprep.subr.mxu0 0.0
  %1305 = vmatpush1.msra.mxu0 0.0
  %1306 = vmatprep.subr.mxu0 0.0
  %1307 = vmatpush1.msra.mxu0 0.0
  %1308 = vmatprep.subr.mxu0 0.0
  %1309 = vmatpush1.msra.mxu0 0.0
  %1310 = vmatprep.subr.mxu0 0.0
  %1311 = vmatpush1.msra.mxu0 0.0
  %1312 = vmatprep.subr.mxu0 0.0
  %1313 = vmatpush1.msra.mxu0 0.0
  %1314 = vmatprep.subr.mxu0 0.0
  %1315 = vmatpush1.msra.mxu0 0.0
  %1316 = vmatprep.subr.mxu0 0.0
  %1317 = vmatpush1.msra.mxu0 0.0
  %1318 = vmatprep.subr.mxu0 0.0
  %1319 = vmatpush1.msra.mxu0 0.0
  %1320 = vmatprep.subr.mxu0 0.0
  %1321 = vmatpush1.msra.mxu0 0.0
  %1322 = vmatprep.subr.mxu0 0.0
  %1323 = vmatpush1.msra.mxu0 0.0
  %1324 = vmatprep.subr.mxu0 0.0
  %1325 = vmatpush1.msra.mxu0 0.0
  %1326 = vmatprep.subr.mxu0 0.0
  %1327 = vmatpush1.msra.mxu0 %v1298
  %1328 = vmatprep.subr.mxu0 0.0
  %1329 = vmatpush1.msra.mxu0 %v1292
  %1330 = vmatprep.subr.mxu0 0.0
  %1331 = vmatpush1.msra.mxu0 %v1291
  %1332 = vmatprep.subr.mxu0 0.0
  %1333 = vmatpush2.msra.mxu0 0.0
  %1334 = vmatprep.subr.mxu0 0.0
  %1335 = vmatpush2.msra.mxu0 0.0
  %1336 = vmatprep.subr.mxu0 0.0
  %1337 = vmatpush2.msra.mxu0 0.0
  %1338 = vmatprep.subr.mxu0 0.0
  %1339 = vmatpush2.msra.mxu0 0.0
  %1340 = vmatprep.subr.mxu0 0.0
  %1341 = vmatpush2.msra.mxu0 0.0
  %1342 = vmatprep.subr.mxu0 0.0
  %1343 = vmatpush2.msra.mxu0 0.0
  %1344 = vmatprep.subr.mxu0 0.0
  %1345 = vmatpush2.msra.mxu0 0.0
  %1346 = vmatprep.subr.mxu0 0.0
  %1347 = vmatpush2.msra.mxu0 0.0
  %1348 = vmatprep.subr.mxu0 0.0
  %1349 = vmatpush2.msra.mxu0 0.0
  %1350 = vmatprep.subr.mxu0 0.0
  %1351 = vmatpush2.msra.mxu0 0.0
  %1352 = vmatprep.subr.mxu0 0.0
  %1353 = vmatpush2.msra.mxu0 0.0
  %1354 = vmatprep.subr.mxu0 0.0
  %1355 = vmatpush2.msra.mxu0 0.0
  %1356 = vmatprep.subr.mxu0 0.0
  %1357 = vmatpush2.msra.mxu0 0.0
  %1358 = vmatprep.subr.mxu0 0.0
  %1359 = vmatpush2.msra.mxu0 0.0
  %1360 = vmatprep.subr.mxu0 0.0
  %1361 = vmatpush2.msra.mxu0 0.0
  %1362 = vmatprep.subr.mxu0 0.0
  %1363 = vmatpush2.msra.mxu0 0.0
  %1364 = vmatprep.mubr.f32.mxu0 0.0
  %1365 = vmatmul.mubr.f32.gmra.mxu0 %v1295
  %v1366 = vpop.f32.mrf.mxu0
  %v1367 = vadd.f32 0.0, %v1366
  %v1368 = vpop.f32.mrf.mxu0
  %1369 = vdwg.mxu0
  %v1370 = vadd.f32 %v1288, %v1367
  %v1371 = vld [vmem:[#allocation2 + $0x16] sm:$0x3]
  %s1372 = scalar_lea.vmem %s3, 264
  %v1373 = vld [vmem:[%s1372] sm:$0xff]
  %v1374 = vld [vmem:[%s1372 + $0x8] sm:$0xff]
  %v1375 = vld [vmem:[%s1372 + $0x10] sm:$0xf]
  %v1377 = vsel %vm466, %v1371, 0
  %v1380 = vsel %vm483, %v1375, 0
  %1382 = vmatprep.subr.mxu0 0.0
  %1383 = vmatpush1.msra.mxu0 0.0
  %1384 = vmatprep.subr.mxu0 0.0
  %1385 = vmatpush1.msra.mxu0 0.0
  %1386 = vmatprep.subr.mxu0 0.0
  %1387 = vmatpush1.msra.mxu0 0.0
  %1388 = vmatprep.subr.mxu0 0.0
  %1389 = vmatpush1.msra.mxu0 0.0
  %1390 = vmatprep.subr.mxu0 0.0
  %1391 = vmatpush1.msra.mxu0 0.0
  %1392 = vmatprep.subr.mxu0 0.0
  %1393 = vmatpush1.msra.mxu0 0.0
  %1394 = vmatprep.subr.mxu0 0.0
  %1395 = vmatpush1.msra.mxu0 0.0
  %1396 = vmatprep.subr.mxu0 0.0
  %1397 = vmatpush1.msra.mxu0 0.0
  %1398 = vmatprep.subr.mxu0 0.0
  %1399 = vmatpush1.msra.mxu0 0.0
  %1400 = vmatprep.subr.mxu0 0.0
  %1401 = vmatpush1.msra.mxu0 0.0
  %1402 = vmatprep.subr.mxu0 0.0
  %1403 = vmatpush1.msra.mxu0 0.0
  %1404 = vmatprep.subr.mxu0 0.0
  %1405 = vmatpush1.msra.mxu0 0.0
  %1406 = vmatprep.subr.mxu0 0.0
  %1407 = vmatpush1.msra.mxu0 0.0
  %1408 = vmatprep.subr.mxu0 0.0
  %1409 = vmatpush1.msra.mxu0 %v1380
  %1410 = vmatprep.subr.mxu0 0.0
  %1411 = vmatpush1.msra.mxu0 %v1374
  %1412 = vmatprep.subr.mxu0 0.0
  %1413 = vmatpush1.msra.mxu0 %v1373
  %1414 = vmatprep.subr.mxu0 0.0
  %1415 = vmatpush2.msra.mxu0 0.0
  %1416 = vmatprep.subr.mxu0 0.0
  %1417 = vmatpush2.msra.mxu0 0.0
  %1418 = vmatprep.subr.mxu0 0.0
  %1419 = vmatpush2.msra.mxu0 0.0
  %1420 = vmatprep.subr.mxu0 0.0
  %1421 = vmatpush2.msra.mxu0 0.0
  %1422 = vmatprep.subr.mxu0 0.0
  %1423 = vmatpush2.msra.mxu0 0.0
  %1424 = vmatprep.subr.mxu0 0.0
  %1425 = vmatpush2.msra.mxu0 0.0
  %1426 = vmatprep.subr.mxu0 0.0
  %1427 = vmatpush2.msra.mxu0 0.0
  %1428 = vmatprep.subr.mxu0 0.0
  %1429 = vmatpush2.msra.mxu0 0.0
  %1430 = vmatprep.subr.mxu0 0.0
  %1431 = vmatpush2.msra.mxu0 0.0
  %1432 = vmatprep.subr.mxu0 0.0
  %1433 = vmatpush2.msra.mxu0 0.0
  %1434 = vmatprep.subr.mxu0 0.0
  %1435 = vmatpush2.msra.mxu0 0.0
  %1436 = vmatprep.subr.mxu0 0.0
  %1437 = vmatpush2.msra.mxu0 0.0
  %1438 = vmatprep.subr.mxu0 0.0
  %1439 = vmatpush2.msra.mxu0 0.0
  %1440 = vmatprep.subr.mxu0 0.0
  %1441 = vmatpush2.msra.mxu0 0.0
  %1442 = vmatprep.subr.mxu0 0.0
  %1443 = vmatpush2.msra.mxu0 0.0
  %1444 = vmatprep.subr.mxu0 0.0
  %1445 = vmatpush2.msra.mxu0 0.0
  %1446 = vmatprep.mubr.f32.mxu0 0.0
  %1447 = vmatmul.mubr.f32.gmra.mxu0 %v1377
  %v1448 = vpop.f32.mrf.mxu0
  %v1449 = vadd.f32 0.0, %v1448
  %v1450 = vpop.f32.mrf.mxu0
  %1451 = vdwg.mxu0
  %v1452 = vadd.f32 %v1370, %v1449
  %v1453 = vld [vmem:[#allocation2 + $0x18] sm:$0x3]
  %s1454 = scalar_lea.vmem %s3, 288
  %v1455 = vld [vmem:[%s1454] sm:$0xff]
  %v1456 = vld [vmem:[%s1454 + $0x8] sm:$0xff]
  %v1457 = vld [vmem:[%s1454 + $0x10] sm:$0xf]
  %v1459 = vsel %vm466, %v1453, 0
  %v1462 = vsel %vm483, %v1457, 0
  %1464 = vmatprep.subr.mxu0 0.0
  %1465 = vmatpush1.msra.mxu0 0.0
  %1466 = vmatprep.subr.mxu0 0.0
  %1467 = vmatpush1.msra.mxu0 0.0
  %1468 = vmatprep.subr.mxu0 0.0
  %1469 = vmatpush1.msra.mxu0 0.0
  %1470 = vmatprep.subr.mxu0 0.0
  %1471 = vmatpush1.msra.mxu0 0.0
  %1472 = vmatprep.subr.mxu0 0.0
  %1473 = vmatpush1.msra.mxu0 0.0
  %1474 = vmatprep.subr.mxu0 0.0
  %1475 = vmatpush1.msra.mxu0 0.0
  %1476 = vmatprep.subr.mxu0 0.0
  %1477 = vmatpush1.msra.mxu0 0.0
  %1478 = vmatprep.subr.mxu0 0.0
  %1479 = vmatpush1.msra.mxu0 0.0
  %1480 = vmatprep.subr.mxu0 0.0
  %1481 = vmatpush1.msra.mxu0 0.0
  %1482 = vmatprep.subr.mxu0 0.0
  %1483 = vmatpush1.msra.mxu0 0.0
  %1484 = vmatprep.subr.mxu0 0.0
  %1485 = vmatpush1.msra.mxu0 0.0
  %1486 = vmatprep.subr.mxu0 0.0
  %1487 = vmatpush1.msra.mxu0 0.0
  %1488 = vmatprep.subr.mxu0 0.0
  %1489 = vmatpush1.msra.mxu0 0.0
  %1490 = vmatprep.subr.mxu0 0.0
  %1491 = vmatpush1.msra.mxu0 %v1462
  %1492 = vmatprep.subr.mxu0 0.0
  %1493 = vmatpush1.msra.mxu0 %v1456
  %1494 = vmatprep.subr.mxu0 0.0
  %1495 = vmatpush1.msra.mxu0 %v1455
  %1496 = vmatprep.subr.mxu0 0.0
  %1497 = vmatpush2.msra.mxu0 0.0
  %1498 = vmatprep.subr.mxu0 0.0
  %1499 = vmatpush2.msra.mxu0 0.0
  %1500 = vmatprep.subr.mxu0 0.0
  %1501 = vmatpush2.msra.mxu0 0.0
  %1502 = vmatprep.subr.mxu0 0.0
  %1503 = vmatpush2.msra.mxu0 0.0
  %1504 = vmatprep.subr.mxu0 0.0
  %1505 = vmatpush2.msra.mxu0 0.0
  %1506 = vmatprep.subr.mxu0 0.0
  %1507 = vmatpush2.msra.mxu0 0.0
  %1508 = vmatprep.subr.mxu0 0.0
  %1509 = vmatpush2.msra.mxu0 0.0
  %1510 = vmatprep.subr.mxu0 0.0
  %1511 = vmatpush2.msra.mxu0 0.0
  %1512 = vmatprep.subr.mxu0 0.0
  %1513 = vmatpush2.msra.mxu0 0.0
  %1514 = vmatprep.subr.mxu0 0.0
  %1515 = vmatpush2.msra.mxu0 0.0
  %1516 = vmatprep.subr.mxu0 0.0
  %1517 = vmatpush2.msra.mxu0 0.0
  %1518 = vmatprep.subr.mxu0 0.0
  %1519 = vmatpush2.msra.mxu0 0.0
  %1520 = vmatprep.subr.mxu0 0.0
  %1521 = vmatpush2.msra.mxu0 0.0
  %1522 = vmatprep.subr.mxu0 0.0
  %1523 = vmatpush2.msra.mxu0 0.0
  %1524 = vmatprep.subr.mxu0 0.0
  %1525 = vmatpush2.msra.mxu0 0.0
  %1526 = vmatprep.subr.mxu0 0.0
  %1527 = vmatpush2.msra.mxu0 0.0
  %1528 = vmatprep.mubr.f32.mxu0 0.0
  %1529 = vmatmul.mubr.f32.gmra.mxu0 %v1459
  %v1530 = vpop.f32.mrf.mxu0
  %v1531 = vadd.f32 0.0, %v1530
  %v1532 = vpop.f32.mrf.mxu0
  %1533 = vdwg.mxu0
  %v1534 = vadd.f32 %v1452, %v1531
  %v1535 = vld [vmem:[#allocation2 + $0x1a] sm:$0x3]
  %s1536 = scalar_lea.vmem %s3, 312
  %v1537 = vld [vmem:[%s1536] sm:$0xff]
  %v1538 = vld [vmem:[%s1536 + $0x8] sm:$0xff]
  %v1539 = vld [vmem:[%s1536 + $0x10] sm:$0xf]
  %v1541 = vsel %vm466, %v1535, 0
  %v1544 = vsel %vm483, %v1539, 0
  %1546 = vmatprep.subr.mxu0 0.0
  %1547 = vmatpush1.msra.mxu0 0.0
  %1548 = vmatprep.subr.mxu0 0.0
  %1549 = vmatpush1.msra.mxu0 0.0
  %1550 = vmatprep.subr.mxu0 0.0
  %1551 = vmatpush1.msra.mxu0 0.0
  %1552 = vmatprep.subr.mxu0 0.0
  %1553 = vmatpush1.msra.mxu0 0.0
  %1554 = vmatprep.subr.mxu0 0.0
  %1555 = vmatpush1.msra.mxu0 0.0
  %1556 = vmatprep.subr.mxu0 0.0
  %1557 = vmatpush1.msra.mxu0 0.0
  %1558 = vmatprep.subr.mxu0 0.0
  %1559 = vmatpush1.msra.mxu0 0.0
  %1560 = vmatprep.subr.mxu0 0.0
  %1561 = vmatpush1.msra.mxu0 0.0
  %1562 = vmatprep.subr.mxu0 0.0
  %1563 = vmatpush1.msra.mxu0 0.0
  %1564 = vmatprep.subr.mxu0 0.0
  %1565 = vmatpush1.msra.mxu0 0.0
  %1566 = vmatprep.subr.mxu0 0.0
  %1567 = vmatpush1.msra.mxu0 0.0
  %1568 = vmatprep.subr.mxu0 0.0
  %1569 = vmatpush1.msra.mxu0 0.0
  %1570 = vmatprep.subr.mxu0 0.0
  %1571 = vmatpush1.msra.mxu0 0.0
  %1572 = vmatprep.subr.mxu0 0.0
  %1573 = vmatpush1.msra.mxu0 %v1544
  %1574 = vmatprep.subr.mxu0 0.0
  %1575 = vmatpush1.msra.mxu0 %v1538
  %1576 = vmatprep.subr.mxu0 0.0
  %1577 = vmatpush1.msra.mxu0 %v1537
  %1578 = vmatprep.subr.mxu0 0.0
  %1579 = vmatpush2.msra.mxu0 0.0
  %1580 = vmatprep.subr.mxu0 0.0
  %1581 = vmatpush2.msra.mxu0 0.0
  %1582 = vmatprep.subr.mxu0 0.0
  %1583 = vmatpush2.msra.mxu0 0.0
  %1584 = vmatprep.subr.mxu0 0.0
  %1585 = vmatpush2.msra.mxu0 0.0
  %1586 = vmatprep.subr.mxu0 0.0
  %1587 = vmatpush2.msra.mxu0 0.0
  %1588 = vmatprep.subr.mxu0 0.0
  %1589 = vmatpush2.msra.mxu0 0.0
  %1590 = vmatprep.subr.mxu0 0.0
  %1591 = vmatpush2.msra.mxu0 0.0
  %1592 = vmatprep.subr.mxu0 0.0
  %1593 = vmatpush2.msra.mxu0 0.0
  %1594 = vmatprep.subr.mxu0 0.0
  %1595 = vmatpush2.msra.mxu0 0.0
  %1596 = vmatprep.subr.mxu0 0.0
  %1597 = vmatpush2.msra.mxu0 0.0
  %1598 = vmatprep.subr.mxu0 0.0
  %1599 = vmatpush2.msra.mxu0 0.0
  %1600 = vmatprep.subr.mxu0 0.0
  %1601 = vmatpush2.msra.mxu0 0.0
  %1602 = vmatprep.subr.mxu0 0.0
  %1603 = vmatpush2.msra.mxu0 0.0
  %1604 = vmatprep.subr.mxu0 0.0
  %1605 = vmatpush2.msra.mxu0 0.0
  %1606 = vmatprep.subr.mxu0 0.0
  %1607 = vmatpush2.msra.mxu0 0.0
  %1608 = vmatprep.subr.mxu0 0.0
  %1609 = vmatpush2.msra.mxu0 0.0
  %1610 = vmatprep.mubr.f32.mxu0 0.0
  %1611 = vmatmul.mubr.f32.gmra.mxu0 %v1541
  %v1612 = vpop.f32.mrf.mxu0
  %v1613 = vadd.f32 0.0, %v1612
  %v1614 = vpop.f32.mrf.mxu0
  %1615 = vdwg.mxu0
  %v1616 = vadd.f32 %v1534, %v1613
  %v1617 = vld [vmem:[#allocation2 + $0x1c] sm:$0x3]
  %s1618 = scalar_lea.vmem %s3, 336
  %v1619 = vld [vmem:[%s1618] sm:$0xff]
  %v1620 = vld [vmem:[%s1618 + $0x8] sm:$0xff]
  %v1621 = vld [vmem:[%s1618 + $0x10] sm:$0xf]
  %v1623 = vsel %vm466, %v1617, 0
  %v1626 = vsel %vm483, %v1621, 0
  %1628 = vmatprep.subr.mxu0 0.0
  %1629 = vmatpush1.msra.mxu0 0.0
  %1630 = vmatprep.subr.mxu0 0.0
  %1631 = vmatpush1.msra.mxu0 0.0
  %1632 = vmatprep.subr.mxu0 0.0
  %1633 = vmatpush1.msra.mxu0 0.0
  %1634 = vmatprep.subr.mxu0 0.0
  %1635 = vmatpush1.msra.mxu0 0.0
  %1636 = vmatprep.subr.mxu0 0.0
  %1637 = vmatpush1.msra.mxu0 0.0
  %1638 = vmatprep.subr.mxu0 0.0
  %1639 = vmatpush1.msra.mxu0 0.0
  %1640 = vmatprep.subr.mxu0 0.0
  %1641 = vmatpush1.msra.mxu0 0.0
  %1642 = vmatprep.subr.mxu0 0.0
  %1643 = vmatpush1.msra.mxu0 0.0
  %1644 = vmatprep.subr.mxu0 0.0
  %1645 = vmatpush1.msra.mxu0 0.0
  %1646 = vmatprep.subr.mxu0 0.0
  %1647 = vmatpush1.msra.mxu0 0.0
  %1648 = vmatprep.subr.mxu0 0.0
  %1649 = vmatpush1.msra.mxu0 0.0
  %1650 = vmatprep.subr.mxu0 0.0
  %1651 = vmatpush1.msra.mxu0 0.0
  %1652 = vmatprep.subr.mxu0 0.0
  %1653 = vmatpush1.msra.mxu0 0.0
  %1654 = vmatprep.subr.mxu0 0.0
  %1655 = vmatpush1.msra.mxu0 %v1626
  %1656 = vmatprep.subr.mxu0 0.0
  %1657 = vmatpush1.msra.mxu0 %v1620
  %1658 = vmatprep.subr.mxu0 0.0
  %1659 = vmatpush1.msra.mxu0 %v1619
  %1660 = vmatprep.subr.mxu0 0.0
  %1661 = vmatpush2.msra.mxu0 0.0
  %1662 = vmatprep.subr.mxu0 0.0
  %1663 = vmatpush2.msra.mxu0 0.0
  %1664 = vmatprep.subr.mxu0 0.0
  %1665 = vmatpush2.msra.mxu0 0.0
  %1666 = vmatprep.subr.mxu0 0.0
  %1667 = vmatpush2.msra.mxu0 0.0
  %1668 = vmatprep.subr.mxu0 0.0
  %1669 = vmatpush2.msra.mxu0 0.0
  %1670 = vmatprep.subr.mxu0 0.0
  %1671 = vmatpush2.msra.mxu0 0.0
  %1672 = vmatprep.subr.mxu0 0.0
  %1673 = vmatpush2.msra.mxu0 0.0
  %1674 = vmatprep.subr.mxu0 0.0
  %1675 = vmatpush2.msra.mxu0 0.0
  %1676 = vmatprep.subr.mxu0 0.0
  %1677 = vmatpush2.msra.mxu0 0.0
  %1678 = vmatprep.subr.mxu0 0.0
  %1679 = vmatpush2.msra.mxu0 0.0
  %1680 = vmatprep.subr.mxu0 0.0
  %1681 = vmatpush2.msra.mxu0 0.0
  %1682 = vmatprep.subr.mxu0 0.0
  %1683 = vmatpush2.msra.mxu0 0.0
  %1684 = vmatprep.subr.mxu0 0.0
  %1685 = vmatpush2.msra.mxu0 0.0
  %1686 = vmatprep.subr.mxu0 0.0
  %1687 = vmatpush2.msra.mxu0 0.0
  %1688 = vmatprep.subr.mxu0 0.0
  %1689 = vmatpush2.msra.mxu0 0.0
  %1690 = vmatprep.subr.mxu0 0.0
  %1691 = vmatpush2.msra.mxu0 0.0
  %1692 = vmatprep.mubr.f32.mxu0 0.0
  %1693 = vmatmul.mubr.f32.gmra.mxu0 %v1623
  %v1694 = vpop.f32.mrf.mxu0
  %v1695 = vadd.f32 0.0, %v1694
  %v1696 = vpop.f32.mrf.mxu0
  %1697 = vdwg.mxu0
  %v1698 = vadd.f32 %v1616, %v1695
  %v1699 = vld [vmem:[#allocation2 + $0x1e] sm:$0x3]
  %s1700 = scalar_lea.vmem %s3, 360
  %v1701 = vld [vmem:[%s1700] sm:$0xff]
  %v1702 = vld [vmem:[%s1700 + $0x8] sm:$0xff]
  %v1703 = vld [vmem:[%s1700 + $0x10] sm:$0xf]
  %v1705 = vsel %vm466, %v1699, 0
  %v1708 = vsel %vm483, %v1703, 0
  %1710 = vmatprep.subr.mxu0 0.0
  %1711 = vmatpush1.msra.mxu0 0.0
  %1712 = vmatprep.subr.mxu0 0.0
  %1713 = vmatpush1.msra.mxu0 0.0
  %1714 = vmatprep.subr.mxu0 0.0
  %1715 = vmatpush1.msra.mxu0 0.0
  %1716 = vmatprep.subr.mxu0 0.0
  %1717 = vmatpush1.msra.mxu0 0.0
  %1718 = vmatprep.subr.mxu0 0.0
  %1719 = vmatpush1.msra.mxu0 0.0
  %1720 = vmatprep.subr.mxu0 0.0
  %1721 = vmatpush1.msra.mxu0 0.0
  %1722 = vmatprep.subr.mxu0 0.0
  %1723 = vmatpush1.msra.mxu0 0.0
  %1724 = vmatprep.subr.mxu0 0.0
  %1725 = vmatpush1.msra.mxu0 0.0
  %1726 = vmatprep.subr.mxu0 0.0
  %1727 = vmatpush1.msra.mxu0 0.0
  %1728 = vmatprep.subr.mxu0 0.0
  %1729 = vmatpush1.msra.mxu0 0.0
  %1730 = vmatprep.subr.mxu0 0.0
  %1731 = vmatpush1.msra.mxu0 0.0
  %1732 = vmatprep.subr.mxu0 0.0
  %1733 = vmatpush1.msra.mxu0 0.0
  %1734 = vmatprep.subr.mxu0 0.0
  %1735 = vmatpush1.msra.mxu0 0.0
  %1736 = vmatprep.subr.mxu0 0.0
  %1737 = vmatpush1.msra.mxu0 %v1708
  %1738 = vmatprep.subr.mxu0 0.0
  %1739 = vmatpush1.msra.mxu0 %v1702
  %1740 = vmatprep.subr.mxu0 0.0
  %1741 = vmatpush1.msra.mxu0 %v1701
  %1742 = vmatprep.subr.mxu0 0.0
  %1743 = vmatpush2.msra.mxu0 0.0
  %1744 = vmatprep.subr.mxu0 0.0
  %1745 = vmatpush2.msra.mxu0 0.0
  %1746 = vmatprep.subr.mxu0 0.0
  %1747 = vmatpush2.msra.mxu0 0.0
  %1748 = vmatprep.subr.mxu0 0.0
  %1749 = vmatpush2.msra.mxu0 0.0
  %1750 = vmatprep.subr.mxu0 0.0
  %1751 = vmatpush2.msra.mxu0 0.0
  %1752 = vmatprep.subr.mxu0 0.0
  %1753 = vmatpush2.msra.mxu0 0.0
  %1754 = vmatprep.subr.mxu0 0.0
  %1755 = vmatpush2.msra.mxu0 0.0
  %1756 = vmatprep.subr.mxu0 0.0
  %1757 = vmatpush2.msra.mxu0 0.0
  %1758 = vmatprep.subr.mxu0 0.0
  %1759 = vmatpush2.msra.mxu0 0.0
  %1760 = vmatprep.subr.mxu0 0.0
  %1761 = vmatpush2.msra.mxu0 0.0
  %1762 = vmatprep.subr.mxu0 0.0
  %1763 = vmatpush2.msra.mxu0 0.0
  %1764 = vmatprep.subr.mxu0 0.0
  %1765 = vmatpush2.msra.mxu0 0.0
  %1766 = vmatprep.subr.mxu0 0.0
  %1767 = vmatpush2.msra.mxu0 0.0
  %1768 = vmatprep.subr.mxu0 0.0
  %1769 = vmatpush2.msra.mxu0 0.0
  %1770 = vmatprep.subr.mxu0 0.0
  %1771 = vmatpush2.msra.mxu0 0.0
  %1772 = vmatprep.subr.mxu0 0.0
  %1773 = vmatpush2.msra.mxu0 0.0
  %1774 = vmatprep.mubr.f32.mxu0 0.0
  %1775 = vmatmul.mubr.f32.gmra.mxu0 %v1705
  %v1776 = vpop.f32.mrf.mxu0
  %v1777 = vadd.f32 0.0, %v1776
  %v1778 = vpop.f32.mrf.mxu0
  %1779 = vdwg.mxu0
  %v1780 = vadd.f32 %v1698, %v1777
  %v1781 = vld [vmem:[%s4] sm:$0x1]
  %v1783 = vlaneseq
  %v1784 = vshrl.u32 %v1783, 7
  %v1785 = vsub.s32 0, %v1784
  %v1786 = vrot.slane %v1781, %v1785
  %v1788 = vadd.f32 %v1780, %v1786
  %v1789 = vmax.f32 %v1788, 0.0
  %v1790 = vld [vmem:[%s5] sm:$0xff]
  %v1791 = vld [vmem:[%s5 + $0x8] sm:$0xff]
  %v1792 = vld [vmem:[%s5 + $0x10] sm:$0xff]
  %v1793 = vld [vmem:[%s5 + $0x18] sm:$0xff]
  %v1794 = vld [vmem:[%s5 + $0x20] sm:$0xff]
  %v1795 = vld [vmem:[%s5 + $0x28] sm:$0xff]
  %v1796 = vld [vmem:[%s5 + $0x30] sm:$0xff]
  %v1797 = vld [vmem:[%s5 + $0x38] sm:$0xff]
  %v1798 = vld [vmem:[%s5 + $0x40] sm:$0xff]
  %v1799 = vld [vmem:[%s5 + $0x48] sm:$0xff]
  %v1800 = vld [vmem:[%s5 + $0x50] sm:$0xff]
  %v1801 = vld [vmem:[%s5 + $0x58] sm:$0xff]
  %v1802 = vld [vmem:[%s5 + $0x60] sm:$0xff]
  %v1803 = vld [vmem:[%s5 + $0x68] sm:$0xff]
  %v1804 = vld [vmem:[%s5 + $0x70] sm:$0xff]
  %v1805 = vld [vmem:[%s5 + $0x78] sm:$0xff]
  %v1806 = vld [vmem:[%s6] sm:$0x1]
  %v1808 = vlaneseq
  %v1809 = vshrl.u32 %v1808, 7
  %v1810 = vsub.s32 0, %v1809
  %v1811 = vrot.slane %v1806, %v1810
  %1813 = vmatprep.subr.mxu0 0.0
  %1814 = vmatpush1.msra.mxu0 %v1805
  %1815 = vmatprep.subr.mxu0 0.0
  %1816 = vmatpush1.msra.mxu0 %v1804
  %1817 = vmatprep.subr.mxu0 0.0
  %1818 = vmatpush1.msra.mxu0 %v1803
  %1819 = vmatprep.subr.mxu0 0.0
  %1820 = vmatpush1.msra.mxu0 %v1802
  %1821 = vmatprep.subr.mxu0 0.0
  %1822 = vmatpush1.msra.mxu0 %v1801
  %1823 = vmatprep.subr.mxu0 0.0
  %1824 = vmatpush1.msra.mxu0 %v1800
  %1825 = vmatprep.subr.mxu0 0.0
  %1826 = vmatpush1.msra.mxu0 %v1799
  %1827 = vmatprep.subr.mxu0 0.0
  %1828 = vmatpush1.msra.mxu0 %v1798
  %1829 = vmatprep.subr.mxu0 0.0
  %1830 = vmatpush1.msra.mxu0 %v1797
  %1831 = vmatprep.subr.mxu0 0.0
  %1832 = vmatpush1.msra.mxu0 %v1796
  %1833 = vmatprep.subr.mxu0 0.0
  %1834 = vmatpush1.msra.mxu0 %v1795
  %1835 = vmatprep.subr.mxu0 0.0
  %1836 = vmatpush1.msra.mxu0 %v1794
  %1837 = vmatprep.subr.mxu0 0.0
  %1838 = vmatpush1.msra.mxu0 %v1793
  %1839 = vmatprep.subr.mxu0 0.0
  %1840 = vmatpush1.msra.mxu0 %v1792
  %1841 = vmatprep.subr.mxu0 0.0
  %1842 = vmatpush1.msra.mxu0 %v1791
  %1843 = vmatprep.subr.mxu0 0.0
  %1844 = vmatpush1.msra.mxu0 %v1790
  %1845 = vmatprep.subr.mxu0 0.0
  %1846 = vmatpush2.msra.mxu0 0.0
  %1847 = vmatprep.subr.mxu0 0.0
  %1848 = vmatpush2.msra.mxu0 0.0
  %1849 = vmatprep.subr.mxu0 0.0
  %1850 = vmatpush2.msra.mxu0 0.0
  %1851 = vmatprep.subr.mxu0 0.0
  %1852 = vmatpush2.msra.mxu0 0.0
  %1853 = vmatprep.subr.mxu0 0.0
  %1854 = vmatpush2.msra.mxu0 0.0
  %1855 = vmatprep.subr.mxu0 0.0
  %1856 = vmatpush2.msra.mxu0 0.0
  %1857 = vmatprep.subr.mxu0 0.0
  %1858 = vmatpush2.msra.mxu0 0.0
  %1859 = vmatprep.subr.mxu0 0.0
  %1860 = vmatpush2.msra.mxu0 0.0
  %1861 = vmatprep.subr.mxu0 0.0
  %1862 = vmatpush2.msra.mxu0 0.0
  %1863 = vmatprep.subr.mxu0 0.0
  %1864 = vmatpush2.msra.mxu0 0.0
  %1865 = vmatprep.subr.mxu0 0.0
  %1866 = vmatpush2.msra.mxu0 0.0
  %1867 = vmatprep.subr.mxu0 0.0
  %1868 = vmatpush2.msra.mxu0 0.0
  %1869 = vmatprep.subr.mxu0 0.0
  %1870 = vmatpush2.msra.mxu0 0.0
  %1871 = vmatprep.subr.mxu0 0.0
  %1872 = vmatpush2.msra.mxu0 0.0
  %1873 = vmatprep.subr.mxu0 0.0
  %1874 = vmatpush2.msra.mxu0 0.0
  %1875 = vmatprep.subr.mxu0 0.0
  %1876 = vmatpush2.msra.mxu0 0.0
  %1877 = vmatprep.mubr.f32.mxu0 0.0
  %1878 = vmatmul.mubr.f32.gmra.mxu0 %v1789
  %v1879 = vpop.f32.mrf.mxu0
  %v1880 = vadd.f32 %v1811, %v1879
  %v1881 = vpop.f32.mrf.mxu0
  %1882 = vdwg.mxu0
  %vm1883 = vcmask 1041408
  %v1884 = vsel %vm1883, %v1880, -inf
  %1885 = vmax.xlane.f32.xlu0 %v1884
  %v1886 = vpop.xlane.xlu0 %1885
  %v1887 = vsub.f32 %v1880, %v1886
  %v1888 = vmul.f32 %v1887, 1.442695
  %v1889 = vpow.pop %v1888
  %v1890 = vsel %vm1883, %v1889, 0.0
  %1891 = vadd.xlane.f32.xlu0 %v1890
  %v1892 = vpop.xlane.xlu0 %1891
  %v1893 = vlog2.pop %v1892
  %v1894 = vmul.f32 %v1893, 0.6931472
  %v1895 = vsub.f32 %v1887, %v1894
  %1896 = vst [vmem:[%s9] sm:$0x3] %v1895
  %s1897 = scalar_lea.vmem %s1, 256
  %v1898 = vld [vmem:[%s1897] sm:$0xff]
  %v1899 = vld [vmem:[%s1897 + $0x8] sm:$0xff]
  %v1900 = vld [vmem:[%s1897 + $0x10] sm:$0xff]
  %v1901 = vld [vmem:[%s1897 + $0x18] sm:$0xff]
  %v1902 = vld [vmem:[%s1897 + $0x20] sm:$0xff]
  %v1903 = vld [vmem:[%s1897 + $0x28] sm:$0xff]
  %v1904 = vld [vmem:[%s1897 + $0x30] sm:$0xff]
  %v1905 = vld [vmem:[%s1897 + $0x38] sm:$0xff]
  %v1906 = vld [vmem:[%s1897 + $0x40] sm:$0xff]
  %v1907 = vld [vmem:[%s1897 + $0x48] sm:$0xff]
  %v1908 = vld [vmem:[%s1897 + $0x50] sm:$0xff]
  %v1909 = vld [vmem:[%s1897 + $0x58] sm:$0xff]
  %v1910 = vld [vmem:[%s1897 + $0x60] sm:$0xff]
  %v1911 = vld [vmem:[%s1897 + $0x68] sm:$0xff]
  %v1912 = vld [vmem:[%s1897 + $0x70] sm:$0xff]
  %v1913 = vld [vmem:[%s1897 + $0x78] sm:$0xff]
  %v1914 = vld [vmem:[%s1897 + $0x80] sm:$0xff]
  %v1915 = vld [vmem:[%s1897 + $0x88] sm:$0xff]
  %v1916 = vld [vmem:[%s1897 + $0x90] sm:$0xff]
  %v1917 = vld [vmem:[%s1897 + $0x98] sm:$0xff]
  %v1918 = vld [vmem:[%s1897 + $0xa0] sm:$0xff]
  %v1919 = vld [vmem:[%s1897 + $0xa8] sm:$0xff]
  %v1920 = vld [vmem:[%s1897 + $0xb0] sm:$0xff]
  %v1921 = vld [vmem:[%s1897 + $0xb8] sm:$0xff]
  %v1922 = vld [vmem:[%s1897 + $0xc0] sm:$0xff]
  %v1923 = vld [vmem:[%s1897 + $0xc8] sm:$0xff]
  %v1924 = vld [vmem:[%s1897 + $0xd0] sm:$0xff]
  %v1925 = vld [vmem:[%s1897 + $0xd8] sm:$0xff]
  %v1926 = vld [vmem:[%s1897 + $0xe0] sm:$0xff]
  %v1927 = vld [vmem:[%s1897 + $0xe8] sm:$0xff]
  %v1928 = vld [vmem:[%s1897 + $0xf0] sm:$0xff]
  %v1929 = vld [vmem:[%s1897 + $0xf8] sm:$0xff]
  %s1930 = scalar_lea.vmem %s0, 256
  %v1931 = vld [vmem:[%s1930] sm:$0xff]
  %v1932 = vld [vmem:[%s1930 + $0x8] sm:$0xff]
  %v1933 = vld [vmem:[%s1930 + $0x10] sm:$0xff]
  %v1934 = vld [vmem:[%s1930 + $0x18] sm:$0xff]
  %v1935 = vld [vmem:[%s1930 + $0x20] sm:$0xff]
  %v1936 = vld [vmem:[%s1930 + $0x28] sm:$0xff]
  %v1937 = vld [vmem:[%s1930 + $0x30] sm:$0xff]
  %v1938 = vld [vmem:[%s1930 + $0x38] sm:$0xff]
  %1939 = vmatprep.subr.mxu0 0.0
  %1940 = vmatpush1.msra.mxu0 %v1913
  %1941 = vmatprep.subr.mxu0 0.0
  %1942 = vmatpush1.msra.mxu0 %v1912
  %1943 = vmatprep.subr.mxu0 0.0
  %1944 = vmatpush1.msra.mxu0 %v1911
  %1945 = vmatprep.subr.mxu0 0.0
  %1946 = vmatpush1.msra.mxu0 %v1910
  %1947 = vmatprep.subr.mxu0 0.0
  %1948 = vmatpush1.msra.mxu0 %v1909
  %1949 = vmatprep.subr.mxu0 0.0
  %1950 = vmatpush1.msra.mxu0 %v1908
  %1951 = vmatprep.subr.mxu0 0.0
  %1952 = vmatpush1.msra.mxu0 %v1907
  %1953 = vmatprep.subr.mxu0 0.0
  %1954 = vmatpush1.msra.mxu0 %v1906
  %1955 = vmatprep.subr.mxu0 0.0
  %1956 = vmatpush1.msra.mxu0 %v1905
  %1957 = vmatprep.subr.mxu0 0.0
  %1958 = vmatpush1.msra.mxu0 %v1904
  %1959 = vmatprep.subr.mxu0 0.0
  %1960 = vmatpush1.msra.mxu0 %v1903
  %1961 = vmatprep.subr.mxu0 0.0
  %1962 = vmatpush1.msra.mxu0 %v1902
  %1963 = vmatprep.subr.mxu0 0.0
  %1964 = vmatpush1.msra.mxu0 %v1901
  %1965 = vmatprep.subr.mxu0 0.0
  %1966 = vmatpush1.msra.mxu0 %v1900
  %1967 = vmatprep.subr.mxu0 0.0
  %1968 = vmatpush1.msra.mxu0 %v1899
  %1969 = vmatprep.subr.mxu0 0.0
  %1970 = vmatpush1.msra.mxu0 %v1898
  %1971 = vmatprep.subr.mxu0 0.0
  %1972 = vmatpush2.msra.mxu0 %v1929
  %1973 = vmatprep.subr.mxu0 0.0
  %1974 = vmatpush2.msra.mxu0 %v1928
  %1975 = vmatprep.subr.mxu0 0.0
  %1976 = vmatpush2.msra.mxu0 %v1927
  %1977 = vmatprep.subr.mxu0 0.0
  %1978 = vmatpush2.msra.mxu0 %v1926
  %1979 = vmatprep.subr.mxu0 0.0
  %1980 = vmatpush2.msra.mxu0 %v1925
  %1981 = vmatprep.subr.mxu0 0.0
  %1982 = vmatpush2.msra.mxu0 %v1924
  %1983 = vmatprep.subr.mxu0 0.0
  %1984 = vmatpush2.msra.mxu0 %v1923
  %1985 = vmatprep.subr.mxu0 0.0
  %1986 = vmatpush2.msra.mxu0 %v1922
  %1987 = vmatprep.subr.mxu0 0.0
  %1988 = vmatpush2.msra.mxu0 %v1921
  %1989 = vmatprep.subr.mxu0 0.0
  %1990 = vmatpush2.msra.mxu0 %v1920
  %1991 = vmatprep.subr.mxu0 0.0
  %1992 = vmatpush2.msra.mxu0 %v1919
  %1993 = vmatprep.subr.mxu0 0.0
  %1994 = vmatpush2.msra.mxu0 %v1918
  %1995 = vmatprep.subr.mxu0 0.0
  %1996 = vmatpush2.msra.mxu0 %v1917
  %1997 = vmatprep.subr.mxu0 0.0
  %1998 = vmatpush2.msra.mxu0 %v1916
  %1999 = vmatprep.subr.mxu0 0.0
  %2000 = vmatpush2.msra.mxu0 %v1915
  %2001 = vmatprep.subr.mxu0 0.0
  %2002 = vmatpush2.msra.mxu0 %v1914
  %2003 = vmatprep.mubr.f32.mxu0 %v1932
  %2004 = vmatmul.mubr.f32.gmra.mxu0 %v1931
  %v2005 = vpop.f32.mrf.mxu0
  %v2006 = vadd.f32 0.0, %v2005
  %v2007 = vpop.f32.mrf.mxu0
  %2008 = vmatprep.mubr.f32.mxu0 %v1934
  %2009 = vmatmul.mubr.f32.gmra.mxu0 %v1933
  %v2010 = vpop.f32.mrf.mxu0
  %v2011 = vadd.f32 0.0, %v2010
  %v2012 = vpop.f32.mrf.mxu0
  %2013 = vmatprep.mubr.f32.mxu0 %v1936
  %2014 = vmatmul.mubr.f32.gmra.mxu0 %v1935
  %v2015 = vpop.f32.mrf.mxu0
  %v2016 = vadd.f32 0.0, %v2015
  %v2017 = vpop.f32.mrf.mxu0
  %2018 = vmatprep.mubr.f32.mxu0 %v1938
  %2019 = vmatmul.mubr.f32.gmra.mxu0 %v1937
  %v2020 = vpop.f32.mrf.mxu0
  %v2021 = vadd.f32 0.0, %v2020
  %v2022 = vpop.f32.mrf.mxu0
  %2023 = vdwg.mxu0
  %s2024 = scalar_lea.vmem %s0, 320
  %v2025 = vld [vmem:[%s2024] sm:$0xff]
  %v2026 = vld [vmem:[%s2024 + $0x8] sm:$0xff]
  %v2027 = vld [vmem:[%s2024 + $0x10] sm:$0xff]
  %v2028 = vld [vmem:[%s2024 + $0x18] sm:$0xff]
  %v2029 = vld [vmem:[%s2024 + $0x20] sm:$0xff]
  %v2030 = vld [vmem:[%s2024 + $0x28] sm:$0xff]
  %v2031 = vld [vmem:[%s2024 + $0x30] sm:$0xff]
  %v2032 = vld [vmem:[%s2024 + $0x38] sm:$0xff]
  %2033 = vmatprep.subr.mxu0 0.0
  %2034 = vmatpush1.msra.mxu0 %v1913
  %2035 = vmatprep.subr.mxu0 0.0
  %2036 = vmatpush1.msra.mxu0 %v1912
  %2037 = vmatprep.subr.mxu0 0.0
  %2038 = vmatpush1.msra.mxu0 %v1911
  %2039 = vmatprep.subr.mxu0 0.0
  %2040 = vmatpush1.msra.mxu0 %v1910
  %2041 = vmatprep.subr.mxu0 0.0
  %2042 = vmatpush1.msra.mxu0 %v1909
  %2043 = vmatprep.subr.mxu0 0.0
  %2044 = vmatpush1.msra.mxu0 %v1908
  %2045 = vmatprep.subr.mxu0 0.0
  %2046 = vmatpush1.msra.mxu0 %v1907
  %2047 = vmatprep.subr.mxu0 0.0
  %2048 = vmatpush1.msra.mxu0 %v1906
  %2049 = vmatprep.subr.mxu0 0.0
  %2050 = vmatpush1.msra.mxu0 %v1905
  %2051 = vmatprep.subr.mxu0 0.0
  %2052 = vmatpush1.msra.mxu0 %v1904
  %2053 = vmatprep.subr.mxu0 0.0
  %2054 = vmatpush1.msra.mxu0 %v1903
  %2055 = vmatprep.subr.mxu0 0.0
  %2056 = vmatpush1.msra.mxu0 %v1902
  %2057 = vmatprep.subr.mxu0 0.0
  %2058 = vmatpush1.msra.mxu0 %v1901
  %2059 = vmatprep.subr.mxu0 0.0
  %2060 = vmatpush1.msra.mxu0 %v1900
  %2061 = vmatprep.subr.mxu0 0.0
  %2062 = vmatpush1.msra.mxu0 %v1899
  %2063 = vmatprep.subr.mxu0 0.0
  %2064 = vmatpush1.msra.mxu0 %v1898
  %2065 = vmatprep.subr.mxu0 0.0
  %2066 = vmatpush2.msra.mxu0 %v1929
  %2067 = vmatprep.subr.mxu0 0.0
  %2068 = vmatpush2.msra.mxu0 %v1928
  %2069 = vmatprep.subr.mxu0 0.0
  %2070 = vmatpush2.msra.mxu0 %v1927
  %2071 = vmatprep.subr.mxu0 0.0
  %2072 = vmatpush2.msra.mxu0 %v1926
  %2073 = vmatprep.subr.mxu0 0.0
  %2074 = vmatpush2.msra.mxu0 %v1925
  %2075 = vmatprep.subr.mxu0 0.0
  %2076 = vmatpush2.msra.mxu0 %v1924
  %2077 = vmatprep.subr.mxu0 0.0
  %2078 = vmatpush2.msra.mxu0 %v1923
  %2079 = vmatprep.subr.mxu0 0.0
  %2080 = vmatpush2.msra.mxu0 %v1922
  %2081 = vmatprep.subr.mxu0 0.0
  %2082 = vmatpush2.msra.mxu0 %v1921
  %2083 = vmatprep.subr.mxu0 0.0
  %2084 = vmatpush2.msra.mxu0 %v1920
  %2085 = vmatprep.subr.mxu0 0.0
  %2086 = vmatpush2.msra.mxu0 %v1919
  %2087 = vmatprep.subr.mxu0 0.0
  %2088 = vmatpush2.msra.mxu0 %v1918
  %2089 = vmatprep.subr.mxu0 0.0
  %2090 = vmatpush2.msra.mxu0 %v1917
  %2091 = vmatprep.subr.mxu0 0.0
  %2092 = vmatpush2.msra.mxu0 %v1916
  %2093 = vmatprep.subr.mxu0 0.0
  %2094 = vmatpush2.msra.mxu0 %v1915
  %2095 = vmatprep.subr.mxu0 0.0
  %2096 = vmatpush2.msra.mxu0 %v1914
  %2097 = vmatprep.mubr.f32.mxu0 %v2026
  %2098 = vmatmul.mubr.f32.gmra.mxu0 %v2025
  %v2099 = vpop.f32.mrf.mxu0
  %v2100 = vadd.f32 0.0, %v2099
  %v2101 = vpop.f32.mrf.mxu0
  %2102 = vmatprep.mubr.f32.mxu0 %v2028
  %2103 = vmatmul.mubr.f32.gmra.mxu0 %v2027
  %v2104 = vpop.f32.mrf.mxu0
  %v2105 = vadd.f32 0.0, %v2104
  %v2106 = vpop.f32.mrf.mxu0
  %2107 = vmatprep.mubr.f32.mxu0 %v2030
  %2108 = vmatmul.mubr.f32.gmra.mxu0 %v2029
  %v2109 = vpop.f32.mrf.mxu0
  %v2110 = vadd.f32 0.0, %v2109
  %v2111 = vpop.f32.mrf.mxu0
  %2112 = vmatprep.mubr.f32.mxu0 %v2032
  %2113 = vmatmul.mubr.f32.gmra.mxu0 %v2031
  %v2114 = vpop.f32.mrf.mxu0
  %v2115 = vadd.f32 0.0, %v2114
  %v2116 = vpop.f32.mrf.mxu0
  %2117 = vdwg.mxu0
  %v2118 = vmax.f32 %v2006, %v2100
  %v2119 = vmax.f32 %v2011, %v2105
  %v2120 = vmax.f32 %v2016, %v2110
  %v2121 = vmax.f32 %v2021, %v2115
  %s2122 = scalar_lea.vmem %s0, 384
  %v2123 = vld [vmem:[%s2122] sm:$0xff]
  %v2124 = vld [vmem:[%s2122 + $0x8] sm:$0xff]
  %v2125 = vld [vmem:[%s2122 + $0x10] sm:$0xff]
  %v2126 = vld [vmem:[%s2122 + $0x18] sm:$0xff]
  %v2127 = vld [vmem:[%s2122 + $0x20] sm:$0xff]
  %v2128 = vld [vmem:[%s2122 + $0x28] sm:$0xff]
  %v2129 = vld [vmem:[%s2122 + $0x30] sm:$0xff]
  %v2130 = vld [vmem:[%s2122 + $0x38] sm:$0xff]
  %2131 = vmatprep.subr.mxu0 0.0
  %2132 = vmatpush1.msra.mxu0 %v1913
  %2133 = vmatprep.subr.mxu0 0.0
  %2134 = vmatpush1.msra.mxu0 %v1912
  %2135 = vmatprep.subr.mxu0 0.0
  %2136 = vmatpush1.msra.mxu0 %v1911
  %2137 = vmatprep.subr.mxu0 0.0
  %2138 = vmatpush1.msra.mxu0 %v1910
  %2139 = vmatprep.subr.mxu0 0.0
  %2140 = vmatpush1.msra.mxu0 %v1909
  %2141 = vmatprep.subr.mxu0 0.0
  %2142 = vmatpush1.msra.mxu0 %v1908
  %2143 = vmatprep.subr.mxu0 0.0
  %2144 = vmatpush1.msra.mxu0 %v1907
  %2145 = vmatprep.subr.mxu0 0.0
  %2146 = vmatpush1.msra.mxu0 %v1906
  %2147 = vmatprep.subr.mxu0 0.0
  %2148 = vmatpush1.msra.mxu0 %v1905
  %2149 = vmatprep.subr.mxu0 0.0
  %2150 = vmatpush1.msra.mxu0 %v1904
  %2151 = vmatprep.subr.mxu0 0.0
  %2152 = vmatpush1.msra.mxu0 %v1903
  %2153 = vmatprep.subr.mxu0 0.0
  %2154 = vmatpush1.msra.mxu0 %v1902
  %2155 = vmatprep.subr.mxu0 0.0
  %2156 = vmatpush1.msra.mxu0 %v1901
  %2157 = vmatprep.subr.mxu0 0.0
  %2158 = vmatpush1.msra.mxu0 %v1900
  %2159 = vmatprep.subr.mxu0 0.0
  %2160 = vmatpush1.msra.mxu0 %v1899
  %2161 = vmatprep.subr.mxu0 0.0
  %2162 = vmatpush1.msra.mxu0 %v1898
  %2163 = vmatprep.subr.mxu0 0.0
  %2164 = vmatpush2.msra.mxu0 %v1929
  %2165 = vmatprep.subr.mxu0 0.0
  %2166 = vmatpush2.msra.mxu0 %v1928
  %2167 = vmatprep.subr.mxu0 0.0
  %2168 = vmatpush2.msra.mxu0 %v1927
  %2169 = vmatprep.subr.mxu0 0.0
  %2170 = vmatpush2.msra.mxu0 %v1926
  %2171 = vmatprep.subr.mxu0 0.0
  %2172 = vmatpush2.msra.mxu0 %v1925
  %2173 = vmatprep.subr.mxu0 0.0
  %2174 = vmatpush2.msra.mxu0 %v1924
  %2175 = vmatprep.subr.mxu0 0.0
  %2176 = vmatpush2.msra.mxu0 %v1923
  %2177 = vmatprep.subr.mxu0 0.0
  %2178 = vmatpush2.msra.mxu0 %v1922
  %2179 = vmatprep.subr.mxu0 0.0
  %2180 = vmatpush2.msra.mxu0 %v1921
  %2181 = vmatprep.subr.mxu0 0.0
  %2182 = vmatpush2.msra.mxu0 %v1920
  %2183 = vmatprep.subr.mxu0 0.0
  %2184 = vmatpush2.msra.mxu0 %v1919
  %2185 = vmatprep.subr.mxu0 0.0
  %2186 = vmatpush2.msra.mxu0 %v1918
  %2187 = vmatprep.subr.mxu0 0.0
  %2188 = vmatpush2.msra.mxu0 %v1917
  %2189 = vmatprep.subr.mxu0 0.0
  %2190 = vmatpush2.msra.mxu0 %v1916
  %2191 = vmatprep.subr.mxu0 0.0
  %2192 = vmatpush2.msra.mxu0 %v1915
  %2193 = vmatprep.subr.mxu0 0.0
  %2194 = vmatpush2.msra.mxu0 %v1914
  %2195 = vmatprep.mubr.f32.mxu0 %v2124
  %2196 = vmatmul.mubr.f32.gmra.mxu0 %v2123
  %v2197 = vpop.f32.mrf.mxu0
  %v2198 = vadd.f32 0.0, %v2197
  %v2199 = vpop.f32.mrf.mxu0
  %2200 = vmatprep.mubr.f32.mxu0 %v2126
  %2201 = vmatmul.mubr.f32.gmra.mxu0 %v2125
  %v2202 = vpop.f32.mrf.mxu0
  %v2203 = vadd.f32 0.0, %v2202
  %v2204 = vpop.f32.mrf.mxu0
  %2205 = vmatprep.mubr.f32.mxu0 %v2128
  %2206 = vmatmul.mubr.f32.gmra.mxu0 %v2127
  %v2207 = vpop.f32.mrf.mxu0
  %v2208 = vadd.f32 0.0, %v2207
  %v2209 = vpop.f32.mrf.mxu0
  %2210 = vmatprep.mubr.f32.mxu0 %v2130
  %2211 = vmatmul.mubr.f32.gmra.mxu0 %v2129
  %v2212 = vpop.f32.mrf.mxu0
  %v2213 = vadd.f32 0.0, %v2212
  %v2214 = vpop.f32.mrf.mxu0
  %2215 = vdwg.mxu0
  %v2216 = vmax.f32 %v2118, %v2198
  %v2217 = vmax.f32 %v2119, %v2203
  %v2218 = vmax.f32 %v2120, %v2208
  %v2219 = vmax.f32 %v2121, %v2213
  %s2220 = scalar_lea.vmem %s0, 448
  %v2221 = vld [vmem:[%s2220] sm:$0xff]
  %v2222 = vld [vmem:[%s2220 + $0x8] sm:$0xff]
  %v2223 = vld [vmem:[%s2220 + $0x10] sm:$0xff]
  %v2224 = vld [vmem:[%s2220 + $0x18] sm:$0xff]
  %v2225 = vld [vmem:[%s2220 + $0x20] sm:$0xff]
  %v2226 = vld [vmem:[%s2220 + $0x28] sm:$0xff]
  %v2227 = vld [vmem:[%s2220 + $0x30] sm:$0xff]
  %v2228 = vld [vmem:[%s2220 + $0x38] sm:$0xff]
  %2229 = vmatprep.subr.mxu0 0.0
  %2230 = vmatpush1.msra.mxu0 %v1913
  %2231 = vmatprep.subr.mxu0 0.0
  %2232 = vmatpush1.msra.mxu0 %v1912
  %2233 = vmatprep.subr.mxu0 0.0
  %2234 = vmatpush1.msra.mxu0 %v1911
  %2235 = vmatprep.subr.mxu0 0.0
  %2236 = vmatpush1.msra.mxu0 %v1910
  %2237 = vmatprep.subr.mxu0 0.0
  %2238 = vmatpush1.msra.mxu0 %v1909
  %2239 = vmatprep.subr.mxu0 0.0
  %2240 = vmatpush1.msra.mxu0 %v1908
  %2241 = vmatprep.subr.mxu0 0.0
  %2242 = vmatpush1.msra.mxu0 %v1907
  %2243 = vmatprep.subr.mxu0 0.0
  %2244 = vmatpush1.msra.mxu0 %v1906
  %2245 = vmatprep.subr.mxu0 0.0
  %2246 = vmatpush1.msra.mxu0 %v1905
  %2247 = vmatprep.subr.mxu0 0.0
  %2248 = vmatpush1.msra.mxu0 %v1904
  %2249 = vmatprep.subr.mxu0 0.0
  %2250 = vmatpush1.msra.mxu0 %v1903
  %2251 = vmatprep.subr.mxu0 0.0
  %2252 = vmatpush1.msra.mxu0 %v1902
  %2253 = vmatprep.subr.mxu0 0.0
  %2254 = vmatpush1.msra.mxu0 %v1901
  %2255 = vmatprep.subr.mxu0 0.0
  %2256 = vmatpush1.msra.mxu0 %v1900
  %2257 = vmatprep.subr.mxu0 0.0
  %2258 = vmatpush1.msra.mxu0 %v1899
  %2259 = vmatprep.subr.mxu0 0.0
  %2260 = vmatpush1.msra.mxu0 %v1898
  %2261 = vmatprep.subr.mxu0 0.0
  %2262 = vmatpush2.msra.mxu0 %v1929
  %2263 = vmatprep.subr.mxu0 0.0
  %2264 = vmatpush2.msra.mxu0 %v1928
  %2265 = vmatprep.subr.mxu0 0.0
  %2266 = vmatpush2.msra.mxu0 %v1927
  %2267 = vmatprep.subr.mxu0 0.0
  %2268 = vmatpush2.msra.mxu0 %v1926
  %2269 = vmatprep.subr.mxu0 0.0
  %2270 = vmatpush2.msra.mxu0 %v1925
  %2271 = vmatprep.subr.mxu0 0.0
  %2272 = vmatpush2.msra.mxu0 %v1924
  %2273 = vmatprep.subr.mxu0 0.0
  %2274 = vmatpush2.msra.mxu0 %v1923
  %2275 = vmatprep.subr.mxu0 0.0
  %2276 = vmatpush2.msra.mxu0 %v1922
  %2277 = vmatprep.subr.mxu0 0.0
  %2278 = vmatpush2.msra.mxu0 %v1921
  %2279 = vmatprep.subr.mxu0 0.0
  %2280 = vmatpush2.msra.mxu0 %v1920
  %2281 = vmatprep.subr.mxu0 0.0
  %2282 = vmatpush2.msra.mxu0 %v1919
  %2283 = vmatprep.subr.mxu0 0.0
  %2284 = vmatpush2.msra.mxu0 %v1918
  %2285 = vmatprep.subr.mxu0 0.0
  %2286 = vmatpush2.msra.mxu0 %v1917
  %2287 = vmatprep.subr.mxu0 0.0
  %2288 = vmatpush2.msra.mxu0 %v1916
  %2289 = vmatprep.subr.mxu0 0.0
  %2290 = vmatpush2.msra.mxu0 %v1915
  %2291 = vmatprep.subr.mxu0 0.0
  %2292 = vmatpush2.msra.mxu0 %v1914
  %2293 = vmatprep.mubr.f32.mxu0 %v2222
  %2294 = vmatmul.mubr.f32.gmra.mxu0 %v2221
  %v2295 = vpop.f32.mrf.mxu0
  %v2296 = vadd.f32 0.0, %v2295
  %v2297 = vpop.f32.mrf.mxu0
  %2298 = vmatprep.mubr.f32.mxu0 %v2224
  %2299 = vmatmul.mubr.f32.gmra.mxu0 %v2223
  %v2300 = vpop.f32.mrf.mxu0
  %v2301 = vadd.f32 0.0, %v2300
  %v2302 = vpop.f32.mrf.mxu0
  %2303 = vmatprep.mubr.f32.mxu0 %v2226
  %2304 = vmatmul.mubr.f32.gmra.mxu0 %v2225
  %v2305 = vpop.f32.mrf.mxu0
  %v2306 = vadd.f32 0.0, %v2305
  %v2307 = vpop.f32.mrf.mxu0
  %2308 = vmatprep.mubr.f32.mxu0 %v2228
  %2309 = vmatmul.mubr.f32.gmra.mxu0 %v2227
  %v2310 = vpop.f32.mrf.mxu0
  %v2311 = vadd.f32 0.0, %v2310
  %v2312 = vpop.f32.mrf.mxu0
  %2313 = vdwg.mxu0
  %v2314 = vmax.f32 %v2216, %v2296
  %v2315 = vmax.f32 %v2217, %v2301
  %v2316 = vmax.f32 %v2218, %v2306
  %v2317 = vmax.f32 %v2219, %v2311
  %s2318 = scalar_lea.vmem %s2, 1
  %v2319 = vld [vmem:[%s2318] sm:$0x1]
  %v2321 = vlaneseq
  %v2322 = vshrl.u32 %v2321, 7
  %v2323 = vsub.s32 0, %v2322
  %v2324 = vrot.slane %v2319, %v2323
  %v2326 = vadd.f32 %v2314, %v2324
  %v2327 = vadd.f32 %v2315, %v2324
  %v2328 = vadd.f32 %v2316, %v2324
  %v2329 = vadd.f32 %v2317, %v2324
  %v2330 = vmax.f32 %v2326, 0.0
  %v2331 = vmax.f32 %v2327, 0.0
  %v2332 = vmax.f32 %v2328, 0.0
  %v2333 = vmax.f32 %v2329, 0.0
  %s2334 = scalar_lea.vmem [#allocation2], 32
  %2335 = vst.msk [vmem:[%s2334] sm:$0xff] %vm466, %v2330
  %2336 = vst.msk [vmem:[%s2334 + $0x8] sm:$0xff] %vm466, %v2331
  %2337 = vst.msk [vmem:[%s2334 + $0x10] sm:$0xff] %vm466, %v2332
  %2338 = vst.msk [vmem:[%s2334 + $0x18] sm:$0xff] %vm466, %v2333
  %v2339 = vld [vmem:[%s2334] sm:$0x3]
  %s2340 = scalar_lea.vmem %s3, 384
  %v2341 = vld [vmem:[%s2340] sm:$0xff]
  %v2342 = vld [vmem:[%s2340 + $0x8] sm:$0xff]
  %v2343 = vld [vmem:[%s2340 + $0x10] sm:$0xf]
  %v2344 = vld [vmem:[%s2334 + $0x2] sm:$0x3]
  %s2345 = scalar_lea.vmem %s3, 408
  %v2346 = vld [vmem:[%s2345] sm:$0xff]
  %v2347 = vld [vmem:[%s2345 + $0x8] sm:$0xff]
  %v2348 = vld [vmem:[%s2345 + $0x10] sm:$0xf]
  %v2350 = vsel %vm466, %v2344, 0
  %v2353 = vsel %vm483, %v2348, 0
  %2355 = vmatprep.subr.mxu0 0.0
  %2356 = vmatpush1.msra.mxu0 0.0
  %2357 = vmatprep.subr.mxu0 0.0
  %2358 = vmatpush1.msra.mxu0 0.0
  %2359 = vmatprep.subr.mxu0 0.0
  %2360 = vmatpush1.msra.mxu0 0.0
  %2361 = vmatprep.subr.mxu0 0.0
  %2362 = vmatpush1.msra.mxu0 0.0
  %2363 = vmatprep.subr.mxu0 0.0
  %2364 = vmatpush1.msra.mxu0 0.0
  %2365 = vmatprep.subr.mxu0 0.0
  %2366 = vmatpush1.msra.mxu0 0.0
  %2367 = vmatprep.subr.mxu0 0.0
  %2368 = vmatpush1.msra.mxu0 0.0
  %2369 = vmatprep.subr.mxu0 0.0
  %2370 = vmatpush1.msra.mxu0 0.0
  %2371 = vmatprep.subr.mxu0 0.0
  %2372 = vmatpush1.msra.mxu0 0.0
  %2373 = vmatprep.subr.mxu0 0.0
  %2374 = vmatpush1.msra.mxu0 0.0
  %2375 = vmatprep.subr.mxu0 0.0
  %2376 = vmatpush1.msra.mxu0 0.0
  %2377 = vmatprep.subr.mxu0 0.0
  %2378 = vmatpush1.msra.mxu0 0.0
  %2379 = vmatprep.subr.mxu0 0.0
  %2380 = vmatpush1.msra.mxu0 0.0
  %2381 = vmatprep.subr.mxu0 0.0
  %2382 = vmatpush1.msra.mxu0 %v2353
  %2383 = vmatprep.subr.mxu0 0.0
  %2384 = vmatpush1.msra.mxu0 %v2347
  %2385 = vmatprep.subr.mxu0 0.0
  %2386 = vmatpush1.msra.mxu0 %v2346
  %2387 = vmatprep.subr.mxu0 0.0
  %2388 = vmatpush2.msra.mxu0 0.0
  %2389 = vmatprep.subr.mxu0 0.0
  %2390 = vmatpush2.msra.mxu0 0.0
  %2391 = vmatprep.subr.mxu0 0.0
  %2392 = vmatpush2.msra.mxu0 0.0
  %2393 = vmatprep.subr.mxu0 0.0
  %2394 = vmatpush2.msra.mxu0 0.0
  %2395 = vmatprep.subr.mxu0 0.0
  %2396 = vmatpush2.msra.mxu0 0.0
  %2397 = vmatprep.subr.mxu0 0.0
  %2398 = vmatpush2.msra.mxu0 0.0
  %2399 = vmatprep.subr.mxu0 0.0
  %2400 = vmatpush2.msra.mxu0 0.0
  %2401 = vmatprep.subr.mxu0 0.0
  %2402 = vmatpush2.msra.mxu0 0.0
  %2403 = vmatprep.subr.mxu0 0.0
  %2404 = vmatpush2.msra.mxu0 0.0
  %2405 = vmatprep.subr.mxu0 0.0
  %2406 = vmatpush2.msra.mxu0 0.0
  %2407 = vmatprep.subr.mxu0 0.0
  %2408 = vmatpush2.msra.mxu0 0.0
  %2409 = vmatprep.subr.mxu0 0.0
  %2410 = vmatpush2.msra.mxu0 0.0
  %2411 = vmatprep.subr.mxu0 0.0
  %2412 = vmatpush2.msra.mxu0 0.0
  %2413 = vmatprep.subr.mxu0 0.0
  %2414 = vmatpush2.msra.mxu0 0.0
  %2415 = vmatprep.subr.mxu0 0.0
  %2416 = vmatpush2.msra.mxu0 0.0
  %2417 = vmatprep.subr.mxu0 0.0
  %2418 = vmatpush2.msra.mxu0 0.0
  %2419 = vmatprep.mubr.f32.mxu0 0.0
  %2420 = vmatmul.mubr.f32.gmra.mxu0 %v2350
  %v2421 = vpop.f32.mrf.mxu0
  %v2422 = vadd.f32 0.0, %v2421
  %v2423 = vpop.f32.mrf.mxu0
  %2424 = vdwg.mxu0
  %v2426 = vsel %vm466, %v2339, 0
  %v2429 = vsel %vm483, %v2343, 0
  %2431 = vmatprep.subr.mxu0 0.0
  %2432 = vmatpush1.msra.mxu0 0.0
  %2433 = vmatprep.subr.mxu0 0.0
  %2434 = vmatpush1.msra.mxu0 0.0
  %2435 = vmatprep.subr.mxu0 0.0
  %2436 = vmatpush1.msra.mxu0 0.0
  %2437 = vmatprep.subr.mxu0 0.0
  %2438 = vmatpush1.msra.mxu0 0.0
  %2439 = vmatprep.subr.mxu0 0.0
  %2440 = vmatpush1.msra.mxu0 0.0
  %2441 = vmatprep.subr.mxu0 0.0
  %2442 = vmatpush1.msra.mxu0 0.0
  %2443 = vmatprep.subr.mxu0 0.0
  %2444 = vmatpush1.msra.mxu0 0.0
  %2445 = vmatprep.subr.mxu0 0.0
  %2446 = vmatpush1.msra.mxu0 0.0
  %2447 = vmatprep.subr.mxu0 0.0
  %2448 = vmatpush1.msra.mxu0 0.0
  %2449 = vmatprep.subr.mxu0 0.0
  %2450 = vmatpush1.msra.mxu0 0.0
  %2451 = vmatprep.subr.mxu0 0.0
  %2452 = vmatpush1.msra.mxu0 0.0
  %2453 = vmatprep.subr.mxu0 0.0
  %2454 = vmatpush1.msra.mxu0 0.0
  %2455 = vmatprep.subr.mxu0 0.0
  %2456 = vmatpush1.msra.mxu0 0.0
  %2457 = vmatprep.subr.mxu0 0.0
  %2458 = vmatpush1.msra.mxu0 %v2429
  %2459 = vmatprep.subr.mxu0 0.0
  %2460 = vmatpush1.msra.mxu0 %v2342
  %2461 = vmatprep.subr.mxu0 0.0
  %2462 = vmatpush1.msra.mxu0 %v2341
  %2463 = vmatprep.subr.mxu0 0.0
  %2464 = vmatpush2.msra.mxu0 0.0
  %2465 = vmatprep.subr.mxu0 0.0
  %2466 = vmatpush2.msra.mxu0 0.0
  %2467 = vmatprep.subr.mxu0 0.0
  %2468 = vmatpush2.msra.mxu0 0.0
  %2469 = vmatprep.subr.mxu0 0.0
  %2470 = vmatpush2.msra.mxu0 0.0
  %2471 = vmatprep.subr.mxu0 0.0
  %2472 = vmatpush2.msra.mxu0 0.0
  %2473 = vmatprep.subr.mxu0 0.0
  %2474 = vmatpush2.msra.mxu0 0.0
  %2475 = vmatprep.subr.mxu0 0.0
  %2476 = vmatpush2.msra.mxu0 0.0
  %2477 = vmatprep.subr.mxu0 0.0
  %2478 = vmatpush2.msra.mxu0 0.0
  %2479 = vmatprep.subr.mxu0 0.0
  %2480 = vmatpush2.msra.mxu0 0.0
  %2481 = vmatprep.subr.mxu0 0.0
  %2482 = vmatpush2.msra.mxu0 0.0
  %2483 = vmatprep.subr.mxu0 0.0
  %2484 = vmatpush2.msra.mxu0 0.0
  %2485 = vmatprep.subr.mxu0 0.0
  %2486 = vmatpush2.msra.mxu0 0.0
  %2487 = vmatprep.subr.mxu0 0.0
  %2488 = vmatpush2.msra.mxu0 0.0
  %2489 = vmatprep.subr.mxu0 0.0
  %2490 = vmatpush2.msra.mxu0 0.0
  %2491 = vmatprep.subr.mxu0 0.0
  %2492 = vmatpush2.msra.mxu0 0.0
  %2493 = vmatprep.subr.mxu0 0.0
  %2494 = vmatpush2.msra.mxu0 0.0
  %2495 = vmatprep.mubr.f32.mxu0 0.0
  %2496 = vmatmul.mubr.f32.gmra.mxu0 %v2426
  %v2497 = vpop.f32.mrf.mxu0
  %v2498 = vadd.f32 %v2422, %v2497
  %v2499 = vpop.f32.mrf.mxu0
  %2500 = vdwg.mxu0
  %v2501 = vld [vmem:[%s2334 + $0x4] sm:$0x3]
  %s2502 = scalar_lea.vmem %s3, 432
  %v2503 = vld [vmem:[%s2502] sm:$0xff]
  %v2504 = vld [vmem:[%s2502 + $0x8] sm:$0xff]
  %v2505 = vld [vmem:[%s2502 + $0x10] sm:$0xf]
  %v2507 = vsel %vm466, %v2501, 0
  %v2510 = vsel %vm483, %v2505, 0
  %2512 = vmatprep.subr.mxu0 0.0
  %2513 = vmatpush1.msra.mxu0 0.0
  %2514 = vmatprep.subr.mxu0 0.0
  %2515 = vmatpush1.msra.mxu0 0.0
  %2516 = vmatprep.subr.mxu0 0.0
  %2517 = vmatpush1.msra.mxu0 0.0
  %2518 = vmatprep.subr.mxu0 0.0
  %2519 = vmatpush1.msra.mxu0 0.0
  %2520 = vmatprep.subr.mxu0 0.0
  %2521 = vmatpush1.msra.mxu0 0.0
  %2522 = vmatprep.subr.mxu0 0.0
  %2523 = vmatpush1.msra.mxu0 0.0
  %2524 = vmatprep.subr.mxu0 0.0
  %2525 = vmatpush1.msra.mxu0 0.0
  %2526 = vmatprep.subr.mxu0 0.0
  %2527 = vmatpush1.msra.mxu0 0.0
  %2528 = vmatprep.subr.mxu0 0.0
  %2529 = vmatpush1.msra.mxu0 0.0
  %2530 = vmatprep.subr.mxu0 0.0
  %2531 = vmatpush1.msra.mxu0 0.0
  %2532 = vmatprep.subr.mxu0 0.0
  %2533 = vmatpush1.msra.mxu0 0.0
  %2534 = vmatprep.subr.mxu0 0.0
  %2535 = vmatpush1.msra.mxu0 0.0
  %2536 = vmatprep.subr.mxu0 0.0
  %2537 = vmatpush1.msra.mxu0 0.0
  %2538 = vmatprep.subr.mxu0 0.0
  %2539 = vmatpush1.msra.mxu0 %v2510
  %2540 = vmatprep.subr.mxu0 0.0
  %2541 = vmatpush1.msra.mxu0 %v2504
  %2542 = vmatprep.subr.mxu0 0.0
  %2543 = vmatpush1.msra.mxu0 %v2503
  %2544 = vmatprep.subr.mxu0 0.0
  %2545 = vmatpush2.msra.mxu0 0.0
  %2546 = vmatprep.subr.mxu0 0.0
  %2547 = vmatpush2.msra.mxu0 0.0
  %2548 = vmatprep.subr.mxu0 0.0
  %2549 = vmatpush2.msra.mxu0 0.0
  %2550 = vmatprep.subr.mxu0 0.0
  %2551 = vmatpush2.msra.mxu0 0.0
  %2552 = vmatprep.subr.mxu0 0.0
  %2553 = vmatpush2.msra.mxu0 0.0
  %2554 = vmatprep.subr.mxu0 0.0
  %2555 = vmatpush2.msra.mxu0 0.0
  %2556 = vmatprep.subr.mxu0 0.0
  %2557 = vmatpush2.msra.mxu0 0.0
  %2558 = vmatprep.subr.mxu0 0.0
  %2559 = vmatpush2.msra.mxu0 0.0
  %2560 = vmatprep.subr.mxu0 0.0
  %2561 = vmatpush2.msra.mxu0 0.0
  %2562 = vmatprep.subr.mxu0 0.0
  %2563 = vmatpush2.msra.mxu0 0.0
  %2564 = vmatprep.subr.mxu0 0.0
  %2565 = vmatpush2.msra.mxu0 0.0
  %2566 = vmatprep.subr.mxu0 0.0
  %2567 = vmatpush2.msra.mxu0 0.0
  %2568 = vmatprep.subr.mxu0 0.0
  %2569 = vmatpush2.msra.mxu0 0.0
  %2570 = vmatprep.subr.mxu0 0.0
  %2571 = vmatpush2.msra.mxu0 0.0
  %2572 = vmatprep.subr.mxu0 0.0
  %2573 = vmatpush2.msra.mxu0 0.0
  %2574 = vmatprep.subr.mxu0 0.0
  %2575 = vmatpush2.msra.mxu0 0.0
  %2576 = vmatprep.mubr.f32.mxu0 0.0
  %2577 = vmatmul.mubr.f32.gmra.mxu0 %v2507
  %v2578 = vpop.f32.mrf.mxu0
  %v2579 = vadd.f32 0.0, %v2578
  %v2580 = vpop.f32.mrf.mxu0
  %2581 = vdwg.mxu0
  %v2582 = vadd.f32 %v2498, %v2579
  %v2583 = vld [vmem:[%s2334 + $0x6] sm:$0x3]
  %s2584 = scalar_lea.vmem %s3, 456
  %v2585 = vld [vmem:[%s2584] sm:$0xff]
  %v2586 = vld [vmem:[%s2584 + $0x8] sm:$0xff]
  %v2587 = vld [vmem:[%s2584 + $0x10] sm:$0xf]
  %v2589 = vsel %vm466, %v2583, 0
  %v2592 = vsel %vm483, %v2587, 0
  %2594 = vmatprep.subr.mxu0 0.0
  %2595 = vmatpush1.msra.mxu0 0.0
  %2596 = vmatprep.subr.mxu0 0.0
  %2597 = vmatpush1.msra.mxu0 0.0
  %2598 = vmatprep.subr.mxu0 0.0
  %2599 = vmatpush1.msra.mxu0 0.0
  %2600 = vmatprep.subr.mxu0 0.0
  %2601 = vmatpush1.msra.mxu0 0.0
  %2602 = vmatprep.subr.mxu0 0.0
  %2603 = vmatpush1.msra.mxu0 0.0
  %2604 = vmatprep.subr.mxu0 0.0
  %2605 = vmatpush1.msra.mxu0 0.0
  %2606 = vmatprep.subr.mxu0 0.0
  %2607 = vmatpush1.msra.mxu0 0.0
  %2608 = vmatprep.subr.mxu0 0.0
  %2609 = vmatpush1.msra.mxu0 0.0
  %2610 = vmatprep.subr.mxu0 0.0
  %2611 = vmatpush1.msra.mxu0 0.0
  %2612 = vmatprep.subr.mxu0 0.0
  %2613 = vmatpush1.msra.mxu0 0.0
  %2614 = vmatprep.subr.mxu0 0.0
  %2615 = vmatpush1.msra.mxu0 0.0
  %2616 = vmatprep.subr.mxu0 0.0
  %2617 = vmatpush1.msra.mxu0 0.0
  %2618 = vmatprep.subr.mxu0 0.0
  %2619 = vmatpush1.msra.mxu0 0.0
  %2620 = vmatprep.subr.mxu0 0.0
  %2621 = vmatpush1.msra.mxu0 %v2592
  %2622 = vmatprep.subr.mxu0 0.0
  %2623 = vmatpush1.msra.mxu0 %v2586
  %2624 = vmatprep.subr.mxu0 0.0
  %2625 = vmatpush1.msra.mxu0 %v2585
  %2626 = vmatprep.subr.mxu0 0.0
  %2627 = vmatpush2.msra.mxu0 0.0
  %2628 = vmatprep.subr.mxu0 0.0
  %2629 = vmatpush2.msra.mxu0 0.0
  %2630 = vmatprep.subr.mxu0 0.0
  %2631 = vmatpush2.msra.mxu0 0.0
  %2632 = vmatprep.subr.mxu0 0.0
  %2633 = vmatpush2.msra.mxu0 0.0
  %2634 = vmatprep.subr.mxu0 0.0
  %2635 = vmatpush2.msra.mxu0 0.0
  %2636 = vmatprep.subr.mxu0 0.0
  %2637 = vmatpush2.msra.mxu0 0.0
  %2638 = vmatprep.subr.mxu0 0.0
  %2639 = vmatpush2.msra.mxu0 0.0
  %2640 = vmatprep.subr.mxu0 0.0
  %2641 = vmatpush2.msra.mxu0 0.0
  %2642 = vmatprep.subr.mxu0 0.0
  %2643 = vmatpush2.msra.mxu0 0.0
  %2644 = vmatprep.subr.mxu0 0.0
  %2645 = vmatpush2.msra.mxu0 0.0
  %2646 = vmatprep.subr.mxu0 0.0
  %2647 = vmatpush2.msra.mxu0 0.0
  %2648 = vmatprep.subr.mxu0 0.0
  %2649 = vmatpush2.msra.mxu0 0.0
  %2650 = vmatprep.subr.mxu0 0.0
  %2651 = vmatpush2.msra.mxu0 0.0
  %2652 = vmatprep.subr.mxu0 0.0
  %2653 = vmatpush2.msra.mxu0 0.0
  %2654 = vmatprep.subr.mxu0 0.0
  %2655 = vmatpush2.msra.mxu0 0.0
  %2656 = vmatprep.subr.mxu0 0.0
  %2657 = vmatpush2.msra.mxu0 0.0
  %2658 = vmatprep.mubr.f32.mxu0 0.0
  %2659 = vmatmul.mubr.f32.gmra.mxu0 %v2589
  %v2660 = vpop.f32.mrf.mxu0
  %v2661 = vadd.f32 0.0, %v2660
  %v2662 = vpop.f32.mrf.mxu0
  %2663 = vdwg.mxu0
  %v2664 = vadd.f32 %v2582, %v2661
  %v2665 = vld [vmem:[%s2334 + $0x8] sm:$0x3]
  %s2666 = scalar_lea.vmem %s3, 480
  %v2667 = vld [vmem:[%s2666] sm:$0xff]
  %v2668 = vld [vmem:[%s2666 + $0x8] sm:$0xff]
  %v2669 = vld [vmem:[%s2666 + $0x10] sm:$0xf]
  %v2671 = vsel %vm466, %v2665, 0
  %v2674 = vsel %vm483, %v2669, 0
  %2676 = vmatprep.subr.mxu0 0.0
  %2677 = vmatpush1.msra.mxu0 0.0
  %2678 = vmatprep.subr.mxu0 0.0
  %2679 = vmatpush1.msra.mxu0 0.0
  %2680 = vmatprep.subr.mxu0 0.0
  %2681 = vmatpush1.msra.mxu0 0.0
  %2682 = vmatprep.subr.mxu0 0.0
  %2683 = vmatpush1.msra.mxu0 0.0
  %2684 = vmatprep.subr.mxu0 0.0
  %2685 = vmatpush1.msra.mxu0 0.0
  %2686 = vmatprep.subr.mxu0 0.0
  %2687 = vmatpush1.msra.mxu0 0.0
  %2688 = vmatprep.subr.mxu0 0.0
  %2689 = vmatpush1.msra.mxu0 0.0
  %2690 = vmatprep.subr.mxu0 0.0
  %2691 = vmatpush1.msra.mxu0 0.0
  %2692 = vmatprep.subr.mxu0 0.0
  %2693 = vmatpush1.msra.mxu0 0.0
  %2694 = vmatprep.subr.mxu0 0.0
  %2695 = vmatpush1.msra.mxu0 0.0
  %2696 = vmatprep.subr.mxu0 0.0
  %2697 = vmatpush1.msra.mxu0 0.0
  %2698 = vmatprep.subr.mxu0 0.0
  %2699 = vmatpush1.msra.mxu0 0.0
  %2700 = vmatprep.subr.mxu0 0.0
  %2701 = vmatpush1.msra.mxu0 0.0
  %2702 = vmatprep.subr.mxu0 0.0
  %2703 = vmatpush1.msra.mxu0 %v2674
  %2704 = vmatprep.subr.mxu0 0.0
  %2705 = vmatpush1.msra.mxu0 %v2668
  %2706 = vmatprep.subr.mxu0 0.0
  %2707 = vmatpush1.msra.mxu0 %v2667
  %2708 = vmatprep.subr.mxu0 0.0
  %2709 = vmatpush2.msra.mxu0 0.0
  %2710 = vmatprep.subr.mxu0 0.0
  %2711 = vmatpush2.msra.mxu0 0.0
  %2712 = vmatprep.subr.mxu0 0.0
  %2713 = vmatpush2.msra.mxu0 0.0
  %2714 = vmatprep.subr.mxu0 0.0
  %2715 = vmatpush2.msra.mxu0 0.0
  %2716 = vmatprep.subr.mxu0 0.0
  %2717 = vmatpush2.msra.mxu0 0.0
  %2718 = vmatprep.subr.mxu0 0.0
  %2719 = vmatpush2.msra.mxu0 0.0
  %2720 = vmatprep.subr.mxu0 0.0
  %2721 = vmatpush2.msra.mxu0 0.0
  %2722 = vmatprep.subr.mxu0 0.0
  %2723 = vmatpush2.msra.mxu0 0.0
  %2724 = vmatprep.subr.mxu0 0.0
  %2725 = vmatpush2.msra.mxu0 0.0
  %2726 = vmatprep.subr.mxu0 0.0
  %2727 = vmatpush2.msra.mxu0 0.0
  %2728 = vmatprep.subr.mxu0 0.0
  %2729 = vmatpush2.msra.mxu0 0.0
  %2730 = vmatprep.subr.mxu0 0.0
  %2731 = vmatpush2.msra.mxu0 0.0
  %2732 = vmatprep.subr.mxu0 0.0
  %2733 = vmatpush2.msra.mxu0 0.0
  %2734 = vmatprep.subr.mxu0 0.0
  %2735 = vmatpush2.msra.mxu0 0.0
  %2736 = vmatprep.subr.mxu0 0.0
  %2737 = vmatpush2.msra.mxu0 0.0
  %2738 = vmatprep.subr.mxu0 0.0
  %2739 = vmatpush2.msra.mxu0 0.0
  %2740 = vmatprep.mubr.f32.mxu0 0.0
  %2741 = vmatmul.mubr.f32.gmra.mxu0 %v2671
  %v2742 = vpop.f32.mrf.mxu0
  %v2743 = vadd.f32 0.0, %v2742
  %v2744 = vpop.f32.mrf.mxu0
  %2745 = vdwg.mxu0
  %v2746 = vadd.f32 %v2664, %v2743
  %v2747 = vld [vmem:[%s2334 + $0xa] sm:$0x3]
  %s2748 = scalar_lea.vmem %s3, 504
  %v2749 = vld [vmem:[%s2748] sm:$0xff]
  %v2750 = vld [vmem:[%s2748 + $0x8] sm:$0xff]
  %v2751 = vld [vmem:[%s2748 + $0x10] sm:$0xf]
  %v2753 = vsel %vm466, %v2747, 0
  %v2756 = vsel %vm483, %v2751, 0
  %2758 = vmatprep.subr.mxu0 0.0
  %2759 = vmatpush1.msra.mxu0 0.0
  %2760 = vmatprep.subr.mxu0 0.0
  %2761 = vmatpush1.msra.mxu0 0.0
  %2762 = vmatprep.subr.mxu0 0.0
  %2763 = vmatpush1.msra.mxu0 0.0
  %2764 = vmatprep.subr.mxu0 0.0
  %2765 = vmatpush1.msra.mxu0 0.0
  %2766 = vmatprep.subr.mxu0 0.0
  %2767 = vmatpush1.msra.mxu0 0.0
  %2768 = vmatprep.subr.mxu0 0.0
  %2769 = vmatpush1.msra.mxu0 0.0
  %2770 = vmatprep.subr.mxu0 0.0
  %2771 = vmatpush1.msra.mxu0 0.0
  %2772 = vmatprep.subr.mxu0 0.0
  %2773 = vmatpush1.msra.mxu0 0.0
  %2774 = vmatprep.subr.mxu0 0.0
  %2775 = vmatpush1.msra.mxu0 0.0
  %2776 = vmatprep.subr.mxu0 0.0
  %2777 = vmatpush1.msra.mxu0 0.0
  %2778 = vmatprep.subr.mxu0 0.0
  %2779 = vmatpush1.msra.mxu0 0.0
  %2780 = vmatprep.subr.mxu0 0.0
  %2781 = vmatpush1.msra.mxu0 0.0
  %2782 = vmatprep.subr.mxu0 0.0
  %2783 = vmatpush1.msra.mxu0 0.0
  %2784 = vmatprep.subr.mxu0 0.0
  %2785 = vmatpush1.msra.mxu0 %v2756
  %2786 = vmatprep.subr.mxu0 0.0
  %2787 = vmatpush1.msra.mxu0 %v2750
  %2788 = vmatprep.subr.mxu0 0.0
  %2789 = vmatpush1.msra.mxu0 %v2749
  %2790 = vmatprep.subr.mxu0 0.0
  %2791 = vmatpush2.msra.mxu0 0.0
  %2792 = vmatprep.subr.mxu0 0.0
  %2793 = vmatpush2.msra.mxu0 0.0
  %2794 = vmatprep.subr.mxu0 0.0
  %2795 = vmatpush2.msra.mxu0 0.0
  %2796 = vmatprep.subr.mxu0 0.0
  %2797 = vmatpush2.msra.mxu0 0.0
  %2798 = vmatprep.subr.mxu0 0.0
  %2799 = vmatpush2.msra.mxu0 0.0
  %2800 = vmatprep.subr.mxu0 0.0
  %2801 = vmatpush2.msra.mxu0 0.0
  %2802 = vmatprep.subr.mxu0 0.0
  %2803 = vmatpush2.msra.mxu0 0.0
  %2804 = vmatprep.subr.mxu0 0.0
  %2805 = vmatpush2.msra.mxu0 0.0
  %2806 = vmatprep.subr.mxu0 0.0
  %2807 = vmatpush2.msra.mxu0 0.0
  %2808 = vmatprep.subr.mxu0 0.0
  %2809 = vmatpush2.msra.mxu0 0.0
  %2810 = vmatprep.subr.mxu0 0.0
  %2811 = vmatpush2.msra.mxu0 0.0
  %2812 = vmatprep.subr.mxu0 0.0
  %2813 = vmatpush2.msra.mxu0 0.0
  %2814 = vmatprep.subr.mxu0 0.0
  %2815 = vmatpush2.msra.mxu0 0.0
  %2816 = vmatprep.subr.mxu0 0.0
  %2817 = vmatpush2.msra.mxu0 0.0
  %2818 = vmatprep.subr.mxu0 0.0
  %2819 = vmatpush2.msra.mxu0 0.0
  %2820 = vmatprep.subr.mxu0 0.0
  %2821 = vmatpush2.msra.mxu0 0.0
  %2822 = vmatprep.mubr.f32.mxu0 0.0
  %2823 = vmatmul.mubr.f32.gmra.mxu0 %v2753
  %v2824 = vpop.f32.mrf.mxu0
  %v2825 = vadd.f32 0.0, %v2824
  %v2826 = vpop.f32.mrf.mxu0
  %2827 = vdwg.mxu0
  %v2828 = vadd.f32 %v2746, %v2825
  %v2829 = vld [vmem:[%s2334 + $0xc] sm:$0x3]
  %s2830 = scalar_lea.vmem %s3, 528
  %v2831 = vld [vmem:[%s2830] sm:$0xff]
  %v2832 = vld [vmem:[%s2830 + $0x8] sm:$0xff]
  %v2833 = vld [vmem:[%s2830 + $0x10] sm:$0xf]
  %v2835 = vsel %vm466, %v2829, 0
  %v2838 = vsel %vm483, %v2833, 0
  %2840 = vmatprep.subr.mxu0 0.0
  %2841 = vmatpush1.msra.mxu0 0.0
  %2842 = vmatprep.subr.mxu0 0.0
  %2843 = vmatpush1.msra.mxu0 0.0
  %2844 = vmatprep.subr.mxu0 0.0
  %2845 = vmatpush1.msra.mxu0 0.0
  %2846 = vmatprep.subr.mxu0 0.0
  %2847 = vmatpush1.msra.mxu0 0.0
  %2848 = vmatprep.subr.mxu0 0.0
  %2849 = vmatpush1.msra.mxu0 0.0
  %2850 = vmatprep.subr.mxu0 0.0
  %2851 = vmatpush1.msra.mxu0 0.0
  %2852 = vmatprep.subr.mxu0 0.0
  %2853 = vmatpush1.msra.mxu0 0.0
  %2854 = vmatprep.subr.mxu0 0.0
  %2855 = vmatpush1.msra.mxu0 0.0
  %2856 = vmatprep.subr.mxu0 0.0
  %2857 = vmatpush1.msra.mxu0 0.0
  %2858 = vmatprep.subr.mxu0 0.0
  %2859 = vmatpush1.msra.mxu0 0.0
  %2860 = vmatprep.subr.mxu0 0.0
  %2861 = vmatpush1.msra.mxu0 0.0
  %2862 = vmatprep.subr.mxu0 0.0
  %2863 = vmatpush1.msra.mxu0 0.0
  %2864 = vmatprep.subr.mxu0 0.0
  %2865 = vmatpush1.msra.mxu0 0.0
  %2866 = vmatprep.subr.mxu0 0.0
  %2867 = vmatpush1.msra.mxu0 %v2838
  %2868 = vmatprep.subr.mxu0 0.0
  %2869 = vmatpush1.msra.mxu0 %v2832
  %2870 = vmatprep.subr.mxu0 0.0
  %2871 = vmatpush1.msra.mxu0 %v2831
  %2872 = vmatprep.subr.mxu0 0.0
  %2873 = vmatpush2.msra.mxu0 0.0
  %2874 = vmatprep.subr.mxu0 0.0
  %2875 = vmatpush2.msra.mxu0 0.0
  %2876 = vmatprep.subr.mxu0 0.0
  %2877 = vmatpush2.msra.mxu0 0.0
  %2878 = vmatprep.subr.mxu0 0.0
  %2879 = vmatpush2.msra.mxu0 0.0
  %2880 = vmatprep.subr.mxu0 0.0
  %2881 = vmatpush2.msra.mxu0 0.0
  %2882 = vmatprep.subr.mxu0 0.0
  %2883 = vmatpush2.msra.mxu0 0.0
  %2884 = vmatprep.subr.mxu0 0.0
  %2885 = vmatpush2.msra.mxu0 0.0
  %2886 = vmatprep.subr.mxu0 0.0
  %2887 = vmatpush2.msra.mxu0 0.0
  %2888 = vmatprep.subr.mxu0 0.0
  %2889 = vmatpush2.msra.mxu0 0.0
  %2890 = vmatprep.subr.mxu0 0.0
  %2891 = vmatpush2.msra.mxu0 0.0
  %2892 = vmatprep.subr.mxu0 0.0
  %2893 = vmatpush2.msra.mxu0 0.0
  %2894 = vmatprep.subr.mxu0 0.0
  %2895 = vmatpush2.msra.mxu0 0.0
  %2896 = vmatprep.subr.mxu0 0.0
  %2897 = vmatpush2.msra.mxu0 0.0
  %2898 = vmatprep.subr.mxu0 0.0
  %2899 = vmatpush2.msra.mxu0 0.0
  %2900 = vmatprep.subr.mxu0 0.0
  %2901 = vmatpush2.msra.mxu0 0.0
  %2902 = vmatprep.subr.mxu0 0.0
  %2903 = vmatpush2.msra.mxu0 0.0
  %2904 = vmatprep.mubr.f32.mxu0 0.0
  %2905 = vmatmul.mubr.f32.gmra.mxu0 %v2835
  %v2906 = vpop.f32.mrf.mxu0
  %v2907 = vadd.f32 0.0, %v2906
  %v2908 = vpop.f32.mrf.mxu0
  %2909 = vdwg.mxu0
  %v2910 = vadd.f32 %v2828, %v2907
  %v2911 = vld [vmem:[%s2334 + $0xe] sm:$0x3]
  %s2912 = scalar_lea.vmem %s3, 552
  %v2913 = vld [vmem:[%s2912] sm:$0xff]
  %v2914 = vld [vmem:[%s2912 + $0x8] sm:$0xff]
  %v2915 = vld [vmem:[%s2912 + $0x10] sm:$0xf]
  %v2917 = vsel %vm466, %v2911, 0
  %v2920 = vsel %vm483, %v2915, 0
  %2922 = vmatprep.subr.mxu0 0.0
  %2923 = vmatpush1.msra.mxu0 0.0
  %2924 = vmatprep.subr.mxu0 0.0
  %2925 = vmatpush1.msra.mxu0 0.0
  %2926 = vmatprep.subr.mxu0 0.0
  %2927 = vmatpush1.msra.mxu0 0.0
  %2928 = vmatprep.subr.mxu0 0.0
  %2929 = vmatpush1.msra.mxu0 0.0
  %2930 = vmatprep.subr.mxu0 0.0
  %2931 = vmatpush1.msra.mxu0 0.0
  %2932 = vmatprep.subr.mxu0 0.0
  %2933 = vmatpush1.msra.mxu0 0.0
  %2934 = vmatprep.subr.mxu0 0.0
  %2935 = vmatpush1.msra.mxu0 0.0
  %2936 = vmatprep.subr.mxu0 0.0
  %2937 = vmatpush1.msra.mxu0 0.0
  %2938 = vmatprep.subr.mxu0 0.0
  %2939 = vmatpush1.msra.mxu0 0.0
  %2940 = vmatprep.subr.mxu0 0.0
  %2941 = vmatpush1.msra.mxu0 0.0
  %2942 = vmatprep.subr.mxu0 0.0
  %2943 = vmatpush1.msra.mxu0 0.0
  %2944 = vmatprep.subr.mxu0 0.0
  %2945 = vmatpush1.msra.mxu0 0.0
  %2946 = vmatprep.subr.mxu0 0.0
  %2947 = vmatpush1.msra.mxu0 0.0
  %2948 = vmatprep.subr.mxu0 0.0
  %2949 = vmatpush1.msra.mxu0 %v2920
  %2950 = vmatprep.subr.mxu0 0.0
  %2951 = vmatpush1.msra.mxu0 %v2914
  %2952 = vmatprep.subr.mxu0 0.0
  %2953 = vmatpush1.msra.mxu0 %v2913
  %2954 = vmatprep.subr.mxu0 0.0
  %2955 = vmatpush2.msra.mxu0 0.0
  %2956 = vmatprep.subr.mxu0 0.0
  %2957 = vmatpush2.msra.mxu0 0.0
  %2958 = vmatprep.subr.mxu0 0.0
  %2959 = vmatpush2.msra.mxu0 0.0
  %2960 = vmatprep.subr.mxu0 0.0
  %2961 = vmatpush2.msra.mxu0 0.0
  %2962 = vmatprep.subr.mxu0 0.0
  %2963 = vmatpush2.msra.mxu0 0.0
  %2964 = vmatprep.subr.mxu0 0.0
  %2965 = vmatpush2.msra.mxu0 0.0
  %2966 = vmatprep.subr.mxu0 0.0
  %2967 = vmatpush2.msra.mxu0 0.0
  %2968 = vmatprep.subr.mxu0 0.0
  %2969 = vmatpush2.msra.mxu0 0.0
  %2970 = vmatprep.subr.mxu0 0.0
  %2971 = vmatpush2.msra.mxu0 0.0
  %2972 = vmatprep.subr.mxu0 0.0
  %2973 = vmatpush2.msra.mxu0 0.0
  %2974 = vmatprep.subr.mxu0 0.0
  %2975 = vmatpush2.msra.mxu0 0.0
  %2976 = vmatprep.subr.mxu0 0.0
  %2977 = vmatpush2.msra.mxu0 0.0
  %2978 = vmatprep.subr.mxu0 0.0
  %2979 = vmatpush2.msra.mxu0 0.0
  %2980 = vmatprep.subr.mxu0 0.0
  %2981 = vmatpush2.msra.mxu0 0.0
  %2982 = vmatprep.subr.mxu0 0.0
  %2983 = vmatpush2.msra.mxu0 0.0
  %2984 = vmatprep.subr.mxu0 0.0
  %2985 = vmatpush2.msra.mxu0 0.0
  %2986 = vmatprep.mubr.f32.mxu0 0.0
  %2987 = vmatmul.mubr.f32.gmra.mxu0 %v2917
  %v2988 = vpop.f32.mrf.mxu0
  %v2989 = vadd.f32 0.0, %v2988
  %v2990 = vpop.f32.mrf.mxu0
  %2991 = vdwg.mxu0
  %v2992 = vadd.f32 %v2910, %v2989
  %v2993 = vld [vmem:[%s2334 + $0x10] sm:$0x3]
  %s2994 = scalar_lea.vmem %s3, 576
  %v2995 = vld [vmem:[%s2994] sm:$0xff]
  %v2996 = vld [vmem:[%s2994 + $0x8] sm:$0xff]
  %v2997 = vld [vmem:[%s2994 + $0x10] sm:$0xf]
  %v2999 = vsel %vm466, %v2993, 0
  %v3002 = vsel %vm483, %v2997, 0
  %3004 = vmatprep.subr.mxu0 0.0
  %3005 = vmatpush1.msra.mxu0 0.0
  %3006 = vmatprep.subr.mxu0 0.0
  %3007 = vmatpush1.msra.mxu0 0.0
  %3008 = vmatprep.subr.mxu0 0.0
  %3009 = vmatpush1.msra.mxu0 0.0
  %3010 = vmatprep.subr.mxu0 0.0
  %3011 = vmatpush1.msra.mxu0 0.0
  %3012 = vmatprep.subr.mxu0 0.0
  %3013 = vmatpush1.msra.mxu0 0.0
  %3014 = vmatprep.subr.mxu0 0.0
  %3015 = vmatpush1.msra.mxu0 0.0
  %3016 = vmatprep.subr.mxu0 0.0
  %3017 = vmatpush1.msra.mxu0 0.0
  %3018 = vmatprep.subr.mxu0 0.0
  %3019 = vmatpush1.msra.mxu0 0.0
  %3020 = vmatprep.subr.mxu0 0.0
  %3021 = vmatpush1.msra.mxu0 0.0
  %3022 = vmatprep.subr.mxu0 0.0
  %3023 = vmatpush1.msra.mxu0 0.0
  %3024 = vmatprep.subr.mxu0 0.0
  %3025 = vmatpush1.msra.mxu0 0.0
  %3026 = vmatprep.subr.mxu0 0.0
  %3027 = vmatpush1.msra.mxu0 0.0
  %3028 = vmatprep.subr.mxu0 0.0
  %3029 = vmatpush1.msra.mxu0 0.0
  %3030 = vmatprep.subr.mxu0 0.0
  %3031 = vmatpush1.msra.mxu0 %v3002
  %3032 = vmatprep.subr.mxu0 0.0
  %3033 = vmatpush1.msra.mxu0 %v2996
  %3034 = vmatprep.subr.mxu0 0.0
  %3035 = vmatpush1.msra.mxu0 %v2995
  %3036 = vmatprep.subr.mxu0 0.0
  %3037 = vmatpush2.msra.mxu0 0.0
  %3038 = vmatprep.subr.mxu0 0.0
  %3039 = vmatpush2.msra.mxu0 0.0
  %3040 = vmatprep.subr.mxu0 0.0
  %3041 = vmatpush2.msra.mxu0 0.0
  %3042 = vmatprep.subr.mxu0 0.0
  %3043 = vmatpush2.msra.mxu0 0.0
  %3044 = vmatprep.subr.mxu0 0.0
  %3045 = vmatpush2.msra.mxu0 0.0
  %3046 = vmatprep.subr.mxu0 0.0
  %3047 = vmatpush2.msra.mxu0 0.0
  %3048 = vmatprep.subr.mxu0 0.0
  %3049 = vmatpush2.msra.mxu0 0.0
  %3050 = vmatprep.subr.mxu0 0.0
  %3051 = vmatpush2.msra.mxu0 0.0
  %3052 = vmatprep.subr.mxu0 0.0
  %3053 = vmatpush2.msra.mxu0 0.0
  %3054 = vmatprep.subr.mxu0 0.0
  %3055 = vmatpush2.msra.mxu0 0.0
  %3056 = vmatprep.subr.mxu0 0.0
  %3057 = vmatpush2.msra.mxu0 0.0
  %3058 = vmatprep.subr.mxu0 0.0
  %3059 = vmatpush2.msra.mxu0 0.0
  %3060 = vmatprep.subr.mxu0 0.0
  %3061 = vmatpush2.msra.mxu0 0.0
  %3062 = vmatprep.subr.mxu0 0.0
  %3063 = vmatpush2.msra.mxu0 0.0
  %3064 = vmatprep.subr.mxu0 0.0
  %3065 = vmatpush2.msra.mxu0 0.0
  %3066 = vmatprep.subr.mxu0 0.0
  %3067 = vmatpush2.msra.mxu0 0.0
  %3068 = vmatprep.mubr.f32.mxu0 0.0
  %3069 = vmatmul.mubr.f32.gmra.mxu0 %v2999
  %v3070 = vpop.f32.mrf.mxu0
  %v3071 = vadd.f32 0.0, %v3070
  %v3072 = vpop.f32.mrf.mxu0
  %3073 = vdwg.mxu0
  %v3074 = vadd.f32 %v2992, %v3071
  %v3075 = vld [vmem:[%s2334 + $0x12] sm:$0x3]
  %s3076 = scalar_lea.vmem %s3, 600
  %v3077 = vld [vmem:[%s3076] sm:$0xff]
  %v3078 = vld [vmem:[%s3076 + $0x8] sm:$0xff]
  %v3079 = vld [vmem:[%s3076 + $0x10] sm:$0xf]
  %v3081 = vsel %vm466, %v3075, 0
  %v3084 = vsel %vm483, %v3079, 0
  %3086 = vmatprep.subr.mxu0 0.0
  %3087 = vmatpush1.msra.mxu0 0.0
  %3088 = vmatprep.subr.mxu0 0.0
  %3089 = vmatpush1.msra.mxu0 0.0
  %3090 = vmatprep.subr.mxu0 0.0
  %3091 = vmatpush1.msra.mxu0 0.0
  %3092 = vmatprep.subr.mxu0 0.0
  %3093 = vmatpush1.msra.mxu0 0.0
  %3094 = vmatprep.subr.mxu0 0.0
  %3095 = vmatpush1.msra.mxu0 0.0
  %3096 = vmatprep.subr.mxu0 0.0
  %3097 = vmatpush1.msra.mxu0 0.0
  %3098 = vmatprep.subr.mxu0 0.0
  %3099 = vmatpush1.msra.mxu0 0.0
  %3100 = vmatprep.subr.mxu0 0.0
  %3101 = vmatpush1.msra.mxu0 0.0
  %3102 = vmatprep.subr.mxu0 0.0
  %3103 = vmatpush1.msra.mxu0 0.0
  %3104 = vmatprep.subr.mxu0 0.0
  %3105 = vmatpush1.msra.mxu0 0.0
  %3106 = vmatprep.subr.mxu0 0.0
  %3107 = vmatpush1.msra.mxu0 0.0
  %3108 = vmatprep.subr.mxu0 0.0
  %3109 = vmatpush1.msra.mxu0 0.0
  %3110 = vmatprep.subr.mxu0 0.0
  %3111 = vmatpush1.msra.mxu0 0.0
  %3112 = vmatprep.subr.mxu0 0.0
  %3113 = vmatpush1.msra.mxu0 %v3084
  %3114 = vmatprep.subr.mxu0 0.0
  %3115 = vmatpush1.msra.mxu0 %v3078
  %3116 = vmatprep.subr.mxu0 0.0
  %3117 = vmatpush1.msra.mxu0 %v3077
  %3118 = vmatprep.subr.mxu0 0.0
  %3119 = vmatpush2.msra.mxu0 0.0
  %3120 = vmatprep.subr.mxu0 0.0
  %3121 = vmatpush2.msra.mxu0 0.0
  %3122 = vmatprep.subr.mxu0 0.0
  %3123 = vmatpush2.msra.mxu0 0.0
  %3124 = vmatprep.subr.mxu0 0.0
  %3125 = vmatpush2.msra.mxu0 0.0
  %3126 = vmatprep.subr.mxu0 0.0
  %3127 = vmatpush2.msra.mxu0 0.0
  %3128 = vmatprep.subr.mxu0 0.0
  %3129 = vmatpush2.msra.mxu0 0.0
  %3130 = vmatprep.subr.mxu0 0.0
  %3131 = vmatpush2.msra.mxu0 0.0
  %3132 = vmatprep.subr.mxu0 0.0
  %3133 = vmatpush2.msra.mxu0 0.0
  %3134 = vmatprep.subr.mxu0 0.0
  %3135 = vmatpush2.msra.mxu0 0.0
  %3136 = vmatprep.subr.mxu0 0.0
  %3137 = vmatpush2.msra.mxu0 0.0
  %3138 = vmatprep.subr.mxu0 0.0
  %3139 = vmatpush2.msra.mxu0 0.0
  %3140 = vmatprep.subr.mxu0 0.0
  %3141 = vmatpush2.msra.mxu0 0.0
  %3142 = vmatprep.subr.mxu0 0.0
  %3143 = vmatpush2.msra.mxu0 0.0
  %3144 = vmatprep.subr.mxu0 0.0
  %3145 = vmatpush2.msra.mxu0 0.0
  %3146 = vmatprep.subr.mxu0 0.0
  %3147 = vmatpush2.msra.mxu0 0.0
  %3148 = vmatprep.subr.mxu0 0.0
  %3149 = vmatpush2.msra.mxu0 0.0
  %3150 = vmatprep.mubr.f32.mxu0 0.0
  %3151 = vmatmul.mubr.f32.gmra.mxu0 %v3081
  %v3152 = vpop.f32.mrf.mxu0
  %v3153 = vadd.f32 0.0, %v3152
  %v3154 = vpop.f32.mrf.mxu0
  %3155 = vdwg.mxu0
  %v3156 = vadd.f32 %v3074, %v3153
  %v3157 = vld [vmem:[%s2334 + $0x14] sm:$0x3]
  %s3158 = scalar_lea.vmem %s3, 624
  %v3159 = vld [vmem:[%s3158] sm:$0xff]
  %v3160 = vld [vmem:[%s3158 + $0x8] sm:$0xff]
  %v3161 = vld [vmem:[%s3158 + $0x10] sm:$0xf]
  %v3163 = vsel %vm466, %v3157, 0
  %v3166 = vsel %vm483, %v3161, 0
  %3168 = vmatprep.subr.mxu0 0.0
  %3169 = vmatpush1.msra.mxu0 0.0
  %3170 = vmatprep.subr.mxu0 0.0
  %3171 = vmatpush1.msra.mxu0 0.0
  %3172 = vmatprep.subr.mxu0 0.0
  %3173 = vmatpush1.msra.mxu0 0.0
  %3174 = vmatprep.subr.mxu0 0.0
  %3175 = vmatpush1.msra.mxu0 0.0
  %3176 = vmatprep.subr.mxu0 0.0
  %3177 = vmatpush1.msra.mxu0 0.0
  %3178 = vmatprep.subr.mxu0 0.0
  %3179 = vmatpush1.msra.mxu0 0.0
  %3180 = vmatprep.subr.mxu0 0.0
  %3181 = vmatpush1.msra.mxu0 0.0
  %3182 = vmatprep.subr.mxu0 0.0
  %3183 = vmatpush1.msra.mxu0 0.0
  %3184 = vmatprep.subr.mxu0 0.0
  %3185 = vmatpush1.msra.mxu0 0.0
  %3186 = vmatprep.subr.mxu0 0.0
  %3187 = vmatpush1.msra.mxu0 0.0
  %3188 = vmatprep.subr.mxu0 0.0
  %3189 = vmatpush1.msra.mxu0 0.0
  %3190 = vmatprep.subr.mxu0 0.0
  %3191 = vmatpush1.msra.mxu0 0.0
  %3192 = vmatprep.subr.mxu0 0.0
  %3193 = vmatpush1.msra.mxu0 0.0
  %3194 = vmatprep.subr.mxu0 0.0
  %3195 = vmatpush1.msra.mxu0 %v3166
  %3196 = vmatprep.subr.mxu0 0.0
  %3197 = vmatpush1.msra.mxu0 %v3160
  %3198 = vmatprep.subr.mxu0 0.0
  %3199 = vmatpush1.msra.mxu0 %v3159
  %3200 = vmatprep.subr.mxu0 0.0
  %3201 = vmatpush2.msra.mxu0 0.0
  %3202 = vmatprep.subr.mxu0 0.0
  %3203 = vmatpush2.msra.mxu0 0.0
  %3204 = vmatprep.subr.mxu0 0.0
  %3205 = vmatpush2.msra.mxu0 0.0
  %3206 = vmatprep.subr.mxu0 0.0
  %3207 = vmatpush2.msra.mxu0 0.0
  %3208 = vmatprep.subr.mxu0 0.0
  %3209 = vmatpush2.msra.mxu0 0.0
  %3210 = vmatprep.subr.mxu0 0.0
  %3211 = vmatpush2.msra.mxu0 0.0
  %3212 = vmatprep.subr.mxu0 0.0
  %3213 = vmatpush2.msra.mxu0 0.0
  %3214 = vmatprep.subr.mxu0 0.0
  %3215 = vmatpush2.msra.mxu0 0.0
  %3216 = vmatprep.subr.mxu0 0.0
  %3217 = vmatpush2.msra.mxu0 0.0
  %3218 = vmatprep.subr.mxu0 0.0
  %3219 = vmatpush2.msra.mxu0 0.0
  %3220 = vmatprep.subr.mxu0 0.0
  %3221 = vmatpush2.msra.mxu0 0.0
  %3222 = vmatprep.subr.mxu0 0.0
  %3223 = vmatpush2.msra.mxu0 0.0
  %3224 = vmatprep.subr.mxu0 0.0
  %3225 = vmatpush2.msra.mxu0 0.0
  %3226 = vmatprep.subr.mxu0 0.0
  %3227 = vmatpush2.msra.mxu0 0.0
  %3228 = vmatprep.subr.mxu0 0.0
  %3229 = vmatpush2.msra.mxu0 0.0
  %3230 = vmatprep.subr.mxu0 0.0
  %3231 = vmatpush2.msra.mxu0 0.0
  %3232 = vmatprep.mubr.f32.mxu0 0.0
  %3233 = vmatmul.mubr.f32.gmra.mxu0 %v3163
  %v3234 = vpop.f32.mrf.mxu0
  %v3235 = vadd.f32 0.0, %v3234
  %v3236 = vpop.f32.mrf.mxu0
  %3237 = vdwg.mxu0
  %v3238 = vadd.f32 %v3156, %v3235
  %v3239 = vld [vmem:[%s2334 + $0x16] sm:$0x3]
  %s3240 = scalar_lea.vmem %s3, 648
  %v3241 = vld [vmem:[%s3240] sm:$0xff]
  %v3242 = vld [vmem:[%s3240 + $0x8] sm:$0xff]
  %v3243 = vld [vmem:[%s3240 + $0x10] sm:$0xf]
  %v3245 = vsel %vm466, %v3239, 0
  %v3248 = vsel %vm483, %v3243, 0
  %3250 = vmatprep.subr.mxu0 0.0
  %3251 = vmatpush1.msra.mxu0 0.0
  %3252 = vmatprep.subr.mxu0 0.0
  %3253 = vmatpush1.msra.mxu0 0.0
  %3254 = vmatprep.subr.mxu0 0.0
  %3255 = vmatpush1.msra.mxu0 0.0
  %3256 = vmatprep.subr.mxu0 0.0
  %3257 = vmatpush1.msra.mxu0 0.0
  %3258 = vmatprep.subr.mxu0 0.0
  %3259 = vmatpush1.msra.mxu0 0.0
  %3260 = vmatprep.subr.mxu0 0.0
  %3261 = vmatpush1.msra.mxu0 0.0
  %3262 = vmatprep.subr.mxu0 0.0
  %3263 = vmatpush1.msra.mxu0 0.0
  %3264 = vmatprep.subr.mxu0 0.0
  %3265 = vmatpush1.msra.mxu0 0.0
  %3266 = vmatprep.subr.mxu0 0.0
  %3267 = vmatpush1.msra.mxu0 0.0
  %3268 = vmatprep.subr.mxu0 0.0
  %3269 = vmatpush1.msra.mxu0 0.0
  %3270 = vmatprep.subr.mxu0 0.0
  %3271 = vmatpush1.msra.mxu0 0.0
  %3272 = vmatprep.subr.mxu0 0.0
  %3273 = vmatpush1.msra.mxu0 0.0
  %3274 = vmatprep.subr.mxu0 0.0
  %3275 = vmatpush1.msra.mxu0 0.0
  %3276 = vmatprep.subr.mxu0 0.0
  %3277 = vmatpush1.msra.mxu0 %v3248
  %3278 = vmatprep.subr.mxu0 0.0
  %3279 = vmatpush1.msra.mxu0 %v3242
  %3280 = vmatprep.subr.mxu0 0.0
  %3281 = vmatpush1.msra.mxu0 %v3241
  %3282 = vmatprep.subr.mxu0 0.0
  %3283 = vmatpush2.msra.mxu0 0.0
  %3284 = vmatprep.subr.mxu0 0.0
  %3285 = vmatpush2.msra.mxu0 0.0
  %3286 = vmatprep.subr.mxu0 0.0
  %3287 = vmatpush2.msra.mxu0 0.0
  %3288 = vmatprep.subr.mxu0 0.0
  %3289 = vmatpush2.msra.mxu0 0.0
  %3290 = vmatprep.subr.mxu0 0.0
  %3291 = vmatpush2.msra.mxu0 0.0
  %3292 = vmatprep.subr.mxu0 0.0
  %3293 = vmatpush2.msra.mxu0 0.0
  %3294 = vmatprep.subr.mxu0 0.0
  %3295 = vmatpush2.msra.mxu0 0.0
  %3296 = vmatprep.subr.mxu0 0.0
  %3297 = vmatpush2.msra.mxu0 0.0
  %3298 = vmatprep.subr.mxu0 0.0
  %3299 = vmatpush2.msra.mxu0 0.0
  %3300 = vmatprep.subr.mxu0 0.0
  %3301 = vmatpush2.msra.mxu0 0.0
  %3302 = vmatprep.subr.mxu0 0.0
  %3303 = vmatpush2.msra.mxu0 0.0
  %3304 = vmatprep.subr.mxu0 0.0
  %3305 = vmatpush2.msra.mxu0 0.0
  %3306 = vmatprep.subr.mxu0 0.0
  %3307 = vmatpush2.msra.mxu0 0.0
  %3308 = vmatprep.subr.mxu0 0.0
  %3309 = vmatpush2.msra.mxu0 0.0
  %3310 = vmatprep.subr.mxu0 0.0
  %3311 = vmatpush2.msra.mxu0 0.0
  %3312 = vmatprep.subr.mxu0 0.0
  %3313 = vmatpush2.msra.mxu0 0.0
  %3314 = vmatprep.mubr.f32.mxu0 0.0
  %3315 = vmatmul.mubr.f32.gmra.mxu0 %v3245
  %v3316 = vpop.f32.mrf.mxu0
  %v3317 = vadd.f32 0.0, %v3316
  %v3318 = vpop.f32.mrf.mxu0
  %3319 = vdwg.mxu0
  %v3320 = vadd.f32 %v3238, %v3317
  %v3321 = vld [vmem:[%s2334 + $0x18] sm:$0x3]
  %s3322 = scalar_lea.vmem %s3, 672
  %v3323 = vld [vmem:[%s3322] sm:$0xff]
  %v3324 = vld [vmem:[%s3322 + $0x8] sm:$0xff]
  %v3325 = vld [vmem:[%s3322 + $0x10] sm:$0xf]
  %v3327 = vsel %vm466, %v3321, 0
  %v3330 = vsel %vm483, %v3325, 0
  %3332 = vmatprep.subr.mxu0 0.0
  %3333 = vmatpush1.msra.mxu0 0.0
  %3334 = vmatprep.subr.mxu0 0.0
  %3335 = vmatpush1.msra.mxu0 0.0
  %3336 = vmatprep.subr.mxu0 0.0
  %3337 = vmatpush1.msra.mxu0 0.0
  %3338 = vmatprep.subr.mxu0 0.0
  %3339 = vmatpush1.msra.mxu0 0.0
  %3340 = vmatprep.subr.mxu0 0.0
  %3341 = vmatpush1.msra.mxu0 0.0
  %3342 = vmatprep.subr.mxu0 0.0
  %3343 = vmatpush1.msra.mxu0 0.0
  %3344 = vmatprep.subr.mxu0 0.0
  %3345 = vmatpush1.msra.mxu0 0.0
  %3346 = vmatprep.subr.mxu0 0.0
  %3347 = vmatpush1.msra.mxu0 0.0
  %3348 = vmatprep.subr.mxu0 0.0
  %3349 = vmatpush1.msra.mxu0 0.0
  %3350 = vmatprep.subr.mxu0 0.0
  %3351 = vmatpush1.msra.mxu0 0.0
  %3352 = vmatprep.subr.mxu0 0.0
  %3353 = vmatpush1.msra.mxu0 0.0
  %3354 = vmatprep.subr.mxu0 0.0
  %3355 = vmatpush1.msra.mxu0 0.0
  %3356 = vmatprep.subr.mxu0 0.0
  %3357 = vmatpush1.msra.mxu0 0.0
  %3358 = vmatprep.subr.mxu0 0.0
  %3359 = vmatpush1.msra.mxu0 %v3330
  %3360 = vmatprep.subr.mxu0 0.0
  %3361 = vmatpush1.msra.mxu0 %v3324
  %3362 = vmatprep.subr.mxu0 0.0
  %3363 = vmatpush1.msra.mxu0 %v3323
  %3364 = vmatprep.subr.mxu0 0.0
  %3365 = vmatpush2.msra.mxu0 0.0
  %3366 = vmatprep.subr.mxu0 0.0
  %3367 = vmatpush2.msra.mxu0 0.0
  %3368 = vmatprep.subr.mxu0 0.0
  %3369 = vmatpush2.msra.mxu0 0.0
  %3370 = vmatprep.subr.mxu0 0.0
  %3371 = vmatpush2.msra.mxu0 0.0
  %3372 = vmatprep.subr.mxu0 0.0
  %3373 = vmatpush2.msra.mxu0 0.0
  %3374 = vmatprep.subr.mxu0 0.0
  %3375 = vmatpush2.msra.mxu0 0.0
  %3376 = vmatprep.subr.mxu0 0.0
  %3377 = vmatpush2.msra.mxu0 0.0
  %3378 = vmatprep.subr.mxu0 0.0
  %3379 = vmatpush2.msra.mxu0 0.0
  %3380 = vmatprep.subr.mxu0 0.0
  %3381 = vmatpush2.msra.mxu0 0.0
  %3382 = vmatprep.subr.mxu0 0.0
  %3383 = vmatpush2.msra.mxu0 0.0
  %3384 = vmatprep.subr.mxu0 0.0
  %3385 = vmatpush2.msra.mxu0 0.0
  %3386 = vmatprep.subr.mxu0 0.0
  %3387 = vmatpush2.msra.mxu0 0.0
  %3388 = vmatprep.subr.mxu0 0.0
  %3389 = vmatpush2.msra.mxu0 0.0
  %3390 = vmatprep.subr.mxu0 0.0
  %3391 = vmatpush2.msra.mxu0 0.0
  %3392 = vmatprep.subr.mxu0 0.0
  %3393 = vmatpush2.msra.mxu0 0.0
  %3394 = vmatprep.subr.mxu0 0.0
  %3395 = vmatpush2.msra.mxu0 0.0
  %3396 = vmatprep.mubr.f32.mxu0 0.0
  %3397 = vmatmul.mubr.f32.gmra.mxu0 %v3327
  %v3398 = vpop.f32.mrf.mxu0
  %v3399 = vadd.f32 0.0, %v3398
  %v3400 = vpop.f32.mrf.mxu0
  %3401 = vdwg.mxu0
  %v3402 = vadd.f32 %v3320, %v3399
  %v3403 = vld [vmem:[%s2334 + $0x1a] sm:$0x3]
  %s3404 = scalar_lea.vmem %s3, 696
  %v3405 = vld [vmem:[%s3404] sm:$0xff]
  %v3406 = vld [vmem:[%s3404 + $0x8] sm:$0xff]
  %v3407 = vld [vmem:[%s3404 + $0x10] sm:$0xf]
  %v3409 = vsel %vm466, %v3403, 0
  %v3412 = vsel %vm483, %v3407, 0
  %3414 = vmatprep.subr.mxu0 0.0
  %3415 = vmatpush1.msra.mxu0 0.0
  %3416 = vmatprep.subr.mxu0 0.0
  %3417 = vmatpush1.msra.mxu0 0.0
  %3418 = vmatprep.subr.mxu0 0.0
  %3419 = vmatpush1.msra.mxu0 0.0
  %3420 = vmatprep.subr.mxu0 0.0
  %3421 = vmatpush1.msra.mxu0 0.0
  %3422 = vmatprep.subr.mxu0 0.0
  %3423 = vmatpush1.msra.mxu0 0.0
  %3424 = vmatprep.subr.mxu0 0.0
  %3425 = vmatpush1.msra.mxu0 0.0
  %3426 = vmatprep.subr.mxu0 0.0
  %3427 = vmatpush1.msra.mxu0 0.0
  %3428 = vmatprep.subr.mxu0 0.0
  %3429 = vmatpush1.msra.mxu0 0.0
  %3430 = vmatprep.subr.mxu0 0.0
  %3431 = vmatpush1.msra.mxu0 0.0
  %3432 = vmatprep.subr.mxu0 0.0
  %3433 = vmatpush1.msra.mxu0 0.0
  %3434 = vmatprep.subr.mxu0 0.0
  %3435 = vmatpush1.msra.mxu0 0.0
  %3436 = vmatprep.subr.mxu0 0.0
  %3437 = vmatpush1.msra.mxu0 0.0
  %3438 = vmatprep.subr.mxu0 0.0
  %3439 = vmatpush1.msra.mxu0 0.0
  %3440 = vmatprep.subr.mxu0 0.0
  %3441 = vmatpush1.msra.mxu0 %v3412
  %3442 = vmatprep.subr.mxu0 0.0
  %3443 = vmatpush1.msra.mxu0 %v3406
  %3444 = vmatprep.subr.mxu0 0.0
  %3445 = vmatpush1.msra.mxu0 %v3405
  %3446 = vmatprep.subr.mxu0 0.0
  %3447 = vmatpush2.msra.mxu0 0.0
  %3448 = vmatprep.subr.mxu0 0.0
  %3449 = vmatpush2.msra.mxu0 0.0
  %3450 = vmatprep.subr.mxu0 0.0
  %3451 = vmatpush2.msra.mxu0 0.0
  %3452 = vmatprep.subr.mxu0 0.0
  %3453 = vmatpush2.msra.mxu0 0.0
  %3454 = vmatprep.subr.mxu0 0.0
  %3455 = vmatpush2.msra.mxu0 0.0
  %3456 = vmatprep.subr.mxu0 0.0
  %3457 = vmatpush2.msra.mxu0 0.0
  %3458 = vmatprep.subr.mxu0 0.0
  %3459 = vmatpush2.msra.mxu0 0.0
  %3460 = vmatprep.subr.mxu0 0.0
  %3461 = vmatpush2.msra.mxu0 0.0
  %3462 = vmatprep.subr.mxu0 0.0
  %3463 = vmatpush2.msra.mxu0 0.0
  %3464 = vmatprep.subr.mxu0 0.0
  %3465 = vmatpush2.msra.mxu0 0.0
  %3466 = vmatprep.subr.mxu0 0.0
  %3467 = vmatpush2.msra.mxu0 0.0
  %3468 = vmatprep.subr.mxu0 0.0
  %3469 = vmatpush2.msra.mxu0 0.0
  %3470 = vmatprep.subr.mxu0 0.0
  %3471 = vmatpush2.msra.mxu0 0.0
  %3472 = vmatprep.subr.mxu0 0.0
  %3473 = vmatpush2.msra.mxu0 0.0
  %3474 = vmatprep.subr.mxu0 0.0
  %3475 = vmatpush2.msra.mxu0 0.0
  %3476 = vmatprep.subr.mxu0 0.0
  %3477 = vmatpush2.msra.mxu0 0.0
  %3478 = vmatprep.mubr.f32.mxu0 0.0
  %3479 = vmatmul.mubr.f32.gmra.mxu0 %v3409
  %v3480 = vpop.f32.mrf.mxu0
  %v3481 = vadd.f32 0.0, %v3480
  %v3482 = vpop.f32.mrf.mxu0
  %3483 = vdwg.mxu0
  %v3484 = vadd.f32 %v3402, %v3481
  %v3485 = vld [vmem:[%s2334 + $0x1c] sm:$0x3]
  %s3486 = scalar_lea.vmem %s3, 720
  %v3487 = vld [vmem:[%s3486] sm:$0xff]
  %v3488 = vld [vmem:[%s3486 + $0x8] sm:$0xff]
  %v3489 = vld [vmem:[%s3486 + $0x10] sm:$0xf]
  %v3491 = vsel %vm466, %v3485, 0
  %v3494 = vsel %vm483, %v3489, 0
  %3496 = vmatprep.subr.mxu0 0.0
  %3497 = vmatpush1.msra.mxu0 0.0
  %3498 = vmatprep.subr.mxu0 0.0
  %3499 = vmatpush1.msra.mxu0 0.0
  %3500 = vmatprep.subr.mxu0 0.0
  %3501 = vmatpush1.msra.mxu0 0.0
  %3502 = vmatprep.subr.mxu0 0.0
  %3503 = vmatpush1.msra.mxu0 0.0
  %3504 = vmatprep.subr.mxu0 0.0
  %3505 = vmatpush1.msra.mxu0 0.0
  %3506 = vmatprep.subr.mxu0 0.0
  %3507 = vmatpush1.msra.mxu0 0.0
  %3508 = vmatprep.subr.mxu0 0.0
  %3509 = vmatpush1.msra.mxu0 0.0
  %3510 = vmatprep.subr.mxu0 0.0
  %3511 = vmatpush1.msra.mxu0 0.0
  %3512 = vmatprep.subr.mxu0 0.0
  %3513 = vmatpush1.msra.mxu0 0.0
  %3514 = vmatprep.subr.mxu0 0.0
  %3515 = vmatpush1.msra.mxu0 0.0
  %3516 = vmatprep.subr.mxu0 0.0
  %3517 = vmatpush1.msra.mxu0 0.0
  %3518 = vmatprep.subr.mxu0 0.0
  %3519 = vmatpush1.msra.mxu0 0.0
  %3520 = vmatprep.subr.mxu0 0.0
  %3521 = vmatpush1.msra.mxu0 0.0
  %3522 = vmatprep.subr.mxu0 0.0
  %3523 = vmatpush1.msra.mxu0 %v3494
  %3524 = vmatprep.subr.mxu0 0.0
  %3525 = vmatpush1.msra.mxu0 %v3488
  %3526 = vmatprep.subr.mxu0 0.0
  %3527 = vmatpush1.msra.mxu0 %v3487
  %3528 = vmatprep.subr.mxu0 0.0
  %3529 = vmatpush2.msra.mxu0 0.0
  %3530 = vmatprep.subr.mxu0 0.0
  %3531 = vmatpush2.msra.mxu0 0.0
  %3532 = vmatprep.subr.mxu0 0.0
  %3533 = vmatpush2.msra.mxu0 0.0
  %3534 = vmatprep.subr.mxu0 0.0
  %3535 = vmatpush2.msra.mxu0 0.0
  %3536 = vmatprep.subr.mxu0 0.0
  %3537 = vmatpush2.msra.mxu0 0.0
  %3538 = vmatprep.subr.mxu0 0.0
  %3539 = vmatpush2.msra.mxu0 0.0
  %3540 = vmatprep.subr.mxu0 0.0
  %3541 = vmatpush2.msra.mxu0 0.0
  %3542 = vmatprep.subr.mxu0 0.0
  %3543 = vmatpush2.msra.mxu0 0.0
  %3544 = vmatprep.subr.mxu0 0.0
  %3545 = vmatpush2.msra.mxu0 0.0
  %3546 = vmatprep.subr.mxu0 0.0
  %3547 = vmatpush2.msra.mxu0 0.0
  %3548 = vmatprep.subr.mxu0 0.0
  %3549 = vmatpush2.msra.mxu0 0.0
  %3550 = vmatprep.subr.mxu0 0.0
  %3551 = vmatpush2.msra.mxu0 0.0
  %3552 = vmatprep.subr.mxu0 0.0
  %3553 = vmatpush2.msra.mxu0 0.0
  %3554 = vmatprep.subr.mxu0 0.0
  %3555 = vmatpush2.msra.mxu0 0.0
  %3556 = vmatprep.subr.mxu0 0.0
  %3557 = vmatpush2.msra.mxu0 0.0
  %3558 = vmatprep.subr.mxu0 0.0
  %3559 = vmatpush2.msra.mxu0 0.0
  %3560 = vmatprep.mubr.f32.mxu0 0.0
  %3561 = vmatmul.mubr.f32.gmra.mxu0 %v3491
  %v3562 = vpop.f32.mrf.mxu0
  %v3563 = vadd.f32 0.0, %v3562
  %v3564 = vpop.f32.mrf.mxu0
  %3565 = vdwg.mxu0
  %v3566 = vadd.f32 %v3484, %v3563
  %v3567 = vld [vmem:[%s2334 + $0x1e] sm:$0x3]
  %s3568 = scalar_lea.vmem %s3, 744
  %v3569 = vld [vmem:[%s3568] sm:$0xff]
  %v3570 = vld [vmem:[%s3568 + $0x8] sm:$0xff]
  %v3571 = vld [vmem:[%s3568 + $0x10] sm:$0xf]
  %v3573 = vsel %vm466, %v3567, 0
  %v3576 = vsel %vm483, %v3571, 0
  %3578 = vmatprep.subr.mxu0 0.0
  %3579 = vmatpush1.msra.mxu0 0.0
  %3580 = vmatprep.subr.mxu0 0.0
  %3581 = vmatpush1.msra.mxu0 0.0
  %3582 = vmatprep.subr.mxu0 0.0
  %3583 = vmatpush1.msra.mxu0 0.0
  %3584 = vmatprep.subr.mxu0 0.0
  %3585 = vmatpush1.msra.mxu0 0.0
  %3586 = vmatprep.subr.mxu0 0.0
  %3587 = vmatpush1.msra.mxu0 0.0
  %3588 = vmatprep.subr.mxu0 0.0
  %3589 = vmatpush1.msra.mxu0 0.0
  %3590 = vmatprep.subr.mxu0 0.0
  %3591 = vmatpush1.msra.mxu0 0.0
  %3592 = vmatprep.subr.mxu0 0.0
  %3593 = vmatpush1.msra.mxu0 0.0
  %3594 = vmatprep.subr.mxu0 0.0
  %3595 = vmatpush1.msra.mxu0 0.0
  %3596 = vmatprep.subr.mxu0 0.0
  %3597 = vmatpush1.msra.mxu0 0.0
  %3598 = vmatprep.subr.mxu0 0.0
  %3599 = vmatpush1.msra.mxu0 0.0
  %3600 = vmatprep.subr.mxu0 0.0
  %3601 = vmatpush1.msra.mxu0 0.0
  %3602 = vmatprep.subr.mxu0 0.0
  %3603 = vmatpush1.msra.mxu0 0.0
  %3604 = vmatprep.subr.mxu0 0.0
  %3605 = vmatpush1.msra.mxu0 %v3576
  %3606 = vmatprep.subr.mxu0 0.0
  %3607 = vmatpush1.msra.mxu0 %v3570
  %3608 = vmatprep.subr.mxu0 0.0
  %3609 = vmatpush1.msra.mxu0 %v3569
  %3610 = vmatprep.subr.mxu0 0.0
  %3611 = vmatpush2.msra.mxu0 0.0
  %3612 = vmatprep.subr.mxu0 0.0
  %3613 = vmatpush2.msra.mxu0 0.0
  %3614 = vmatprep.subr.mxu0 0.0
  %3615 = vmatpush2.msra.mxu0 0.0
  %3616 = vmatprep.subr.mxu0 0.0
  %3617 = vmatpush2.msra.mxu0 0.0
  %3618 = vmatprep.subr.mxu0 0.0
  %3619 = vmatpush2.msra.mxu0 0.0
  %3620 = vmatprep.subr.mxu0 0.0
  %3621 = vmatpush2.msra.mxu0 0.0
  %3622 = vmatprep.subr.mxu0 0.0
  %3623 = vmatpush2.msra.mxu0 0.0
  %3624 = vmatprep.subr.mxu0 0.0
  %3625 = vmatpush2.msra.mxu0 0.0
  %3626 = vmatprep.subr.mxu0 0.0
  %3627 = vmatpush2.msra.mxu0 0.0
  %3628 = vmatprep.subr.mxu0 0.0
  %3629 = vmatpush2.msra.mxu0 0.0
  %3630 = vmatprep.subr.mxu0 0.0
  %3631 = vmatpush2.msra.mxu0 0.0
  %3632 = vmatprep.subr.mxu0 0.0
  %3633 = vmatpush2.msra.mxu0 0.0
  %3634 = vmatprep.subr.mxu0 0.0
  %3635 = vmatpush2.msra.mxu0 0.0
  %3636 = vmatprep.subr.mxu0 0.0
  %3637 = vmatpush2.msra.mxu0 0.0
  %3638 = vmatprep.subr.mxu0 0.0
  %3639 = vmatpush2.msra.mxu0 0.0
  %3640 = vmatprep.subr.mxu0 0.0
  %3641 = vmatpush2.msra.mxu0 0.0
  %3642 = vmatprep.mubr.f32.mxu0 0.0
  %3643 = vmatmul.mubr.f32.gmra.mxu0 %v3573
  %v3644 = vpop.f32.mrf.mxu0
  %v3645 = vadd.f32 0.0, %v3644
  %v3646 = vpop.f32.mrf.mxu0
  %3647 = vdwg.mxu0
  %v3648 = vadd.f32 %v3566, %v3645
  %s3649 = scalar_lea.vmem %s4, 1
  %v3650 = vld [vmem:[%s3649] sm:$0x1]
  %v3652 = vlaneseq
  %v3653 = vshrl.u32 %v3652, 7
  %v3654 = vsub.s32 0, %v3653
  %v3655 = vrot.slane %v3650, %v3654
  %v3657 = vadd.f32 %v3648, %v3655
  %v3658 = vmax.f32 %v3657, 0.0
  %s3659 = scalar_lea.vmem %s5, 128
  %v3660 = vld [vmem:[%s3659] sm:$0xff]
  %v3661 = vld [vmem:[%s3659 + $0x8] sm:$0xff]
  %v3662 = vld [vmem:[%s3659 + $0x10] sm:$0xff]
  %v3663 = vld [vmem:[%s3659 + $0x18] sm:$0xff]
  %v3664 = vld [vmem:[%s3659 + $0x20] sm:$0xff]
  %v3665 = vld [vmem:[%s3659 + $0x28] sm:$0xff]
  %v3666 = vld [vmem:[%s3659 + $0x30] sm:$0xff]
  %v3667 = vld [vmem:[%s3659 + $0x38] sm:$0xff]
  %v3668 = vld [vmem:[%s3659 + $0x40] sm:$0xff]
  %v3669 = vld [vmem:[%s3659 + $0x48] sm:$0xff]
  %v3670 = vld [vmem:[%s3659 + $0x50] sm:$0xff]
  %v3671 = vld [vmem:[%s3659 + $0x58] sm:$0xff]
  %v3672 = vld [vmem:[%s3659 + $0x60] sm:$0xff]
  %v3673 = vld [vmem:[%s3659 + $0x68] sm:$0xff]
  %v3674 = vld [vmem:[%s3659 + $0x70] sm:$0xff]
  %v3675 = vld [vmem:[%s3659 + $0x78] sm:$0xff]
  %s3676 = scalar_lea.vmem %s6, 1
  %v3677 = vld [vmem:[%s3676] sm:$0x1]
  %v3679 = vlaneseq
  %v3680 = vshrl.u32 %v3679, 7
  %v3681 = vsub.s32 0, %v3680
  %v3682 = vrot.slane %v3677, %v3681
  %3684 = vmatprep.subr.mxu0 0.0
  %3685 = vmatpush1.msra.mxu0 %v3675
  %3686 = vmatprep.subr.mxu0 0.0
  %3687 = vmatpush1.msra.mxu0 %v3674
  %3688 = vmatprep.subr.mxu0 0.0
  %3689 = vmatpush1.msra.mxu0 %v3673
  %3690 = vmatprep.subr.mxu0 0.0
  %3691 = vmatpush1.msra.mxu0 %v3672
  %3692 = vmatprep.subr.mxu0 0.0
  %3693 = vmatpush1.msra.mxu0 %v3671
  %3694 = vmatprep.subr.mxu0 0.0
  %3695 = vmatpush1.msra.mxu0 %v3670
  %3696 = vmatprep.subr.mxu0 0.0
  %3697 = vmatpush1.msra.mxu0 %v3669
  %3698 = vmatprep.subr.mxu0 0.0
  %3699 = vmatpush1.msra.mxu0 %v3668
  %3700 = vmatprep.subr.mxu0 0.0
  %3701 = vmatpush1.msra.mxu0 %v3667
  %3702 = vmatprep.subr.mxu0 0.0
  %3703 = vmatpush1.msra.mxu0 %v3666
  %3704 = vmatprep.subr.mxu0 0.0
  %3705 = vmatpush1.msra.mxu0 %v3665
  %3706 = vmatprep.subr.mxu0 0.0
  %3707 = vmatpush1.msra.mxu0 %v3664
  %3708 = vmatprep.subr.mxu0 0.0
  %3709 = vmatpush1.msra.mxu0 %v3663
  %3710 = vmatprep.subr.mxu0 0.0
  %3711 = vmatpush1.msra.mxu0 %v3662
  %3712 = vmatprep.subr.mxu0 0.0
  %3713 = vmatpush1.msra.mxu0 %v3661
  %3714 = vmatprep.subr.mxu0 0.0
  %3715 = vmatpush1.msra.mxu0 %v3660
  %3716 = vmatprep.subr.mxu0 0.0
  %3717 = vmatpush2.msra.mxu0 0.0
  %3718 = vmatprep.subr.mxu0 0.0
  %3719 = vmatpush2.msra.mxu0 0.0
  %3720 = vmatprep.subr.mxu0 0.0
  %3721 = vmatpush2.msra.mxu0 0.0
  %3722 = vmatprep.subr.mxu0 0.0
  %3723 = vmatpush2.msra.mxu0 0.0
  %3724 = vmatprep.subr.mxu0 0.0
  %3725 = vmatpush2.msra.mxu0 0.0
  %3726 = vmatprep.subr.mxu0 0.0
  %3727 = vmatpush2.msra.mxu0 0.0
  %3728 = vmatprep.subr.mxu0 0.0
  %3729 = vmatpush2.msra.mxu0 0.0
  %3730 = vmatprep.subr.mxu0 0.0
  %3731 = vmatpush2.msra.mxu0 0.0
  %3732 = vmatprep.subr.mxu0 0.0
  %3733 = vmatpush2.msra.mxu0 0.0
  %3734 = vmatprep.subr.mxu0 0.0
  %3735 = vmatpush2.msra.mxu0 0.0
  %3736 = vmatprep.subr.mxu0 0.0
  %3737 = vmatpush2.msra.mxu0 0.0
  %3738 = vmatprep.subr.mxu0 0.0
  %3739 = vmatpush2.msra.mxu0 0.0
  %3740 = vmatprep.subr.mxu0 0.0
  %3741 = vmatpush2.msra.mxu0 0.0
  %3742 = vmatprep.subr.mxu0 0.0
  %3743 = vmatpush2.msra.mxu0 0.0
  %3744 = vmatprep.subr.mxu0 0.0
  %3745 = vmatpush2.msra.mxu0 0.0
  %3746 = vmatprep.subr.mxu0 0.0
  %3747 = vmatpush2.msra.mxu0 0.0
  %3748 = vmatprep.mubr.f32.mxu0 0.0
  %3749 = vmatmul.mubr.f32.gmra.mxu0 %v3658
  %v3750 = vpop.f32.mrf.mxu0
  %v3751 = vadd.f32 %v3682, %v3750
  %v3752 = vpop.f32.mrf.mxu0
  %3753 = vdwg.mxu0
  %v3754 = vsel %vm1883, %v3751, -inf
  %3755 = vmax.xlane.f32.xlu0 %v3754
  %v3756 = vpop.xlane.xlu0 %3755
  %v3757 = vsub.f32 %v3751, %v3756
  %v3758 = vmul.f32 %v3757, 1.442695
  %v3759 = vpow.pop %v3758
  %v3760 = vsel %vm1883, %v3759, 0.0
  %3761 = vadd.xlane.f32.xlu0 %v3760
  %v3762 = vpop.xlane.xlu0 %3761
  %v3763 = vlog2.pop %v3762
  %v3764 = vmul.f32 %v3763, 0.6931472
  %v3765 = vsub.f32 %v3757, %v3764
  %s3766 = scalar_lea.vmem %s9, 2
  %3767 = vst [vmem:[%s3766] sm:$0x3] %v3765
  %v3768 = vadd.f32 %v1789, %v3658
  %v3769 = vmul.f32 %v3768, 0.5
  %v3770 = vld [vmem:[%s7] sm:$0xff]
  %v3771 = vld [vmem:[%s7 + $0x8] sm:$0xff]
  %v3772 = vld [vmem:[%s7 + $0x10] sm:$0xff]
  %v3773 = vld [vmem:[%s7 + $0x18] sm:$0xff]
  %v3774 = vld [vmem:[%s7 + $0x20] sm:$0xff]
  %v3775 = vld [vmem:[%s7 + $0x28] sm:$0xff]
  %v3776 = vld [vmem:[%s7 + $0x30] sm:$0xff]
  %v3777 = vld [vmem:[%s7 + $0x38] sm:$0xff]
  %v3778 = vld [vmem:[%s7 + $0x40] sm:$0xff]
  %v3779 = vld [vmem:[%s7 + $0x48] sm:$0xff]
  %v3780 = vld [vmem:[%s7 + $0x50] sm:$0xff]
  %v3781 = vld [vmem:[%s7 + $0x58] sm:$0xff]
  %v3782 = vld [vmem:[%s7 + $0x60] sm:$0xff]
  %v3783 = vld [vmem:[%s7 + $0x68] sm:$0xff]
  %v3784 = vld [vmem:[%s7 + $0x70] sm:$0xff]
  %v3785 = vld [vmem:[%s7 + $0x78] sm:$0xff]
  %v3786 = vld [vmem:[%s8] sm:$0x1]
  %v3788 = vlaneseq
  %v3789 = vshrl.u32 %v3788, 7
  %v3790 = vsub.s32 0, %v3789
  %v3791 = vrot.slane %v3786, %v3790
  %3793 = vmatprep.subr.mxu0 0.0
  %3794 = vmatpush1.msra.mxu0 %v3785
  %3795 = vmatprep.subr.mxu0 0.0
  %3796 = vmatpush1.msra.mxu0 %v3784
  %3797 = vmatprep.subr.mxu0 0.0
  %3798 = vmatpush1.msra.mxu0 %v3783
  %3799 = vmatprep.subr.mxu0 0.0
  %3800 = vmatpush1.msra.mxu0 %v3782
  %3801 = vmatprep.subr.mxu0 0.0
  %3802 = vmatpush1.msra.mxu0 %v3781
  %3803 = vmatprep.subr.mxu0 0.0
  %3804 = vmatpush1.msra.mxu0 %v3780
  %3805 = vmatprep.subr.mxu0 0.0
  %3806 = vmatpush1.msra.mxu0 %v3779
  %3807 = vmatprep.subr.mxu0 0.0
  %3808 = vmatpush1.msra.mxu0 %v3778
  %3809 = vmatprep.subr.mxu0 0.0
  %3810 = vmatpush1.msra.mxu0 %v3777
  %3811 = vmatprep.subr.mxu0 0.0
  %3812 = vmatpush1.msra.mxu0 %v3776
  %3813 = vmatprep.subr.mxu0 0.0
  %3814 = vmatpush1.msra.mxu0 %v3775
  %3815 = vmatprep.subr.mxu0 0.0
  %3816 = vmatpush1.msra.mxu0 %v3774
  %3817 = vmatprep.subr.mxu0 0.0
  %3818 = vmatpush1.msra.mxu0 %v3773
  %3819 = vmatprep.subr.mxu0 0.0
  %3820 = vmatpush1.msra.mxu0 %v3772
  %3821 = vmatprep.subr.mxu0 0.0
  %3822 = vmatpush1.msra.mxu0 %v3771
  %3823 = vmatprep.subr.mxu0 0.0
  %3824 = vmatpush1.msra.mxu0 %v3770
  %3825 = vmatprep.subr.mxu0 0.0
  %3826 = vmatpush2.msra.mxu0 0.0
  %3827 = vmatprep.subr.mxu0 0.0
  %3828 = vmatpush2.msra.mxu0 0.0
  %3829 = vmatprep.subr.mxu0 0.0
  %3830 = vmatpush2.msra.mxu0 0.0
  %3831 = vmatprep.subr.mxu0 0.0
  %3832 = vmatpush2.msra.mxu0 0.0
  %3833 = vmatprep.subr.mxu0 0.0
  %3834 = vmatpush2.msra.mxu0 0.0
  %3835 = vmatprep.subr.mxu0 0.0
  %3836 = vmatpush2.msra.mxu0 0.0
  %3837 = vmatprep.subr.mxu0 0.0
  %3838 = vmatpush2.msra.mxu0 0.0
  %3839 = vmatprep.subr.mxu0 0.0
  %3840 = vmatpush2.msra.mxu0 0.0
  %3841 = vmatprep.subr.mxu0 0.0
  %3842 = vmatpush2.msra.mxu0 0.0
  %3843 = vmatprep.subr.mxu0 0.0
  %3844 = vmatpush2.msra.mxu0 0.0
  %3845 = vmatprep.subr.mxu0 0.0
  %3846 = vmatpush2.msra.mxu0 0.0
  %3847 = vmatprep.subr.mxu0 0.0
  %3848 = vmatpush2.msra.mxu0 0.0
  %3849 = vmatprep.subr.mxu0 0.0
  %3850 = vmatpush2.msra.mxu0 0.0
  %3851 = vmatprep.subr.mxu0 0.0
  %3852 = vmatpush2.msra.mxu0 0.0
  %3853 = vmatprep.subr.mxu0 0.0
  %3854 = vmatpush2.msra.mxu0 0.0
  %3855 = vmatprep.subr.mxu0 0.0
  %3856 = vmatpush2.msra.mxu0 0.0
  %3857 = vmatprep.mubr.f32.mxu0 0.0
  %3858 = vmatmul.mubr.f32.gmra.mxu0 %v3769
  %v3859 = vpop.f32.mrf.mxu0
  %v3860 = vadd.f32 %v3791, %v3859
  %v3861 = vpop.f32.mrf.mxu0
  %3862 = vdwg.mxu0
  %v3863 = vsel %vm1883, %v3860, -inf
  %3864 = vmax.xlane.f32.xlu0 %v3863
  %v3865 = vpop.xlane.xlu0 %3864
  %v3866 = vsub.f32 %v3860, %v3865
  %v3867 = vmul.f32 %v3866, 1.442695
  %v3868 = vpow.pop %v3867
  %v3869 = vsel %vm1883, %v3868, 0.0
  %3870 = vadd.xlane.f32.xlu0 %v3869
  %v3871 = vpop.xlane.xlu0 %3870
  %v3872 = vlog2.pop %v3871
  %v3873 = vmul.f32 %v3872, 0.6931472
  %v3874 = vsub.f32 %v3866, %v3873
  %s3875 = scalar_lea.vmem %s9, 4
  %3876 = vst [vmem:[%s3875] sm:$0x3] %v3874
  // Predicated region
  $region38: #{mmnet_forward.3} parent=0 // pred_check
    _
  $region39: #{mmnet_forward.3} parent=0 // pred_check_branch
    %3878 = sbr.rel (0) target = $region41
  $region40: #{mmnet_forward.3} parent=0 // pred_region
    _
  $region41: #{mmnet_forward.3} parent=0 // pred_fallthru
    _
  // Predicated region
  $region42: #{mmnet_forward.3} parent=0 // pred_check
    _
  $region43: #{mmnet_forward.3} parent=0 // pred_check_branch
    %3880 = sbr.rel (0) target = $region45
  $region44: #{mmnet_forward.3} parent=0 // pred_region
    _
  $region45: #{mmnet_forward.3} parent=0 // pred_fallthru
    _

</llo_original>
